<compile_context>
chip_gen: v6e
topology: v6e:2x2x1
jax: 0.10.0
libtpu: 0.0.40
codegen_flags: <defaults>
</compile_context>

<pallas_src>
import jax
import jax.numpy as jnp
from jax import lax
from jax.experimental import pallas as pl
from jax.experimental.pallas import tpu as pltpu

EPS = 1e-5   # nn.InstanceNorm2d default (affine=False, biased variance)
KH = KW = 3  # kernel_size=3, padding=1, stride=1


def _residual_block_kernel(x_ref, w1_ref, w2_ref, o_ref, pad_ref):
    """One batch sample per grid step.

    x_ref  : (1, H, W, CP)      f32   channel-padded NHWC input (lane-dense)
    w1_ref : (KH*KW*CP, CP)     bf16  im2col-layout conv1 weight (zero-padded)
    w2_ref : (KH*KW*CP, CP)     bf16  im2col-layout conv2 weight (zero-padded)
    o_ref  : (1, H, W, CP)      f32   output block
    pad_ref: (H+2, W+2, CP)     f32   zero-halo scratch shared by both convs
    """
    _, H, W, CP = x_ref.shape
    HW = H * W

    # Zero the halo scratch once; later grid steps only ever rewrite the interior,
    # so the zero halo persists across samples.
    @pl.when(pl.program_id(0) == 0)
    def _():
        pad_ref[...] = jnp.zeros_like(pad_ref)

    x = x_ref[0]                                   # (H, W, CP) f32
    pad_ref[1:H + 1, 1:W + 1, :] = x               # write interior, halo stays 0

    def conv3x3_instnorm(w_ref, relu):
        # im2col: assemble (HW, 9*CP) patches and do ONE K=9*CP MXU matmul
        # (bf16 operands, f32 accumulation). All lane offsets are multiples of 128.
        cols = []
        for kh in range(KH):
            for kw in range(KW):
                tap = pad_ref[kh:kh + H, kw:kw + W, :]            # (H, W, CP)
                cols.append(tap.reshape(HW, CP).astype(jnp.bfloat16))
        patches = jnp.concatenate(cols, axis=-1)                  # (HW, 9*CP) bf16
        acc = jnp.dot(patches, w_ref[...],
                      preferred_element_type=jnp.float32)         # (HW, CP) f32

        # InstanceNorm2d (affine=False, biased variance) — single-pass statistics.
        # Conv bias is intentionally absent: it is cancelled exactly by the mean
        # subtraction of an affine=False InstanceNorm.
        mean = jnp.mean(acc, axis=0, keepdims=True)
        mean_sq = jnp.mean(acc * acc, axis=0, keepdims=True)
        var = mean_sq - mean * mean
        y = (acc - mean) * lax.rsqrt(var + EPS)
        if relu:
            y = jnp.maximum(y, 0.0)
        return y                                                  # (HW, CP) f32

    h = conv3x3_instnorm(w1_ref, relu=True)
    pad_ref[1:H + 1, 1:W + 1, :] = h.reshape(H, W, CP)            # reuse halo scratch
    h = conv3x3_instnorm(w2_ref, relu=False)

    o_ref[0] = x + h.reshape(H, W, CP)                            # residual add


def residual_block_forward(x_nchw, w1_oihw, w2_oihw):
    """ResidualBlock forward. x: (N, C, H, W) f32; weights: (C, C, 3, 3) (PyTorch OIHW).

    Conv biases are omitted on purpose: an affine=False InstanceNorm directly after
    each conv cancels a per-channel bias exactly, so results are identical.
    """
    N, C, H, W = x_nchw.shape
    assert w1_oihw.shape == (C, C, KH, KW) and w2_oihw.shape == (C, C, KH, KW)

    # Pad channels up to a multiple of 128 so every in-kernel load/store is
    # lane-dense and the im2col concat is tile-aligned. Zero-padded weight
    # rows/cols keep the extra channels exactly zero; they are sliced off below.
    CP = ((C + 127) // 128) * 128

    x = jnp.transpose(x_nchw, (0, 2, 3, 1)).astype(jnp.float32)           # NHWC
    x = jnp.pad(x, ((0, 0), (0, 0), (0, 0), (0, CP - C)))

    def prep_w(w):
        w = jnp.transpose(w, (2, 3, 1, 0))                                # HWIO
        w = jnp.pad(w, ((0, 0), (0, 0), (0, CP - C), (0, CP - C)))
        return w.reshape(KH * KW * CP, CP).astype(jnp.bfloat16)           # im2col layout

    w1 = prep_w(w1_oihw)
    w2 = prep_w(w2_oihw)

    out = pl.pallas_call(
        _residual_block_kernel,
        out_shape=jax.ShapeDtypeStruct((N, H, W, CP), jnp.float32),
        grid=(N,),
        in_specs=[
            pl.BlockSpec((1, H, W, CP), lambda n: (n, 0, 0, 0)),
            pl.BlockSpec((KH * KW * CP, CP), lambda n: (0, 0)),
            pl.BlockSpec((KH * KW * CP, CP), lambda n: (0, 0)),
        ],
        out_specs=pl.BlockSpec((1, H, W, CP), lambda n: (n, 0, 0, 0)),
        scratch_shapes=[pltpu.VMEM((H + 2, W + 2, CP), jnp.float32)],
        compiler_params=pltpu.CompilerParams(
            dimension_semantics=("parallel",)),   # batch across TCs on v7x
    )(x, w1, w2)

    out = out[..., :C]                                                    # drop channel pad
    return jnp.transpose(out, (0, 3, 1, 2))                               # back to NCHW


def _residual_block_reference(x_nchw, w1_oihw, w2_oihw):
    """Pure-JAX f32 reference (lax conv + InstanceNorm), NCHW in/out."""
    x = jnp.transpose(x_nchw, (0, 2, 3, 1)).astype(jnp.float32)

    def conv_in(h, w, relu):
        y = lax.conv_general_dilated(
            h, jnp.transpose(w, (2, 3, 1, 0)), window_strides=(1, 1),
            padding=((1, 1), (1, 1)),
            dimension_numbers=("NHWC", "HWIO", "NHWC"))
        mean = jnp.mean(y, axis=(1, 2), keepdims=True)
        var = jnp.mean((y - mean) ** 2, axis=(1, 2), keepdims=True)
        y = (y - mean) * lax.rsqrt(var + EPS)
        return jnp.maximum(y, 0.0) if relu else y

    h = conv_in(x, w1_oihw, True)
    h = conv_in(h, w2_oihw, False)
    return jnp.transpose(x + h, (0, 3, 1, 2))


if __name__ == "__main__":
    key = jax.random.PRNGKey(0)
    kx, k1, k2 = jax.random.split(key, 3)

    # ResidualBlock(in_features=64), small shapes: batch=2, 16x16 spatial.
    N, C, H, W = 2, 64, 16, 16
    x = jax.random.normal(kx, (N, C, H, W), jnp.float32)
    # PyTorch-layout (OIHW) conv weights; biases omitted (cancelled by InstanceNorm).
    w1 = jax.random.normal(k1, (C, C, KH, KW), jnp.float32) * 0.05
    w2 = jax.random.normal(k2, (C, C, KH, KW), jnp.float32) * 0.05

    fwd = jax.jit(residual_block_forward)
    y = fwd(x, w1, w2)
    jax.block_until_ready(y)

    y_ref = _residual_block_reference(x, w1, w2)
    max_err = float(jnp.max(jnp.abs(y - y_ref)))

    assert y.shape == (N, C, H, W), y.shape
    assert bool(jnp.all(jnp.isfinite(y)))
    assert max_err < 0.15, f"max abs err vs reference: {max_err}"  # bf16-matmul tolerance
    print("KERNEL_OK")
</pallas_src>

<mosaic_0001>
module attributes {stable_mosaic.version = 11 : i64} {
  func.func @_residual_block_kernel(%arg0: i32, %arg1: memref<1x16x16x128xf32, #tpu.memory_space<vmem>>, %arg2: memref<1152x128xbf16, #tpu.memory_space<vmem>>, %arg3: memref<1152x128xbf16, #tpu.memory_space<vmem>>, %arg4: memref<1x16x16x128xf32, #tpu.memory_space<vmem>>, %arg5: memref<18x18x128xf32, #tpu.memory_space<vmem>>) attributes {dimension_semantics = [#tpu.dimension_semantics<parallel>], iteration_bounds = array<i64: 2>, scalar_prefetch = 0 : i64, scratch_operands = 1 : i64, tpu.core_type = #tpu.core_type<tc>, window_params = [{transform_indices = @transform_0, window_bounds = array<i64: 1, 16, 16, 128>}, {pipeline_mode = #tpu.pipeline_mode<synchronous>, transform_indices = @transform_1, window_bounds = array<i64: 1152, 128>}, {pipeline_mode = #tpu.pipeline_mode<synchronous>, transform_indices = @transform_2, window_bounds = array<i64: 1152, 128>}, {transform_indices = @transform_3, window_bounds = array<i64: 1, 16, 16, 128>}]} {
    %c0_i32 = arith.constant 0 : i32
    %0 = arith.cmpi eq, %arg0, %c0_i32 : i32
    %1 = arith.extui %0 : i1 to i32
    %c0_i32_0 = arith.constant 0 : i32
    %2 = arith.cmpi ne, %1, %c0_i32_0 : i32
    scf.if %2 {
      %cst_82 = arith.constant 0.000000e+00 : f32
      %111 = vector.broadcast %cst_82 : f32 to vector<18x18x128xf32>
      %c0_83 = arith.constant 0 : index
      %c0_84 = arith.constant 0 : index
      %c0_85 = arith.constant 0 : index
      %112 = vector.load %arg5[%c0_83, %c0_84, %c0_85] : memref<18x18x128xf32, #tpu.memory_space<vmem>>, vector<18x18x128xf32>
      tpu.vector_store %arg5[%c0_83, %c0_84, %c0_85], %111 {strides = array<i32>} : memref<18x18x128xf32, #tpu.memory_space<vmem>>, vector<18x18x128xf32>,
    } else {
    }
    %c0 = arith.constant 0 : index
    %c0_1 = arith.constant 0 : index
    %c0_2 = arith.constant 0 : index
    %c0_3 = arith.constant 0 : index
    %3 = vector.load %arg1[%c0, %c0_1, %c0_2, %c0_3] : memref<1x16x16x128xf32, #tpu.memory_space<vmem>>, vector<1x16x16x128xf32>
    %4 = vector.shape_cast %3 : vector<1x16x16x128xf32> to vector<16x16x128xf32>
    %c1 = arith.constant 1 : index
    %c1_4 = arith.constant 1 : index
    %c0_5 = arith.constant 0 : index
    %5 = vector.load %arg5[%c1, %c1_4, %c0_5] : memref<18x18x128xf32, #tpu.memory_space<vmem>>, vector<16x16x128xf32>
    tpu.vector_store %arg5[%c1, %c1_4, %c0_5], %4 {strides = array<i32>} : memref<18x18x128xf32, #tpu.memory_space<vmem>>, vector<16x16x128xf32>,
    %c0_6 = arith.constant 0 : index
    %c0_7 = arith.constant 0 : index
    %c0_8 = arith.constant 0 : index
    %6 = vector.load %arg5[%c0_6, %c0_7, %c0_8] : memref<18x18x128xf32, #tpu.memory_space<vmem>>, vector<16x16x128xf32>
    %7 = vector.shape_cast %6 : vector<16x16x128xf32> to vector<256x128xf32>
    %8 = arith.truncf %7 : vector<256x128xf32> to vector<256x128xbf16>
    %c0_9 = arith.constant 0 : index
    %c1_10 = arith.constant 1 : index
    %c0_11 = arith.constant 0 : index
    %9 = vector.load %arg5[%c0_9, %c1_10, %c0_11] : memref<18x18x128xf32, #tpu.memory_space<vmem>>, vector<16x16x128xf32>
    %10 = vector.shape_cast %9 : vector<16x16x128xf32> to vector<256x128xf32>
    %11 = arith.truncf %10 : vector<256x128xf32> to vector<256x128xbf16>
    %c0_12 = arith.constant 0 : index
    %c2 = arith.constant 2 : index
    %c0_13 = arith.constant 0 : index
    %12 = vector.load %arg5[%c0_12, %c2, %c0_13] : memref<18x18x128xf32, #tpu.memory_space<vmem>>, vector<16x16x128xf32>
    %13 = vector.shape_cast %12 : vector<16x16x128xf32> to vector<256x128xf32>
    %14 = arith.truncf %13 : vector<256x128xf32> to vector<256x128xbf16>
    %c1_14 = arith.constant 1 : index
    %c0_15 = arith.constant 0 : index
    %c0_16 = arith.constant 0 : index
    %15 = vector.load %arg5[%c1_14, %c0_15, %c0_16] : memref<18x18x128xf32, #tpu.memory_space<vmem>>, vector<16x16x128xf32>
    %16 = vector.shape_cast %15 : vector<16x16x128xf32> to vector<256x128xf32>
    %17 = arith.truncf %16 : vector<256x128xf32> to vector<256x128xbf16>
    %c1_17 = arith.constant 1 : index
    %c1_18 = arith.constant 1 : index
    %c0_19 = arith.constant 0 : index
    %18 = vector.load %arg5[%c1_17, %c1_18, %c0_19] : memref<18x18x128xf32, #tpu.memory_space<vmem>>, vector<16x16x128xf32>
    %19 = vector.shape_cast %18 : vector<16x16x128xf32> to vector<256x128xf32>
    %20 = arith.truncf %19 : vector<256x128xf32> to vector<256x128xbf16>
    %c1_20 = arith.constant 1 : index
    %c2_21 = arith.constant 2 : index
    %c0_22 = arith.constant 0 : index
    %21 = vector.load %arg5[%c1_20, %c2_21, %c0_22] : memref<18x18x128xf32, #tpu.memory_space<vmem>>, vector<16x16x128xf32>
    %22 = vector.shape_cast %21 : vector<16x16x128xf32> to vector<256x128xf32>
    %23 = arith.truncf %22 : vector<256x128xf32> to vector<256x128xbf16>
    %c2_23 = arith.constant 2 : index
    %c0_24 = arith.constant 0 : index
    %c0_25 = arith.constant 0 : index
    %24 = vector.load %arg5[%c2_23, %c0_24, %c0_25] : memref<18x18x128xf32, #tpu.memory_space<vmem>>, vector<16x16x128xf32>
    %25 = vector.shape_cast %24 : vector<16x16x128xf32> to vector<256x128xf32>
    %26 = arith.truncf %25 : vector<256x128xf32> to vector<256x128xbf16>
    %c2_26 = arith.constant 2 : index
    %c1_27 = arith.constant 1 : index
    %c0_28 = arith.constant 0 : index
    %27 = vector.load %arg5[%c2_26, %c1_27, %c0_28] : memref<18x18x128xf32, #tpu.memory_space<vmem>>, vector<16x16x128xf32>
    %28 = vector.shape_cast %27 : vector<16x16x128xf32> to vector<256x128xf32>
    %29 = arith.truncf %28 : vector<256x128xf32> to vector<256x128xbf16>
    %c2_29 = arith.constant 2 : index
    %c2_30 = arith.constant 2 : index
    %c0_31 = arith.constant 0 : index
    %30 = vector.load %arg5[%c2_29, %c2_30, %c0_31] : memref<18x18x128xf32, #tpu.memory_space<vmem>>, vector<16x16x128xf32>
    %31 = vector.shape_cast %30 : vector<16x16x128xf32> to vector<256x128xf32>
    %32 = arith.truncf %31 : vector<256x128xf32> to vector<256x128xbf16>
    %33 = tpu.concatenate %8, %11, %14, %17, %20, %23, %26, %29, %32 in 1 : vector<256x128xbf16>, vector<256x128xbf16>, vector<256x128xbf16>, vector<256x128xbf16>, vector<256x128xbf16>, vector<256x128xbf16>, vector<256x128xbf16>, vector<256x128xbf16>, vector<256x128xbf16> -> vector<256x1152xbf16>
    %c0_32 = arith.constant 0 : index
    %c0_33 = arith.constant 0 : index
    %34 = vector.load %arg2[%c0_32, %c0_33] : memref<1152x128xbf16, #tpu.memory_space<vmem>>, vector<1152x128xbf16>
    %cst = arith.constant dense<0.000000e+00> : vector<256x128xf32>
    %35 = tpu.matmul %33, %34, %cst {dimension_numbers = #tpu.dot_dimension_numbers<[1], [0], [0], [1], [0, 0, 1, 1], [], []>} : vector<256x1152xbf16>, vector<1152x128xbf16>, vector<256x128xf32> -> vector<256x128xf32>
    %cst_34 = arith.constant dense<0.000000e+00> : vector<128xf32>
    %36 = vector.multi_reduction <add>, %35, %cst_34 [0] : vector<256x128xf32> to vector<128xf32>
    %37 = vector.shape_cast %36 : vector<128xf32> to vector<1x128xf32>
    %cst_35 = arith.constant 2.560000e+02 : f32
    %38 = vector.broadcast %cst_35 : f32 to vector<1x128xf32>
    %39 = arith.divf %37, %38 : vector<1x128xf32>
    %40 = arith.mulf %35, %35 : vector<256x128xf32>
    %cst_36 = arith.constant dense<0.000000e+00> : vector<128xf32>
    %41 = vector.multi_reduction <add>, %40, %cst_36 [0] : vector<256x128xf32> to vector<128xf32>
    %42 = vector.shape_cast %41 : vector<128xf32> to vector<1x128xf32>
    %cst_37 = arith.constant 2.560000e+02 : f32
    %43 = vector.broadcast %cst_37 : f32 to vector<1x128xf32>
    %44 = arith.divf %42, %43 : vector<1x128xf32>
    %45 = arith.mulf %39, %39 : vector<1x128xf32>
    %46 = arith.subf %44, %45 : vector<1x128xf32>
    %47 = vector.broadcast %39 : vector<1x128xf32> to vector<256x128xf32>
    %48 = arith.subf %35, %47 : vector<256x128xf32>
    %cst_38 = arith.constant 9.99999974E-6 : f32
    %49 = vector.broadcast %cst_38 : f32 to vector<1x128xf32>
    %50 = arith.addf %46, %49 : vector<1x128xf32>
    %51 = math.rsqrt %50 : vector<1x128xf32>
    %52 = vector.broadcast %51 : vector<1x128xf32> to vector<256x128xf32>
    %53 = arith.mulf %48, %52 : vector<256x128xf32>
    %cst_39 = arith.constant 0.000000e+00 : f32
    %54 = vector.broadcast %cst_39 : f32 to vector<256x128xf32>
    %55 = arith.maximumf %53, %54 : vector<256x128xf32>
    %56 = vector.shape_cast %55 : vector<256x128xf32> to vector<16x16x128xf32>
    %c1_40 = arith.constant 1 : index
    %c1_41 = arith.constant 1 : index
    %c0_42 = arith.constant 0 : index
    %57 = vector.load %arg5[%c1_40, %c1_41, %c0_42] : memref<18x18x128xf32, #tpu.memory_space<vmem>>, vector<16x16x128xf32>
    tpu.vector_store %arg5[%c1_40, %c1_41, %c0_42], %56 {strides = array<i32>} : memref<18x18x128xf32, #tpu.memory_space<vmem>>, vector<16x16x128xf32>,
    %c0_43 = arith.constant 0 : index
    %c0_44 = arith.constant 0 : index
    %c0_45 = arith.constant 0 : index
    %58 = vector.load %arg5[%c0_43, %c0_44, %c0_45] : memref<18x18x128xf32, #tpu.memory_space<vmem>>, vector<16x16x128xf32>
    %59 = vector.shape_cast %58 : vector<16x16x128xf32> to vector<256x128xf32>
    %60 = arith.truncf %59 : vector<256x128xf32> to vector<256x128xbf16>
    %c0_46 = arith.constant 0 : index
    %c1_47 = arith.constant 1 : index
    %c0_48 = arith.constant 0 : index
    %61 = vector.load %arg5[%c0_46, %c1_47, %c0_48] : memref<18x18x128xf32, #tpu.memory_space<vmem>>, vector<16x16x128xf32>
    %62 = vector.shape_cast %61 : vector<16x16x128xf32> to vector<256x128xf32>
    %63 = arith.truncf %62 : vector<256x128xf32> to vector<256x128xbf16>
    %c0_49 = arith.constant 0 : index
    %c2_50 = arith.constant 2 : index
    %c0_51 = arith.constant 0 : index
    %64 = vector.load %arg5[%c0_49, %c2_50, %c0_51] : memref<18x18x128xf32, #tpu.memory_space<vmem>>, vector<16x16x128xf32>
    %65 = vector.shape_cast %64 : vector<16x16x128xf32> to vector<256x128xf32>
    %66 = arith.truncf %65 : vector<256x128xf32> to vector<256x128xbf16>
    %c1_52 = arith.constant 1 : index
    %c0_53 = arith.constant 0 : index
    %c0_54 = arith.constant 0 : index
    %67 = vector.load %arg5[%c1_52, %c0_53, %c0_54] : memref<18x18x128xf32, #tpu.memory_space<vmem>>, vector<16x16x128xf32>
    %68 = vector.shape_cast %67 : vector<16x16x128xf32> to vector<256x128xf32>
    %69 = arith.truncf %68 : vector<256x128xf32> to vector<256x128xbf16>
    %c1_55 = arith.constant 1 : index
    %c1_56 = arith.constant 1 : index
    %c0_57 = arith.constant 0 : index
    %70 = vector.load %arg5[%c1_55, %c1_56, %c0_57] : memref<18x18x128xf32, #tpu.memory_space<vmem>>, vector<16x16x128xf32>
    %71 = vector.shape_cast %70 : vector<16x16x128xf32> to vector<256x128xf32>
    %72 = arith.truncf %71 : vector<256x128xf32> to vector<256x128xbf16>
    %c1_58 = arith.constant 1 : index
    %c2_59 = arith.constant 2 : index
    %c0_60 = arith.constant 0 : index
    %73 = vector.load %arg5[%c1_58, %c2_59, %c0_60] : memref<18x18x128xf32, #tpu.memory_space<vmem>>, vector<16x16x128xf32>
    %74 = vector.shape_cast %73 : vector<16x16x128xf32> to vector<256x128xf32>
    %75 = arith.truncf %74 : vector<256x128xf32> to vector<256x128xbf16>
    %c2_61 = arith.constant 2 : index
    %c0_62 = arith.constant 0 : index
    %c0_63 = arith.constant 0 : index
    %76 = vector.load %arg5[%c2_61, %c0_62, %c0_63] : memref<18x18x128xf32, #tpu.memory_space<vmem>>, vector<16x16x128xf32>
    %77 = vector.shape_cast %76 : vector<16x16x128xf32> to vector<256x128xf32>
    %78 = arith.truncf %77 : vector<256x128xf32> to vector<256x128xbf16>
    %c2_64 = arith.constant 2 : index
    %c1_65 = arith.constant 1 : index
    %c0_66 = arith.constant 0 : index
    %79 = vector.load %arg5[%c2_64, %c1_65, %c0_66] : memref<18x18x128xf32, #tpu.memory_space<vmem>>, vector<16x16x128xf32>
    %80 = vector.shape_cast %79 : vector<16x16x128xf32> to vector<256x128xf32>
    %81 = arith.truncf %80 : vector<256x128xf32> to vector<256x128xbf16>
    %c2_67 = arith.constant 2 : index
    %c2_68 = arith.constant 2 : index
    %c0_69 = arith.constant 0 : index
    %82 = vector.load %arg5[%c2_67, %c2_68, %c0_69] : memref<18x18x128xf32, #tpu.memory_space<vmem>>, vector<16x16x128xf32>
    %83 = vector.shape_cast %82 : vector<16x16x128xf32> to vector<256x128xf32>
    %84 = arith.truncf %83 : vector<256x128xf32> to vector<256x128xbf16>
    %85 = tpu.concatenate %60, %63, %66, %69, %72, %75, %78, %81, %84 in 1 : vector<256x128xbf16>, vector<256x128xbf16>, vector<256x128xbf16>, vector<256x128xbf16>, vector<256x128xbf16>, vector<256x128xbf16>, vector<256x128xbf16>, vector<256x128xbf16>, vector<256x128xbf16> -> vector<256x1152xbf16>
    %c0_70 = arith.constant 0 : index
    %c0_71 = arith.constant 0 : index
    %86 = vector.load %arg3[%c0_70, %c0_71] : memref<1152x128xbf16, #tpu.memory_space<vmem>>, vector<1152x128xbf16>
    %cst_72 = arith.constant dense<0.000000e+00> : vector<256x128xf32>
    %87 = tpu.matmul %85, %86, %cst_72 {dimension_numbers = #tpu.dot_dimension_numbers<[1], [0], [0], [1], [0, 0, 1, 1], [], []>} : vector<256x1152xbf16>, vector<1152x128xbf16>, vector<256x128xf32> -> vector<256x128xf32>
    %cst_73 = arith.constant dense<0.000000e+00> : vector<128xf32>
    %88 = vector.multi_reduction <add>, %87, %cst_73 [0] : vector<256x128xf32> to vector<128xf32>
    %89 = vector.shape_cast %88 : vector<128xf32> to vector<1x128xf32>
    %cst_74 = arith.constant 2.560000e+02 : f32
    %90 = vector.broadcast %cst_74 : f32 to vector<1x128xf32>
    %91 = arith.divf %89, %90 : vector<1x128xf32>
    %92 = arith.mulf %87, %87 : vector<256x128xf32>
    %cst_75 = arith.constant dense<0.000000e+00> : vector<128xf32>
    %93 = vector.multi_reduction <add>, %92, %cst_75 [0] : vector<256x128xf32> to vector<128xf32>
    %94 = vector.shape_cast %93 : vector<128xf32> to vector<1x128xf32>
    %cst_76 = arith.constant 2.560000e+02 : f32
    %95 = vector.broadcast %cst_76 : f32 to vector<1x128xf32>
    %96 = arith.divf %94, %95 : vector<1x128xf32>
    %97 = arith.mulf %91, %91 : vector<1x128xf32>
    %98 = arith.subf %96, %97 : vector<1x128xf32>
    %99 = vector.broadcast %91 : vector<1x128xf32> to vector<256x128xf32>
    %100 = arith.subf %87, %99 : vector<256x128xf32>
    %cst_77 = arith.constant 9.99999974E-6 : f32
    %101 = vector.broadcast %cst_77 : f32 to vector<1x128xf32>
    %102 = arith.addf %98, %101 : vector<1x128xf32>
    %103 = math.rsqrt %102 : vector<1x128xf32>
    %104 = vector.broadcast %103 : vector<1x128xf32> to vector<256x128xf32>
    %105 = arith.mulf %100, %104 : vector<256x128xf32>
    %106 = vector.shape_cast %105 : vector<256x128xf32> to vector<16x16x128xf32>
    %107 = arith.addf %4, %106 : vector<16x16x128xf32>
    %c0_78 = arith.constant 0 : index
    %c0_79 = arith.constant 0 : index
    %c0_80 = arith.constant 0 : index
    %c0_81 = arith.constant 0 : index
    %108 = vector.load %arg4[%c0_78, %c0_79, %c0_80, %c0_81] : memref<1x16x16x128xf32, #tpu.memory_space<vmem>>, vector<1x16x16x128xf32>
    %109 = vector.shape_cast %108 : vector<1x16x16x128xf32> to vector<16x16x128xf32>
    %110 = vector.shape_cast %107 : vector<16x16x128xf32> to vector<1x16x16x128xf32>
    tpu.vector_store %arg4[%c0_78, %c0_79, %c0_80, %c0_81], %110 {strides = array<i32>} : memref<1x16x16x128xf32, #tpu.memory_space<vmem>>, vector<1x16x16x128xf32>,
    return
  }
  func.func @transform_0(%arg0: i32) -> (i32, i32, i32, i32) {
    %c0_i32 = arith.constant 0 : i32
    %c0_i32_0 = arith.constant 0 : i32
    %c0_i32_1 = arith.constant 0 : i32
    %c0_i32_2 = arith.constant 0 : i32
    return %arg0, %c0_i32, %c0_i32_0, %c0_i32_1 : i32, i32, i32, i32
  }
  func.func @transform_1(%arg0: i32) -> (i32, i32) {
    %c0_i32 = arith.constant 0 : i32
    %c0_i32_0 = arith.constant 0 : i32
    %c0_i32_1 = arith.constant 0 : i32
    return %c0_i32, %c0_i32_0 : i32, i32
  }
  func.func @transform_2(%arg0: i32) -> (i32, i32) {
    %c0_i32 = arith.constant 0 : i32
    %c0_i32_0 = arith.constant 0 : i32
    %c0_i32_1 = arith.constant 0 : i32
    return %c0_i32, %c0_i32_0 : i32, i32
  }
  func.func @transform_3(%arg0: i32) -> (i32, i32, i32, i32) {
    %c0_i32 = arith.constant 0 : i32
    %c0_i32_0 = arith.constant 0 : i32
    %c0_i32_1 = arith.constant 0 : i32
    %c0_i32_2 = arith.constant 0 : i32
    return %arg0, %c0_i32, %c0_i32_0, %c0_i32_1 : i32, i32, i32, i32
  }
}

</mosaic_0001>

<llo_original>
// kernel: residual_block_forward.1
$region0: #{residual_block_forward.1}
  #allocation0 [shape = 'u32[]', space=smem, size = 0x4, offset = 0x4, fixed_abs, tag = 'smem constant byte address 0x4 - core index']
  #allocation1 [shape = 'u32[144,128]{1,0:T(1,128)}', space=vmem, size = 0x12000, scoped, tag = 'internal scratch']
  #allocation2 [shape = 'f32[18,18,128]{2,1,0:T(8,128)}', space=vmem, size = 0x36000, scoped, tag = 'scratch operand']
  %s0 = inlined_call_operand.vmem [shape: f32[2,16,16,128], index: 0, kind: input, shape index: {}]
  %s1 = inlined_call_operand.vmem [shape: bf16[1152,128], index: 1, kind: input, shape index: {}]
  %s2 = inlined_call_operand.vmem [shape: bf16[1152,128], index: 2, kind: input, shape index: {}]
  %s3 = inlined_call_operand.vmem [shape: f32[2,16,16,128], index: 3, kind: output, shape index: {}]
  %s4 = sld [smem:[#allocation0]]
  $region49: #{residual_block_forward.1} parent=0
    _
  %s6 = ssub.s32 1, %s4
  %s7 = scalar_select 0, %s6, %s4
  loop: start=0, step=1, limit=4
  $region2: #{residual_block_forward.1} parent=0 // loop_pre_header
    _
  $region3: #{residual_block_forward.1} parent=0 // loop_header
    %s9 = sphi 0, %s13
    %p10 = scmp.ge.s32.totalorder %s9, 4
    %s19 = sphi 0, %s21
    %s22 = sphi 0, %s19
    %s23 = sphi 0, %s22
    %s39 = sphi 0, %s23
    %s43 = sphi 0, %s43
    %s45 = sphi 0, %s43
    %s46 = sphi 0, %s45
    %s60 = sphi 0, %s46
    %s64 = sphi 0, %s64
    %s66 = sphi 0, %s64
    %s67 = sphi 0, %s66
    %s81 = sphi 0, %s67
    %s87 = sphi 0, %s89
    %s90 = sphi 0, %s87
    %s91 = sphi 0, %s90
    %s107 = sphi 0, %s91
  $region4: #{residual_block_forward.1} parent=0 // loop_header_branch
    %12 = sbr.rel (%p10) target = $region8
  $region5: #{residual_block_forward.1} parent=0 // loop_body
    %s14 = ssub.s32 %s9, 1
    %s15 = ssub.s32 %s9, 2
    %s16 = sadd.s32 %s9, 1
    %s17 = ssub.s32 %s9, %s16
    %p18 = scmp.eq.s32.totalorder %s17, 0
    %s20 = sadd.s32 %s19, 1
    %s21 = scalar_select %p18, %s19, %s20
    %p24 = pneg %p18
    %p25 = scmp.eq.s32.totalorder %s9, 1
    %p26 = por %p24, %p25
    %p27 = scmp.ne.s32.totalorder %s19, %s22
    %p28 = scmp.eq.s32.totalorder %s9, 0
    %p29 = por %p27, %p28
    %p30 = scmp.ne.s32.totalorder %s19, %s22
    %p31 = scmp.eq.s32.totalorder %s14, 1
    %p32 = por %p30, %p31
    %p33 = scmp.ne.s32.totalorder %s22, %s23
    %p34 = scmp.eq.s32.totalorder %s14, 0
    %p35 = por %p33, %p34
    %p36 = scmp.ne.s32.totalorder %s22, %s23
    %p37 = scmp.eq.s32.totalorder %s15, 1
    %p38 = por %p36, %p37
    %p40 = scmp.ne.s32.totalorder %s23, %s39
    %p41 = scmp.eq.s32.totalorder %s15, 0
    %p42 = por %p40, %p41
    %s44 = sadd.s32 %s43, 1
    %p47 = scmp.eq.s32.totalorder %s9, 1
    %p48 = scmp.ne.s32.totalorder %s43, %s45
    %p49 = scmp.eq.s32.totalorder %s9, 0
    %p50 = por %p48, %p49
    %p51 = scmp.ne.s32.totalorder %s43, %s45
    %p52 = scmp.eq.s32.totalorder %s14, 1
    %p53 = por %p51, %p52
    %p54 = scmp.ne.s32.totalorder %s45, %s46
    %p55 = scmp.eq.s32.totalorder %s14, 0
    %p56 = por %p54, %p55
    %p57 = scmp.ne.s32.totalorder %s45, %s46
    %p58 = scmp.eq.s32.totalorder %s15, 1
    %p59 = por %p57, %p58
    %p61 = scmp.ne.s32.totalorder %s46, %s60
    %p62 = scmp.eq.s32.totalorder %s15, 0
    %p63 = por %p61, %p62
    %s65 = sadd.s32 %s64, 1
    %p68 = scmp.eq.s32.totalorder %s9, 1
    %p69 = scmp.ne.s32.totalorder %s64, %s66
    %p70 = scmp.eq.s32.totalorder %s9, 0
    %p71 = por %p69, %p70
    %p72 = scmp.ne.s32.totalorder %s64, %s66
    %p73 = scmp.eq.s32.totalorder %s14, 1
    %p74 = por %p72, %p73
    %p75 = scmp.ne.s32.totalorder %s66, %s67
    %p76 = scmp.eq.s32.totalorder %s14, 0
    %p77 = por %p75, %p76
    %p78 = scmp.ne.s32.totalorder %s66, %s67
    %p79 = scmp.eq.s32.totalorder %s15, 1
    %p80 = por %p78, %p79
    %p82 = scmp.ne.s32.totalorder %s67, %s81
    %p83 = scmp.eq.s32.totalorder %s15, 0
    %p84 = por %p82, %p83
    %s85 = ssub.s32 %s9, %s16
    %p86 = scmp.eq.s32.totalorder %s85, 0
    %s88 = sadd.s32 %s87, 1
    %s89 = scalar_select %p86, %s87, %s88
    %p92 = pneg %p86
    %p93 = scmp.eq.s32.totalorder %s9, 1
    %p94 = por %p92, %p93
    %p95 = scmp.ne.s32.totalorder %s87, %s90
    %p96 = scmp.eq.s32.totalorder %s9, 0
    %p97 = por %p95, %p96
    %p98 = scmp.ne.s32.totalorder %s87, %s90
    %p99 = scmp.eq.s32.totalorder %s14, 1
    %p100 = por %p98, %p99
    %p101 = scmp.ne.s32.totalorder %s90, %s91
    %p102 = scmp.eq.s32.totalorder %s14, 0
    %p103 = por %p101, %p102
    %p104 = scmp.ne.s32.totalorder %s90, %s91
    %p105 = scmp.eq.s32.totalorder %s15, 1
    %p106 = por %p104, %p105
    %p108 = scmp.ne.s32.totalorder %s91, %s107
    %p109 = scmp.eq.s32.totalorder %s15, 0
    %p110 = por %p108, %p109
    %p111 = scmp.le.s32.totalorder 1, %s9
    %p112 = scmp.lt.s32.totalorder %s9, 3
    %p113 = pnand %p111, %p112
    %p114 = pneg %p113
    // Predicated region
    $region9: #{residual_block_forward.1} parent=5 // pred_check
      _
    $region10: #{residual_block_forward.1} parent=5 // pred_check_branch
      %116 = sbr.rel (%p113) target = $region12
    $region11: #{residual_block_forward.1} parent=5 // pred_region
      %s117 = ssub.s32 %s9, 1
      // Predicated region
      $region13: #{residual_block_forward.1} parent=11 // pred_check
        %p118 = pneg %p56
      $region14: #{residual_block_forward.1} parent=11 // pred_check_branch
        %120 = sbr.rel (%p118) target = $region16
      $region15: #{residual_block_forward.1} parent=11 // pred_region
        _
      $region16: #{residual_block_forward.1} parent=11 // pred_fallthru
        _
      // Predicated region
      $region17: #{residual_block_forward.1} parent=11 // pred_check
        %p121 = pneg %p77
      $region18: #{residual_block_forward.1} parent=11 // pred_check_branch
        %123 = sbr.rel (%p121) target = $region20
      $region19: #{residual_block_forward.1} parent=11 // pred_region
        _
      $region20: #{residual_block_forward.1} parent=11 // pred_fallthru
        _
    $region12: #{residual_block_forward.1} parent=5 // pred_fallthru
      _
    %p124 = scmp.lt.s32.totalorder %s9, 2
    // Predicated region
    $region21: #{residual_block_forward.1} parent=5 // pred_check
      %p125 = pneg %p124
    $region22: #{residual_block_forward.1} parent=5 // pred_check_branch
      %127 = sbr.rel (%p125) target = $region24
    $region23: #{residual_block_forward.1} parent=5 // pred_region
      // Predicated region
      $region25: #{residual_block_forward.1} parent=23 // pred_check
        %p128 = pneg %p29
      $region26: #{residual_block_forward.1} parent=23 // pred_check_branch
        %130 = sbr.rel (%p128) target = $region28
      $region27: #{residual_block_forward.1} parent=23 // pred_region
        %p131 = scmp.lt.s32.totalorder %s9, 1
        %s132 = scalar_select %p131, %s9, 1
        %s133 = smul.addr %s132, 32
        %s134 = smul.addr %s133, 8
        %s135 = scalar_lea.vmem %s0, %s134
      $region28: #{residual_block_forward.1} parent=23 // pred_fallthru
        _
    $region24: #{residual_block_forward.1} parent=5 // pred_fallthru
      _
    %p136 = scmp.le.s32.totalorder 1, %s9
    %p137 = scmp.lt.s32.totalorder %s9, 3
    %p138 = pnand %p136, %p137
    %p139 = pneg %p138
    // Predicated region
    $region29: #{residual_block_forward.1} parent=5 // pred_check
      _
    $region30: #{residual_block_forward.1} parent=5 // pred_check_branch
      %141 = sbr.rel (%p138) target = $region32
    $region31: #{residual_block_forward.1} parent=5 // pred_region
      %s142 = ssub.s32 %s9, 1
      %p143 = scmp.lt.s32.totalorder %s14, 1
      %s144 = scalar_select %p143, %s14, 1
      %s145 = smul.addr %s144, 32
      %s146 = smul.addr %s145, 8
      %s147 = scalar_lea.vmem %s0, %s146
      %p148 = pneg %p35
      %p149 = pneg %p32
      %p150 = pneg %p56
      %p151 = pneg %p53
      %p152 = pneg %p77
      %p153 = pneg %p74
      %p154 = pneg %p103
      %p155 = pneg %p100
      %p156 = scmp.lt.s32.totalorder %s14, 1
      %s157 = scalar_select %p156, %s14, 1
      %s158 = smul.addr %s157, 32
      %s159 = smul.addr %s158, 8
      %s160 = scalar_lea.vmem %s3, %s159
      %p161 = scmp.lt.s32.totalorder %s14, 1
      %s162 = scalar_select %p161, %s14, 1
      %s163 = smul.addr %s162, 32
      %s164 = smul.addr %s163, 8
      %s165 = scalar_lea.vmem %s0, %s164
      %p166 = scmp.lt.s32.totalorder %s14, 1
      %s167 = scalar_select %p166, %s14, 1
      %s168 = smul.addr %s167, 32
      %s169 = smul.addr %s168, 8
      %s170 = scalar_lea.vmem %s3, %s169
      %p172 = scmp.eq.s32.totalorder %s14, 0
      // Predicated region
      $region33: #{residual_block_forward.1} parent=31 // pred_check
        %p173 = pneg %p172
      $region34: #{residual_block_forward.1} parent=31 // pred_check_branch
        %175 = sbr.rel (%p173) target = $region36
      $region35: #{residual_block_forward.1} parent=31 // pred_region
        %176 = vst [vmem:[#allocation2] sm:$0xff] 0.0
        %177 = vst [vmem:[#allocation2 + $0x8] sm:$0xff] 0.0
        %178 = vst [vmem:[#allocation2 + $0x10] sm:$0x3] 0.0
        %179 = vst [vmem:[#allocation2 + $0x18] sm:$0xff] 0.0
        %180 = vst [vmem:[#allocation2 + $0x20] sm:$0xff] 0.0
        %181 = vst [vmem:[#allocation2 + $0x28] sm:$0x3] 0.0
        %182 = vst [vmem:[#allocation2 + $0x30] sm:$0xff] 0.0
        %183 = vst [vmem:[#allocation2 + $0x38] sm:$0xff] 0.0
        %184 = vst [vmem:[#allocation2 + $0x40] sm:$0x3] 0.0
        %185 = vst [vmem:[#allocation2 + $0x48] sm:$0xff] 0.0
        %186 = vst [vmem:[#allocation2 + $0x50] sm:$0xff] 0.0
        %187 = vst [vmem:[#allocation2 + $0x58] sm:$0x3] 0.0
        %188 = vst [vmem:[#allocation2 + $0x60] sm:$0xff] 0.0
        %189 = vst [vmem:[#allocation2 + $0x68] sm:$0xff] 0.0
        %190 = vst [vmem:[#allocation2 + $0x70] sm:$0x3] 0.0
        %191 = vst [vmem:[#allocation2 + $0x78] sm:$0xff] 0.0
        %192 = vst [vmem:[#allocation2 + $0x80] sm:$0xff] 0.0
        %193 = vst [vmem:[#allocation2 + $0x88] sm:$0x3] 0.0
        %194 = vst [vmem:[#allocation2 + $0x90] sm:$0xff] 0.0
        %195 = vst [vmem:[#allocation2 + $0x98] sm:$0xff] 0.0
        %196 = vst [vmem:[#allocation2 + $0xa0] sm:$0x3] 0.0
        %197 = vst [vmem:[#allocation2 + $0xa8] sm:$0xff] 0.0
        %198 = vst [vmem:[#allocation2 + $0xb0] sm:$0xff] 0.0
        %199 = vst [vmem:[#allocation2 + $0xb8] sm:$0x3] 0.0
        %200 = vst [vmem:[#allocation2 + $0xc0] sm:$0xff] 0.0
        %201 = vst [vmem:[#allocation2 + $0xc8] sm:$0xff] 0.0
        %202 = vst [vmem:[#allocation2 + $0xd0] sm:$0x3] 0.0
        %203 = vst [vmem:[#allocation2 + $0xd8] sm:$0xff] 0.0
        %204 = vst [vmem:[#allocation2 + $0xe0] sm:$0xff] 0.0
        %205 = vst [vmem:[#allocation2 + $0xe8] sm:$0x3] 0.0
        %206 = vst [vmem:[#allocation2 + $0xf0] sm:$0xff] 0.0
        %207 = vst [vmem:[#allocation2 + $0xf8] sm:$0xff] 0.0
        %208 = vst [vmem:[#allocation2 + $0x100] sm:$0x3] 0.0
        %209 = vst [vmem:[#allocation2 + $0x108] sm:$0xff] 0.0
        %210 = vst [vmem:[#allocation2 + $0x110] sm:$0xff] 0.0
        %211 = vst [vmem:[#allocation2 + $0x118] sm:$0x3] 0.0
        %212 = vst [vmem:[#allocation2 + $0x120] sm:$0xff] 0.0
        %213 = vst [vmem:[#allocation2 + $0x128] sm:$0xff] 0.0
        %214 = vst [vmem:[#allocation2 + $0x130] sm:$0x3] 0.0
        %215 = vst [vmem:[#allocation2 + $0x138] sm:$0xff] 0.0
        %216 = vst [vmem:[#allocation2 + $0x140] sm:$0xff] 0.0
        %217 = vst [vmem:[#allocation2 + $0x148] sm:$0x3] 0.0
        %218 = vst [vmem:[#allocation2 + $0x150] sm:$0xff] 0.0
        %219 = vst [vmem:[#allocation2 + $0x158] sm:$0xff] 0.0
        %220 = vst [vmem:[#allocation2 + $0x160] sm:$0x3] 0.0
        %221 = vst [vmem:[#allocation2 + $0x168] sm:$0xff] 0.0
        %222 = vst [vmem:[#allocation2 + $0x170] sm:$0xff] 0.0
        %223 = vst [vmem:[#allocation2 + $0x178] sm:$0x3] 0.0
        %224 = vst [vmem:[#allocation2 + $0x180] sm:$0xff] 0.0
        %225 = vst [vmem:[#allocation2 + $0x188] sm:$0xff] 0.0
        %226 = vst [vmem:[#allocation2 + $0x190] sm:$0x3] 0.0
        %227 = vst [vmem:[#allocation2 + $0x198] sm:$0xff] 0.0
        %228 = vst [vmem:[#allocation2 + $0x1a0] sm:$0xff] 0.0
        %229 = vst [vmem:[#allocation2 + $0x1a8] sm:$0x3] 0.0
      $region36: #{residual_block_forward.1} parent=31 // pred_fallthru
        _
      %v230 = vld [vmem:[%s165] sm:$0xff]
      %v231 = vld [vmem:[%s165 + $0x8] sm:$0xff]
      %v232 = vld [vmem:[%s165 + $0x10] sm:$0xff]
      %v233 = vld [vmem:[%s165 + $0x18] sm:$0xff]
      %v234 = vld [vmem:[%s165 + $0x20] sm:$0xff]
      %v235 = vld [vmem:[%s165 + $0x28] sm:$0xff]
      %v236 = vld [vmem:[%s165 + $0x30] sm:$0xff]
      %v237 = vld [vmem:[%s165 + $0x38] sm:$0xff]
      %v238 = vld [vmem:[%s165 + $0x40] sm:$0xff]
      %v239 = vld [vmem:[%s165 + $0x48] sm:$0xff]
      %v240 = vld [vmem:[%s165 + $0x50] sm:$0xff]
      %v241 = vld [vmem:[%s165 + $0x58] sm:$0xff]
      %v242 = vld [vmem:[%s165 + $0x60] sm:$0xff]
      %v243 = vld [vmem:[%s165 + $0x68] sm:$0xff]
      %v244 = vld [vmem:[%s165 + $0x70] sm:$0xff]
      %v245 = vld [vmem:[%s165 + $0x78] sm:$0xff]
      %v246 = vld [vmem:[%s165 + $0x80] sm:$0xff]
      %v247 = vld [vmem:[%s165 + $0x88] sm:$0xff]
      %v248 = vld [vmem:[%s165 + $0x90] sm:$0xff]
      %v249 = vld [vmem:[%s165 + $0x98] sm:$0xff]
      %v250 = vld [vmem:[%s165 + $0xa0] sm:$0xff]
      %v251 = vld [vmem:[%s165 + $0xa8] sm:$0xff]
      %v252 = vld [vmem:[%s165 + $0xb0] sm:$0xff]
      %v253 = vld [vmem:[%s165 + $0xb8] sm:$0xff]
      %v254 = vld [vmem:[%s165 + $0xc0] sm:$0xff]
      %v255 = vld [vmem:[%s165 + $0xc8] sm:$0xff]
      %v256 = vld [vmem:[%s165 + $0xd0] sm:$0xff]
      %v257 = vld [vmem:[%s165 + $0xd8] sm:$0xff]
      %v258 = vld [vmem:[%s165 + $0xe0] sm:$0xff]
      %v259 = vld [vmem:[%s165 + $0xe8] sm:$0xff]
      %v260 = vld [vmem:[%s165 + $0xf0] sm:$0xff]
      %v261 = vld [vmem:[%s165 + $0xf8] sm:$0xff]
      %s262 = scalar_lea.vmem [#allocation2], 24
      %263 = vst [vmem:[%s262 + $0x1] sm:$0xff] %v230
      %264 = vst [vmem:[%s262 + $0x9] sm:$0xff] %v231
      %265 = vst [vmem:[%s262 + $0x19] sm:$0xff] %v232
      %266 = vst [vmem:[%s262 + $0x21] sm:$0xff] %v233
      %267 = vst [vmem:[%s262 + $0x31] sm:$0xff] %v234
      %268 = vst [vmem:[%s262 + $0x39] sm:$0xff] %v235
      %269 = vst [vmem:[%s262 + $0x49] sm:$0xff] %v236
      %270 = vst [vmem:[%s262 + $0x51] sm:$0xff] %v237
      %271 = vst [vmem:[%s262 + $0x61] sm:$0xff] %v238
      %272 = vst [vmem:[%s262 + $0x69] sm:$0xff] %v239
      %273 = vst [vmem:[%s262 + $0x79] sm:$0xff] %v240
      %274 = vst [vmem:[%s262 + $0x81] sm:$0xff] %v241
      %275 = vst [vmem:[%s262 + $0x91] sm:$0xff] %v242
      %276 = vst [vmem:[%s262 + $0x99] sm:$0xff] %v243
      %277 = vst [vmem:[%s262 + $0xa9] sm:$0xff] %v244
      %278 = vst [vmem:[%s262 + $0xb1] sm:$0xff] %v245
      %279 = vst [vmem:[%s262 + $0xc1] sm:$0xff] %v246
      %280 = vst [vmem:[%s262 + $0xc9] sm:$0xff] %v247
      %281 = vst [vmem:[%s262 + $0xd9] sm:$0xff] %v248
      %282 = vst [vmem:[%s262 + $0xe1] sm:$0xff] %v249
      %283 = vst [vmem:[%s262 + $0xf1] sm:$0xff] %v250
      %284 = vst [vmem:[%s262 + $0xf9] sm:$0xff] %v251
      %285 = vst [vmem:[%s262 + $0x109] sm:$0xff] %v252
      %286 = vst [vmem:[%s262 + $0x111] sm:$0xff] %v253
      %287 = vst [vmem:[%s262 + $0x121] sm:$0xff] %v254
      %288 = vst [vmem:[%s262 + $0x129] sm:$0xff] %v255
      %289 = vst [vmem:[%s262 + $0x139] sm:$0xff] %v256
      %290 = vst [vmem:[%s262 + $0x141] sm:$0xff] %v257
      %291 = vst [vmem:[%s262 + $0x151] sm:$0xff] %v258
      %292 = vst [vmem:[%s262 + $0x159] sm:$0xff] %v259
      %293 = vst [vmem:[%s262 + $0x169] sm:$0xff] %v260
      %294 = vst [vmem:[%s262 + $0x171] sm:$0xff] %v261
      %v295 = vld [vmem:[#allocation2] sm:$0xff]
      %v296 = vld [vmem:[#allocation2 + $0x8] sm:$0xff]
      %v297 = vld [vmem:[#allocation2 + $0x18] sm:$0xff]
      %v298 = vld [vmem:[#allocation2 + $0x20] sm:$0xff]
      %v299 = vld [vmem:[#allocation2 + $0x30] sm:$0xff]
      %v300 = vld [vmem:[#allocation2 + $0x38] sm:$0xff]
      %v301 = vld [vmem:[#allocation2 + $0x48] sm:$0xff]
      %v302 = vld [vmem:[#allocation2 + $0x50] sm:$0xff]
      %v303 = vld [vmem:[#allocation2 + $0x60] sm:$0xff]
      %v304 = vld [vmem:[#allocation2 + $0x68] sm:$0xff]
      %v305 = vld [vmem:[#allocation2 + $0x78] sm:$0xff]
      %v306 = vld [vmem:[#allocation2 + $0x80] sm:$0xff]
      %v307 = vld [vmem:[#allocation2 + $0x90] sm:$0xff]
      %v308 = vld [vmem:[#allocation2 + $0x98] sm:$0xff]
      %v309 = vld [vmem:[#allocation2 + $0xa8] sm:$0xff]
      %v310 = vld [vmem:[#allocation2 + $0xb0] sm:$0xff]
      %v311 = vld [vmem:[#allocation2 + $0xc0] sm:$0xff]
      %v312 = vld [vmem:[#allocation2 + $0xc8] sm:$0xff]
      %v313 = vld [vmem:[#allocation2 + $0xd8] sm:$0xff]
      %v314 = vld [vmem:[#allocation2 + $0xe0] sm:$0xff]
      %v315 = vld [vmem:[#allocation2 + $0xf0] sm:$0xff]
      %v316 = vld [vmem:[#allocation2 + $0xf8] sm:$0xff]
      %v317 = vld [vmem:[#allocation2 + $0x108] sm:$0xff]
      %v318 = vld [vmem:[#allocation2 + $0x110] sm:$0xff]
      %v319 = vld [vmem:[#allocation2 + $0x120] sm:$0xff]
      %v320 = vld [vmem:[#allocation2 + $0x128] sm:$0xff]
      %v321 = vld [vmem:[#allocation2 + $0x138] sm:$0xff]
      %v322 = vld [vmem:[#allocation2 + $0x140] sm:$0xff]
      %v323 = vld [vmem:[#allocation2 + $0x150] sm:$0xff]
      %v324 = vld [vmem:[#allocation2 + $0x158] sm:$0xff]
      %v325 = vld [vmem:[#allocation2 + $0x168] sm:$0xff]
      %v326 = vld [vmem:[#allocation2 + $0x170] sm:$0xff]
      %v327 = vpack.c.bf16 %v296, %v295
      %v328 = vpack.c.bf16 %v298, %v297
      %v329 = vpack.c.bf16 %v300, %v299
      %v330 = vpack.c.bf16 %v302, %v301
      %v331 = vpack.c.bf16 %v304, %v303
      %v332 = vpack.c.bf16 %v306, %v305
      %v333 = vpack.c.bf16 %v308, %v307
      %v334 = vpack.c.bf16 %v310, %v309
      %v335 = vpack.c.bf16 %v312, %v311
      %v336 = vpack.c.bf16 %v314, %v313
      %v337 = vpack.c.bf16 %v316, %v315
      %v338 = vpack.c.bf16 %v318, %v317
      %v339 = vpack.c.bf16 %v320, %v319
      %v340 = vpack.c.bf16 %v322, %v321
      %v341 = vpack.c.bf16 %v324, %v323
      %v342 = vpack.c.bf16 %v326, %v325
      %v343 = vld [vmem:[#allocation2 + $0x1] sm:$0xff]
      %v344 = vld [vmem:[#allocation2 + $0x9] sm:$0xff]
      %v345 = vld [vmem:[#allocation2 + $0x19] sm:$0xff]
      %v346 = vld [vmem:[#allocation2 + $0x21] sm:$0xff]
      %v347 = vld [vmem:[#allocation2 + $0x31] sm:$0xff]
      %v348 = vld [vmem:[#allocation2 + $0x39] sm:$0xff]
      %v349 = vld [vmem:[#allocation2 + $0x49] sm:$0xff]
      %v350 = vld [vmem:[#allocation2 + $0x51] sm:$0xff]
      %v351 = vld [vmem:[#allocation2 + $0x61] sm:$0xff]
      %v352 = vld [vmem:[#allocation2 + $0x69] sm:$0xff]
      %v353 = vld [vmem:[#allocation2 + $0x79] sm:$0xff]
      %v354 = vld [vmem:[#allocation2 + $0x81] sm:$0xff]
      %v355 = vld [vmem:[#allocation2 + $0x91] sm:$0xff]
      %v356 = vld [vmem:[#allocation2 + $0x99] sm:$0xff]
      %v357 = vld [vmem:[#allocation2 + $0xa9] sm:$0xff]
      %v358 = vld [vmem:[#allocation2 + $0xb1] sm:$0xff]
      %v359 = vld [vmem:[#allocation2 + $0xc1] sm:$0xff]
      %v360 = vld [vmem:[#allocation2 + $0xc9] sm:$0xff]
      %v361 = vld [vmem:[#allocation2 + $0xd9] sm:$0xff]
      %v362 = vld [vmem:[#allocation2 + $0xe1] sm:$0xff]
      %v363 = vld [vmem:[#allocation2 + $0xf1] sm:$0xff]
      %v364 = vld [vmem:[#allocation2 + $0xf9] sm:$0xff]
      %v365 = vld [vmem:[#allocation2 + $0x109] sm:$0xff]
      %v366 = vld [vmem:[#allocation2 + $0x111] sm:$0xff]
      %v367 = vld [vmem:[#allocation2 + $0x121] sm:$0xff]
      %v368 = vld [vmem:[#allocation2 + $0x129] sm:$0xff]
      %v369 = vld [vmem:[#allocation2 + $0x139] sm:$0xff]
      %v370 = vld [vmem:[#allocation2 + $0x141] sm:$0xff]
      %v371 = vld [vmem:[#allocation2 + $0x151] sm:$0xff]
      %v372 = vld [vmem:[#allocation2 + $0x159] sm:$0xff]
      %v373 = vld [vmem:[#allocation2 + $0x169] sm:$0xff]
      %v374 = vld [vmem:[#allocation2 + $0x171] sm:$0xff]
      %v375 = vpack.c.bf16 %v344, %v343
      %v376 = vpack.c.bf16 %v346, %v345
      %v377 = vpack.c.bf16 %v348, %v347
      %v378 = vpack.c.bf16 %v350, %v349
      %v379 = vpack.c.bf16 %v352, %v351
      %v380 = vpack.c.bf16 %v354, %v353
      %v381 = vpack.c.bf16 %v356, %v355
      %v382 = vpack.c.bf16 %v358, %v357
      %v383 = vpack.c.bf16 %v360, %v359
      %v384 = vpack.c.bf16 %v362, %v361
      %v385 = vpack.c.bf16 %v364, %v363
      %v386 = vpack.c.bf16 %v366, %v365
      %v387 = vpack.c.bf16 %v368, %v367
      %v388 = vpack.c.bf16 %v370, %v369
      %v389 = vpack.c.bf16 %v372, %v371
      %v390 = vpack.c.bf16 %v374, %v373
      %v391 = vld [vmem:[#allocation2 + $0x2] sm:$0xff]
      %v392 = vld [vmem:[#allocation2 + $0xa] sm:$0xff]
      %v393 = vld [vmem:[#allocation2 + $0x1a] sm:$0xff]
      %v394 = vld [vmem:[#allocation2 + $0x22] sm:$0xff]
      %v395 = vld [vmem:[#allocation2 + $0x32] sm:$0xff]
      %v396 = vld [vmem:[#allocation2 + $0x3a] sm:$0xff]
      %v397 = vld [vmem:[#allocation2 + $0x4a] sm:$0xff]
      %v398 = vld [vmem:[#allocation2 + $0x52] sm:$0xff]
      %v399 = vld [vmem:[#allocation2 + $0x62] sm:$0xff]
      %v400 = vld [vmem:[#allocation2 + $0x6a] sm:$0xff]
      %v401 = vld [vmem:[#allocation2 + $0x7a] sm:$0xff]
      %v402 = vld [vmem:[#allocation2 + $0x82] sm:$0xff]
      %v403 = vld [vmem:[#allocation2 + $0x92] sm:$0xff]
      %v404 = vld [vmem:[#allocation2 + $0x9a] sm:$0xff]
      %v405 = vld [vmem:[#allocation2 + $0xaa] sm:$0xff]
      %v406 = vld [vmem:[#allocation2 + $0xb2] sm:$0xff]
      %v407 = vld [vmem:[#allocation2 + $0xc2] sm:$0xff]
      %v408 = vld [vmem:[#allocation2 + $0xca] sm:$0xff]
      %v409 = vld [vmem:[#allocation2 + $0xda] sm:$0xff]
      %v410 = vld [vmem:[#allocation2 + $0xe2] sm:$0xff]
      %v411 = vld [vmem:[#allocation2 + $0xf2] sm:$0xff]
      %v412 = vld [vmem:[#allocation2 + $0xfa] sm:$0xff]
      %v413 = vld [vmem:[#allocation2 + $0x10a] sm:$0xff]
      %v414 = vld [vmem:[#allocation2 + $0x112] sm:$0xff]
      %v415 = vld [vmem:[#allocation2 + $0x122] sm:$0xff]
      %v416 = vld [vmem:[#allocation2 + $0x12a] sm:$0xff]
      %v417 = vld [vmem:[#allocation2 + $0x13a] sm:$0xff]
      %v418 = vld [vmem:[#allocation2 + $0x142] sm:$0xff]
      %v419 = vld [vmem:[#allocation2 + $0x152] sm:$0xff]
      %v420 = vld [vmem:[#allocation2 + $0x15a] sm:$0xff]
      %v421 = vld [vmem:[#allocation2 + $0x16a] sm:$0xff]
      %v422 = vld [vmem:[#allocation2 + $0x172] sm:$0xff]
      %v423 = vpack.c.bf16 %v392, %v391
      %v424 = vpack.c.bf16 %v394, %v393
      %v425 = vpack.c.bf16 %v396, %v395
      %v426 = vpack.c.bf16 %v398, %v397
      %v427 = vpack.c.bf16 %v400, %v399
      %v428 = vpack.c.bf16 %v402, %v401
      %v429 = vpack.c.bf16 %v404, %v403
      %v430 = vpack.c.bf16 %v406, %v405
      %v431 = vpack.c.bf16 %v408, %v407
      %v432 = vpack.c.bf16 %v410, %v409
      %v433 = vpack.c.bf16 %v412, %v411
      %v434 = vpack.c.bf16 %v414, %v413
      %v435 = vpack.c.bf16 %v416, %v415
      %v436 = vpack.c.bf16 %v418, %v417
      %v437 = vpack.c.bf16 %v420, %v419
      %v438 = vpack.c.bf16 %v422, %v421
      %v439 = vld [vmem:[%s262] sm:$0xff]
      %v440 = vld [vmem:[%s262 + $0x8] sm:$0xff]
      %v441 = vld [vmem:[%s262 + $0x18] sm:$0xff]
      %v442 = vld [vmem:[%s262 + $0x20] sm:$0xff]
      %v443 = vld [vmem:[%s262 + $0x30] sm:$0xff]
      %v444 = vld [vmem:[%s262 + $0x38] sm:$0xff]
      %v445 = vld [vmem:[%s262 + $0x48] sm:$0xff]
      %v446 = vld [vmem:[%s262 + $0x50] sm:$0xff]
      %v447 = vld [vmem:[%s262 + $0x60] sm:$0xff]
      %v448 = vld [vmem:[%s262 + $0x68] sm:$0xff]
      %v449 = vld [vmem:[%s262 + $0x78] sm:$0xff]
      %v450 = vld [vmem:[%s262 + $0x80] sm:$0xff]
      %v451 = vld [vmem:[%s262 + $0x90] sm:$0xff]
      %v452 = vld [vmem:[%s262 + $0x98] sm:$0xff]
      %v453 = vld [vmem:[%s262 + $0xa8] sm:$0xff]
      %v454 = vld [vmem:[%s262 + $0xb0] sm:$0xff]
      %v455 = vld [vmem:[%s262 + $0xc0] sm:$0xff]
      %v456 = vld [vmem:[%s262 + $0xc8] sm:$0xff]
      %v457 = vld [vmem:[%s262 + $0xd8] sm:$0xff]
      %v458 = vld [vmem:[%s262 + $0xe0] sm:$0xff]
      %v459 = vld [vmem:[%s262 + $0xf0] sm:$0xff]
      %v460 = vld [vmem:[%s262 + $0xf8] sm:$0xff]
      %v461 = vld [vmem:[%s262 + $0x108] sm:$0xff]
      %v462 = vld [vmem:[%s262 + $0x110] sm:$0xff]
      %v463 = vld [vmem:[%s262 + $0x120] sm:$0xff]
      %v464 = vld [vmem:[%s262 + $0x128] sm:$0xff]
      %v465 = vld [vmem:[%s262 + $0x138] sm:$0xff]
      %v466 = vld [vmem:[%s262 + $0x140] sm:$0xff]
      %v467 = vld [vmem:[%s262 + $0x150] sm:$0xff]
      %v468 = vld [vmem:[%s262 + $0x158] sm:$0xff]
      %v469 = vld [vmem:[%s262 + $0x168] sm:$0xff]
      %v470 = vld [vmem:[%s262 + $0x170] sm:$0xff]
      %v471 = vpack.c.bf16 %v440, %v439
      %v472 = vpack.c.bf16 %v442, %v441
      %v473 = vpack.c.bf16 %v444, %v443
      %v474 = vpack.c.bf16 %v446, %v445
      %v475 = vpack.c.bf16 %v448, %v447
      %v476 = vpack.c.bf16 %v450, %v449
      %v477 = vpack.c.bf16 %v452, %v451
      %v478 = vpack.c.bf16 %v454, %v453
      %v479 = vpack.c.bf16 %v456, %v455
      %v480 = vpack.c.bf16 %v458, %v457
      %v481 = vpack.c.bf16 %v460, %v459
      %v482 = vpack.c.bf16 %v462, %v461
      %v483 = vpack.c.bf16 %v464, %v463
      %v484 = vpack.c.bf16 %v466, %v465
      %v485 = vpack.c.bf16 %v468, %v467
      %v486 = vpack.c.bf16 %v470, %v469
      %v487 = vld [vmem:[%s262 + $0x1] sm:$0xff]
      %v488 = vld [vmem:[%s262 + $0x9] sm:$0xff]
      %v489 = vld [vmem:[%s262 + $0x19] sm:$0xff]
      %v490 = vld [vmem:[%s262 + $0x21] sm:$0xff]
      %v491 = vld [vmem:[%s262 + $0x31] sm:$0xff]
      %v492 = vld [vmem:[%s262 + $0x39] sm:$0xff]
      %v493 = vld [vmem:[%s262 + $0x49] sm:$0xff]
      %v494 = vld [vmem:[%s262 + $0x51] sm:$0xff]
      %v495 = vld [vmem:[%s262 + $0x61] sm:$0xff]
      %v496 = vld [vmem:[%s262 + $0x69] sm:$0xff]
      %v497 = vld [vmem:[%s262 + $0x79] sm:$0xff]
      %v498 = vld [vmem:[%s262 + $0x81] sm:$0xff]
      %v499 = vld [vmem:[%s262 + $0x91] sm:$0xff]
      %v500 = vld [vmem:[%s262 + $0x99] sm:$0xff]
      %v501 = vld [vmem:[%s262 + $0xa9] sm:$0xff]
      %v502 = vld [vmem:[%s262 + $0xb1] sm:$0xff]
      %v503 = vld [vmem:[%s262 + $0xc1] sm:$0xff]
      %v504 = vld [vmem:[%s262 + $0xc9] sm:$0xff]
      %v505 = vld [vmem:[%s262 + $0xd9] sm:$0xff]
      %v506 = vld [vmem:[%s262 + $0xe1] sm:$0xff]
      %v507 = vld [vmem:[%s262 + $0xf1] sm:$0xff]
      %v508 = vld [vmem:[%s262 + $0xf9] sm:$0xff]
      %v509 = vld [vmem:[%s262 + $0x109] sm:$0xff]
      %v510 = vld [vmem:[%s262 + $0x111] sm:$0xff]
      %v511 = vld [vmem:[%s262 + $0x121] sm:$0xff]
      %v512 = vld [vmem:[%s262 + $0x129] sm:$0xff]
      %v513 = vld [vmem:[%s262 + $0x139] sm:$0xff]
      %v514 = vld [vmem:[%s262 + $0x141] sm:$0xff]
      %v515 = vld [vmem:[%s262 + $0x151] sm:$0xff]
      %v516 = vld [vmem:[%s262 + $0x159] sm:$0xff]
      %v517 = vld [vmem:[%s262 + $0x169] sm:$0xff]
      %v518 = vld [vmem:[%s262 + $0x171] sm:$0xff]
      %v519 = vpack.c.bf16 %v488, %v487
      %v520 = vpack.c.bf16 %v490, %v489
      %v521 = vpack.c.bf16 %v492, %v491
      %v522 = vpack.c.bf16 %v494, %v493
      %v523 = vpack.c.bf16 %v496, %v495
      %v524 = vpack.c.bf16 %v498, %v497
      %v525 = vpack.c.bf16 %v500, %v499
      %v526 = vpack.c.bf16 %v502, %v501
      %v527 = vpack.c.bf16 %v504, %v503
      %v528 = vpack.c.bf16 %v506, %v505
      %v529 = vpack.c.bf16 %v508, %v507
      %v530 = vpack.c.bf16 %v510, %v509
      %v531 = vpack.c.bf16 %v512, %v511
      %v532 = vpack.c.bf16 %v514, %v513
      %v533 = vpack.c.bf16 %v516, %v515
      %v534 = vpack.c.bf16 %v518, %v517
      %v535 = vld [vmem:[%s262 + $0x2] sm:$0xff]
      %v536 = vld [vmem:[%s262 + $0xa] sm:$0xff]
      %v537 = vld [vmem:[%s262 + $0x1a] sm:$0xff]
      %v538 = vld [vmem:[%s262 + $0x22] sm:$0xff]
      %v539 = vld [vmem:[%s262 + $0x32] sm:$0xff]
      %v540 = vld [vmem:[%s262 + $0x3a] sm:$0xff]
      %v541 = vld [vmem:[%s262 + $0x4a] sm:$0xff]
      %v542 = vld [vmem:[%s262 + $0x52] sm:$0xff]
      %v543 = vld [vmem:[%s262 + $0x62] sm:$0xff]
      %v544 = vld [vmem:[%s262 + $0x6a] sm:$0xff]
      %v545 = vld [vmem:[%s262 + $0x7a] sm:$0xff]
      %v546 = vld [vmem:[%s262 + $0x82] sm:$0xff]
      %v547 = vld [vmem:[%s262 + $0x92] sm:$0xff]
      %v548 = vld [vmem:[%s262 + $0x9a] sm:$0xff]
      %v549 = vld [vmem:[%s262 + $0xaa] sm:$0xff]
      %v550 = vld [vmem:[%s262 + $0xb2] sm:$0xff]
      %v551 = vld [vmem:[%s262 + $0xc2] sm:$0xff]
      %v552 = vld [vmem:[%s262 + $0xca] sm:$0xff]
      %v553 = vld [vmem:[%s262 + $0xda] sm:$0xff]
      %v554 = vld [vmem:[%s262 + $0xe2] sm:$0xff]
      %v555 = vld [vmem:[%s262 + $0xf2] sm:$0xff]
      %v556 = vld [vmem:[%s262 + $0xfa] sm:$0xff]
      %v557 = vld [vmem:[%s262 + $0x10a] sm:$0xff]
      %v558 = vld [vmem:[%s262 + $0x112] sm:$0xff]
      %v559 = vld [vmem:[%s262 + $0x122] sm:$0xff]
      %v560 = vld [vmem:[%s262 + $0x12a] sm:$0xff]
      %v561 = vld [vmem:[%s262 + $0x13a] sm:$0xff]
      %v562 = vld [vmem:[%s262 + $0x142] sm:$0xff]
      %v563 = vld [vmem:[%s262 + $0x152] sm:$0xff]
      %v564 = vld [vmem:[%s262 + $0x15a] sm:$0xff]
      %v565 = vld [vmem:[%s262 + $0x16a] sm:$0xff]
      %v566 = vld [vmem:[%s262 + $0x172] sm:$0xff]
      %v567 = vpack.c.bf16 %v536, %v535
      %v568 = vpack.c.bf16 %v538, %v537
      %v569 = vpack.c.bf16 %v540, %v539
      %v570 = vpack.c.bf16 %v542, %v541
      %v571 = vpack.c.bf16 %v544, %v543
      %v572 = vpack.c.bf16 %v546, %v545
      %v573 = vpack.c.bf16 %v548, %v547
      %v574 = vpack.c.bf16 %v550, %v549
      %v575 = vpack.c.bf16 %v552, %v551
      %v576 = vpack.c.bf16 %v554, %v553
      %v577 = vpack.c.bf16 %v556, %v555
      %v578 = vpack.c.bf16 %v558, %v557
      %v579 = vpack.c.bf16 %v560, %v559
      %v580 = vpack.c.bf16 %v562, %v561
      %v581 = vpack.c.bf16 %v564, %v563
      %v582 = vpack.c.bf16 %v566, %v565
      %s583 = scalar_lea.vmem [#allocation2], 48
      %v584 = vld [vmem:[%s583] sm:$0xff]
      %v585 = vld [vmem:[%s583 + $0x8] sm:$0xff]
      %v586 = vld [vmem:[%s583 + $0x18] sm:$0xff]
      %v587 = vld [vmem:[%s583 + $0x20] sm:$0xff]
      %v588 = vld [vmem:[%s583 + $0x30] sm:$0xff]
      %v589 = vld [vmem:[%s583 + $0x38] sm:$0xff]
      %v590 = vld [vmem:[%s583 + $0x48] sm:$0xff]
      %v591 = vld [vmem:[%s583 + $0x50] sm:$0xff]
      %v592 = vld [vmem:[%s583 + $0x60] sm:$0xff]
      %v593 = vld [vmem:[%s583 + $0x68] sm:$0xff]
      %v594 = vld [vmem:[%s583 + $0x78] sm:$0xff]
      %v595 = vld [vmem:[%s583 + $0x80] sm:$0xff]
      %v596 = vld [vmem:[%s583 + $0x90] sm:$0xff]
      %v597 = vld [vmem:[%s583 + $0x98] sm:$0xff]
      %v598 = vld [vmem:[%s583 + $0xa8] sm:$0xff]
      %v599 = vld [vmem:[%s583 + $0xb0] sm:$0xff]
      %v600 = vld [vmem:[%s583 + $0xc0] sm:$0xff]
      %v601 = vld [vmem:[%s583 + $0xc8] sm:$0xff]
      %v602 = vld [vmem:[%s583 + $0xd8] sm:$0xff]
      %v603 = vld [vmem:[%s583 + $0xe0] sm:$0xff]
      %v604 = vld [vmem:[%s583 + $0xf0] sm:$0xff]
      %v605 = vld [vmem:[%s583 + $0xf8] sm:$0xff]
      %v606 = vld [vmem:[%s583 + $0x108] sm:$0xff]
      %v607 = vld [vmem:[%s583 + $0x110] sm:$0xff]
      %v608 = vld [vmem:[%s583 + $0x120] sm:$0xff]
      %v609 = vld [vmem:[%s583 + $0x128] sm:$0xff]
      %v610 = vld [vmem:[%s583 + $0x138] sm:$0xff]
      %v611 = vld [vmem:[%s583 + $0x140] sm:$0xff]
      %v612 = vld [vmem:[%s583 + $0x150] sm:$0xff]
      %v613 = vld [vmem:[%s583 + $0x158] sm:$0xff]
      %v614 = vld [vmem:[%s583 + $0x168] sm:$0xff]
      %v615 = vld [vmem:[%s583 + $0x170] sm:$0xff]
      %v616 = vpack.c.bf16 %v585, %v584
      %v617 = vpack.c.bf16 %v587, %v586
      %v618 = vpack.c.bf16 %v589, %v588
      %v619 = vpack.c.bf16 %v591, %v590
      %v620 = vpack.c.bf16 %v593, %v592
      %v621 = vpack.c.bf16 %v595, %v594
      %v622 = vpack.c.bf16 %v597, %v596
      %v623 = vpack.c.bf16 %v599, %v598
      %v624 = vpack.c.bf16 %v601, %v600
      %v625 = vpack.c.bf16 %v603, %v602
      %v626 = vpack.c.bf16 %v605, %v604
      %v627 = vpack.c.bf16 %v607, %v606
      %v628 = vpack.c.bf16 %v609, %v608
      %v629 = vpack.c.bf16 %v611, %v610
      %v630 = vpack.c.bf16 %v613, %v612
      %v631 = vpack.c.bf16 %v615, %v614
      %v632 = vld [vmem:[%s583 + $0x1] sm:$0xff]
      %v633 = vld [vmem:[%s583 + $0x9] sm:$0xff]
      %v634 = vld [vmem:[%s583 + $0x19] sm:$0xff]
      %v635 = vld [vmem:[%s583 + $0x21] sm:$0xff]
      %v636 = vld [vmem:[%s583 + $0x31] sm:$0xff]
      %v637 = vld [vmem:[%s583 + $0x39] sm:$0xff]
      %v638 = vld [vmem:[%s583 + $0x49] sm:$0xff]
      %v639 = vld [vmem:[%s583 + $0x51] sm:$0xff]
      %v640 = vld [vmem:[%s583 + $0x61] sm:$0xff]
      %v641 = vld [vmem:[%s583 + $0x69] sm:$0xff]
      %v642 = vld [vmem:[%s583 + $0x79] sm:$0xff]
      %v643 = vld [vmem:[%s583 + $0x81] sm:$0xff]
      %v644 = vld [vmem:[%s583 + $0x91] sm:$0xff]
      %v645 = vld [vmem:[%s583 + $0x99] sm:$0xff]
      %v646 = vld [vmem:[%s583 + $0xa9] sm:$0xff]
      %v647 = vld [vmem:[%s583 + $0xb1] sm:$0xff]
      %v648 = vld [vmem:[%s583 + $0xc1] sm:$0xff]
      %v649 = vld [vmem:[%s583 + $0xc9] sm:$0xff]
      %v650 = vld [vmem:[%s583 + $0xd9] sm:$0xff]
      %v651 = vld [vmem:[%s583 + $0xe1] sm:$0xff]
      %v652 = vld [vmem:[%s583 + $0xf1] sm:$0xff]
      %v653 = vld [vmem:[%s583 + $0xf9] sm:$0xff]
      %v654 = vld [vmem:[%s583 + $0x109] sm:$0xff]
      %v655 = vld [vmem:[%s583 + $0x111] sm:$0xff]
      %v656 = vld [vmem:[%s583 + $0x121] sm:$0xff]
      %v657 = vld [vmem:[%s583 + $0x129] sm:$0xff]
      %v658 = vld [vmem:[%s583 + $0x139] sm:$0xff]
      %v659 = vld [vmem:[%s583 + $0x141] sm:$0xff]
      %v660 = vld [vmem:[%s583 + $0x151] sm:$0xff]
      %v661 = vld [vmem:[%s583 + $0x159] sm:$0xff]
      %v662 = vld [vmem:[%s583 + $0x169] sm:$0xff]
      %v663 = vld [vmem:[%s583 + $0x171] sm:$0xff]
      %v664 = vpack.c.bf16 %v633, %v632
      %v665 = vpack.c.bf16 %v635, %v634
      %v666 = vpack.c.bf16 %v637, %v636
      %v667 = vpack.c.bf16 %v639, %v638
      %v668 = vpack.c.bf16 %v641, %v640
      %v669 = vpack.c.bf16 %v643, %v642
      %v670 = vpack.c.bf16 %v645, %v644
      %v671 = vpack.c.bf16 %v647, %v646
      %v672 = vpack.c.bf16 %v649, %v648
      %v673 = vpack.c.bf16 %v651, %v650
      %v674 = vpack.c.bf16 %v653, %v652
      %v675 = vpack.c.bf16 %v655, %v654
      %v676 = vpack.c.bf16 %v657, %v656
      %v677 = vpack.c.bf16 %v659, %v658
      %v678 = vpack.c.bf16 %v661, %v660
      %v679 = vpack.c.bf16 %v663, %v662
      %v680 = vld [vmem:[%s583 + $0x2] sm:$0xff]
      %v681 = vld [vmem:[%s583 + $0xa] sm:$0xff]
      %v682 = vld [vmem:[%s583 + $0x1a] sm:$0xff]
      %v683 = vld [vmem:[%s583 + $0x22] sm:$0xff]
      %v684 = vld [vmem:[%s583 + $0x32] sm:$0xff]
      %v685 = vld [vmem:[%s583 + $0x3a] sm:$0xff]
      %v686 = vld [vmem:[%s583 + $0x4a] sm:$0xff]
      %v687 = vld [vmem:[%s583 + $0x52] sm:$0xff]
      %v688 = vld [vmem:[%s583 + $0x62] sm:$0xff]
      %v689 = vld [vmem:[%s583 + $0x6a] sm:$0xff]
      %v690 = vld [vmem:[%s583 + $0x7a] sm:$0xff]
      %v691 = vld [vmem:[%s583 + $0x82] sm:$0xff]
      %v692 = vld [vmem:[%s583 + $0x92] sm:$0xff]
      %v693 = vld [vmem:[%s583 + $0x9a] sm:$0xff]
      %v694 = vld [vmem:[%s583 + $0xaa] sm:$0xff]
      %v695 = vld [vmem:[%s583 + $0xb2] sm:$0xff]
      %v696 = vld [vmem:[%s583 + $0xc2] sm:$0xff]
      %v697 = vld [vmem:[%s583 + $0xca] sm:$0xff]
      %v698 = vld [vmem:[%s583 + $0xda] sm:$0xff]
      %v699 = vld [vmem:[%s583 + $0xe2] sm:$0xff]
      %v700 = vld [vmem:[%s583 + $0xf2] sm:$0xff]
      %v701 = vld [vmem:[%s583 + $0xfa] sm:$0xff]
      %v702 = vld [vmem:[%s583 + $0x10a] sm:$0xff]
      %v703 = vld [vmem:[%s583 + $0x112] sm:$0xff]
      %v704 = vld [vmem:[%s583 + $0x122] sm:$0xff]
      %v705 = vld [vmem:[%s583 + $0x12a] sm:$0xff]
      %v706 = vld [vmem:[%s583 + $0x13a] sm:$0xff]
      %v707 = vld [vmem:[%s583 + $0x142] sm:$0xff]
      %v708 = vld [vmem:[%s583 + $0x152] sm:$0xff]
      %v709 = vld [vmem:[%s583 + $0x15a] sm:$0xff]
      %v710 = vld [vmem:[%s583 + $0x16a] sm:$0xff]
      %v711 = vld [vmem:[%s583 + $0x172] sm:$0xff]
      %v712 = vpack.c.bf16 %v681, %v680
      %v713 = vpack.c.bf16 %v683, %v682
      %v714 = vpack.c.bf16 %v685, %v684
      %v715 = vpack.c.bf16 %v687, %v686
      %v716 = vpack.c.bf16 %v689, %v688
      %v717 = vpack.c.bf16 %v691, %v690
      %v718 = vpack.c.bf16 %v693, %v692
      %v719 = vpack.c.bf16 %v695, %v694
      %v720 = vpack.c.bf16 %v697, %v696
      %v721 = vpack.c.bf16 %v699, %v698
      %v722 = vpack.c.bf16 %v701, %v700
      %v723 = vpack.c.bf16 %v703, %v702
      %v724 = vpack.c.bf16 %v705, %v704
      %v725 = vpack.c.bf16 %v707, %v706
      %v726 = vpack.c.bf16 %v709, %v708
      %v727 = vpack.c.bf16 %v711, %v710
      %v728 = vld [vmem:[%s1] sm:$0xf]
      %v729 = vld [vmem:[%s1 + $0x4] sm:$0xf]
      %v730 = vld [vmem:[%s1 + $0x8] sm:$0xf]
      %v731 = vld [vmem:[%s1 + $0xc] sm:$0xf]
      %v732 = vld [vmem:[%s1 + $0x10] sm:$0xf]
      %v733 = vld [vmem:[%s1 + $0x14] sm:$0xf]
      %v734 = vld [vmem:[%s1 + $0x18] sm:$0xf]
      %v735 = vld [vmem:[%s1 + $0x1c] sm:$0xf]
      %v736 = vld [vmem:[%s1 + $0x20] sm:$0xf]
      %v737 = vld [vmem:[%s1 + $0x24] sm:$0xf]
      %v738 = vld [vmem:[%s1 + $0x28] sm:$0xf]
      %v739 = vld [vmem:[%s1 + $0x2c] sm:$0xf]
      %v740 = vld [vmem:[%s1 + $0x30] sm:$0xf]
      %v741 = vld [vmem:[%s1 + $0x34] sm:$0xf]
      %v742 = vld [vmem:[%s1 + $0x38] sm:$0xf]
      %v743 = vld [vmem:[%s1 + $0x3c] sm:$0xf]
      %v744 = vld [vmem:[%s1 + $0x40] sm:$0xf]
      %v745 = vld [vmem:[%s1 + $0x44] sm:$0xf]
      %v746 = vld [vmem:[%s1 + $0x48] sm:$0xf]
      %v747 = vld [vmem:[%s1 + $0x4c] sm:$0xf]
      %v748 = vld [vmem:[%s1 + $0x50] sm:$0xf]
      %v749 = vld [vmem:[%s1 + $0x54] sm:$0xf]
      %v750 = vld [vmem:[%s1 + $0x58] sm:$0xf]
      %v751 = vld [vmem:[%s1 + $0x5c] sm:$0xf]
      %v752 = vld [vmem:[%s1 + $0x60] sm:$0xf]
      %v753 = vld [vmem:[%s1 + $0x64] sm:$0xf]
      %v754 = vld [vmem:[%s1 + $0x68] sm:$0xf]
      %v755 = vld [vmem:[%s1 + $0x6c] sm:$0xf]
      %v756 = vld [vmem:[%s1 + $0x70] sm:$0xf]
      %v757 = vld [vmem:[%s1 + $0x74] sm:$0xf]
      %v758 = vld [vmem:[%s1 + $0x78] sm:$0xf]
      %v759 = vld [vmem:[%s1 + $0x7c] sm:$0xf]
      %v760 = vld [vmem:[%s1 + $0x80] sm:$0xf]
      %v761 = vld [vmem:[%s1 + $0x84] sm:$0xf]
      %v762 = vld [vmem:[%s1 + $0x88] sm:$0xf]
      %v763 = vld [vmem:[%s1 + $0x8c] sm:$0xf]
      %v764 = vld [vmem:[%s1 + $0x90] sm:$0xf]
      %v765 = vld [vmem:[%s1 + $0x94] sm:$0xf]
      %v766 = vld [vmem:[%s1 + $0x98] sm:$0xf]
      %v767 = vld [vmem:[%s1 + $0x9c] sm:$0xf]
      %v768 = vld [vmem:[%s1 + $0xa0] sm:$0xf]
      %v769 = vld [vmem:[%s1 + $0xa4] sm:$0xf]
      %v770 = vld [vmem:[%s1 + $0xa8] sm:$0xf]
      %v771 = vld [vmem:[%s1 + $0xac] sm:$0xf]
      %v772 = vld [vmem:[%s1 + $0xb0] sm:$0xf]
      %v773 = vld [vmem:[%s1 + $0xb4] sm:$0xf]
      %v774 = vld [vmem:[%s1 + $0xb8] sm:$0xf]
      %v775 = vld [vmem:[%s1 + $0xbc] sm:$0xf]
      %v776 = vld [vmem:[%s1 + $0xc0] sm:$0xf]
      %v777 = vld [vmem:[%s1 + $0xc4] sm:$0xf]
      %v778 = vld [vmem:[%s1 + $0xc8] sm:$0xf]
      %v779 = vld [vmem:[%s1 + $0xcc] sm:$0xf]
      %v780 = vld [vmem:[%s1 + $0xd0] sm:$0xf]
      %v781 = vld [vmem:[%s1 + $0xd4] sm:$0xf]
      %v782 = vld [vmem:[%s1 + $0xd8] sm:$0xf]
      %v783 = vld [vmem:[%s1 + $0xdc] sm:$0xf]
      %v784 = vld [vmem:[%s1 + $0xe0] sm:$0xf]
      %v785 = vld [vmem:[%s1 + $0xe4] sm:$0xf]
      %v786 = vld [vmem:[%s1 + $0xe8] sm:$0xf]
      %v787 = vld [vmem:[%s1 + $0xec] sm:$0xf]
      %v788 = vld [vmem:[%s1 + $0xf0] sm:$0xf]
      %v789 = vld [vmem:[%s1 + $0xf4] sm:$0xf]
      %v790 = vld [vmem:[%s1 + $0xf8] sm:$0xf]
      %v791 = vld [vmem:[%s1 + $0xfc] sm:$0xf]
      %v792 = vld [vmem:[%s1 + $0x100] sm:$0xf]
      %v793 = vld [vmem:[%s1 + $0x104] sm:$0xf]
      %v794 = vld [vmem:[%s1 + $0x108] sm:$0xf]
      %v795 = vld [vmem:[%s1 + $0x10c] sm:$0xf]
      %v796 = vld [vmem:[%s1 + $0x110] sm:$0xf]
      %v797 = vld [vmem:[%s1 + $0x114] sm:$0xf]
      %v798 = vld [vmem:[%s1 + $0x118] sm:$0xf]
      %v799 = vld [vmem:[%s1 + $0x11c] sm:$0xf]
      %v800 = vld [vmem:[%s1 + $0x120] sm:$0xf]
      %v801 = vld [vmem:[%s1 + $0x124] sm:$0xf]
      %v802 = vld [vmem:[%s1 + $0x128] sm:$0xf]
      %v803 = vld [vmem:[%s1 + $0x12c] sm:$0xf]
      %v804 = vld [vmem:[%s1 + $0x130] sm:$0xf]
      %v805 = vld [vmem:[%s1 + $0x134] sm:$0xf]
      %v806 = vld [vmem:[%s1 + $0x138] sm:$0xf]
      %v807 = vld [vmem:[%s1 + $0x13c] sm:$0xf]
      %v808 = vld [vmem:[%s1 + $0x140] sm:$0xf]
      %v809 = vld [vmem:[%s1 + $0x144] sm:$0xf]
      %v810 = vld [vmem:[%s1 + $0x148] sm:$0xf]
      %v811 = vld [vmem:[%s1 + $0x14c] sm:$0xf]
      %v812 = vld [vmem:[%s1 + $0x150] sm:$0xf]
      %v813 = vld [vmem:[%s1 + $0x154] sm:$0xf]
      %v814 = vld [vmem:[%s1 + $0x158] sm:$0xf]
      %v815 = vld [vmem:[%s1 + $0x15c] sm:$0xf]
      %v816 = vld [vmem:[%s1 + $0x160] sm:$0xf]
      %v817 = vld [vmem:[%s1 + $0x164] sm:$0xf]
      %v818 = vld [vmem:[%s1 + $0x168] sm:$0xf]
      %v819 = vld [vmem:[%s1 + $0x16c] sm:$0xf]
      %v820 = vld [vmem:[%s1 + $0x170] sm:$0xf]
      %v821 = vld [vmem:[%s1 + $0x174] sm:$0xf]
      %v822 = vld [vmem:[%s1 + $0x178] sm:$0xf]
      %v823 = vld [vmem:[%s1 + $0x17c] sm:$0xf]
      %v824 = vld [vmem:[%s1 + $0x180] sm:$0xf]
      %v825 = vld [vmem:[%s1 + $0x184] sm:$0xf]
      %v826 = vld [vmem:[%s1 + $0x188] sm:$0xf]
      %v827 = vld [vmem:[%s1 + $0x18c] sm:$0xf]
      %v828 = vld [vmem:[%s1 + $0x190] sm:$0xf]
      %v829 = vld [vmem:[%s1 + $0x194] sm:$0xf]
      %v830 = vld [vmem:[%s1 + $0x198] sm:$0xf]
      %v831 = vld [vmem:[%s1 + $0x19c] sm:$0xf]
      %v832 = vld [vmem:[%s1 + $0x1a0] sm:$0xf]
      %v833 = vld [vmem:[%s1 + $0x1a4] sm:$0xf]
      %v834 = vld [vmem:[%s1 + $0x1a8] sm:$0xf]
      %v835 = vld [vmem:[%s1 + $0x1ac] sm:$0xf]
      %v836 = vld [vmem:[%s1 + $0x1b0] sm:$0xf]
      %v837 = vld [vmem:[%s1 + $0x1b4] sm:$0xf]
      %v838 = vld [vmem:[%s1 + $0x1b8] sm:$0xf]
      %v839 = vld [vmem:[%s1 + $0x1bc] sm:$0xf]
      %v840 = vld [vmem:[%s1 + $0x1c0] sm:$0xf]
      %v841 = vld [vmem:[%s1 + $0x1c4] sm:$0xf]
      %v842 = vld [vmem:[%s1 + $0x1c8] sm:$0xf]
      %v843 = vld [vmem:[%s1 + $0x1cc] sm:$0xf]
      %v844 = vld [vmem:[%s1 + $0x1d0] sm:$0xf]
      %v845 = vld [vmem:[%s1 + $0x1d4] sm:$0xf]
      %v846 = vld [vmem:[%s1 + $0x1d8] sm:$0xf]
      %v847 = vld [vmem:[%s1 + $0x1dc] sm:$0xf]
      %v848 = vld [vmem:[%s1 + $0x1e0] sm:$0xf]
      %v849 = vld [vmem:[%s1 + $0x1e4] sm:$0xf]
      %v850 = vld [vmem:[%s1 + $0x1e8] sm:$0xf]
      %v851 = vld [vmem:[%s1 + $0x1ec] sm:$0xf]
      %v852 = vld [vmem:[%s1 + $0x1f0] sm:$0xf]
      %v853 = vld [vmem:[%s1 + $0x1f4] sm:$0xf]
      %v854 = vld [vmem:[%s1 + $0x1f8] sm:$0xf]
      %v855 = vld [vmem:[%s1 + $0x1fc] sm:$0xf]
      %v856 = vld [vmem:[%s1 + $0x200] sm:$0xf]
      %v857 = vld [vmem:[%s1 + $0x204] sm:$0xf]
      %v858 = vld [vmem:[%s1 + $0x208] sm:$0xf]
      %v859 = vld [vmem:[%s1 + $0x20c] sm:$0xf]
      %v860 = vld [vmem:[%s1 + $0x210] sm:$0xf]
      %v861 = vld [vmem:[%s1 + $0x214] sm:$0xf]
      %v862 = vld [vmem:[%s1 + $0x218] sm:$0xf]
      %v863 = vld [vmem:[%s1 + $0x21c] sm:$0xf]
      %v864 = vld [vmem:[%s1 + $0x220] sm:$0xf]
      %v865 = vld [vmem:[%s1 + $0x224] sm:$0xf]
      %v866 = vld [vmem:[%s1 + $0x228] sm:$0xf]
      %v867 = vld [vmem:[%s1 + $0x22c] sm:$0xf]
      %v868 = vld [vmem:[%s1 + $0x230] sm:$0xf]
      %v869 = vld [vmem:[%s1 + $0x234] sm:$0xf]
      %v870 = vld [vmem:[%s1 + $0x238] sm:$0xf]
      %v871 = vld [vmem:[%s1 + $0x23c] sm:$0xf]
      %v1016 = vunpack.c.l.b16 %v728
      %v1017 = vunpack.c.l.b16 %v729
      %v1018 = vunpack.c.l.b16 %v730
      %v1019 = vunpack.c.l.b16 %v731
      %v1020 = vunpack.c.l.b16 %v732
      %v1021 = vunpack.c.l.b16 %v733
      %v1022 = vunpack.c.l.b16 %v734
      %v1023 = vunpack.c.l.b16 %v735
      %v1024 = vunpack.c.l.b16 %v736
      %v1025 = vunpack.c.l.b16 %v737
      %v1026 = vunpack.c.l.b16 %v738
      %v1027 = vunpack.c.l.b16 %v739
      %v1028 = vunpack.c.l.b16 %v740
      %v1029 = vunpack.c.l.b16 %v741
      %v1030 = vunpack.c.l.b16 %v742
      %v1031 = vunpack.c.l.b16 %v743
      %v1032 = vunpack.c.l.b16 %v744
      %v1033 = vunpack.c.l.b16 %v745
      %v1034 = vunpack.c.l.b16 %v746
      %v1035 = vunpack.c.l.b16 %v747
      %v1036 = vunpack.c.l.b16 %v748
      %v1037 = vunpack.c.l.b16 %v749
      %v1038 = vunpack.c.l.b16 %v750
      %v1039 = vunpack.c.l.b16 %v751
      %v1040 = vunpack.c.l.b16 %v752
      %v1041 = vunpack.c.l.b16 %v753
      %v1042 = vunpack.c.l.b16 %v754
      %v1043 = vunpack.c.l.b16 %v755
      %v1044 = vunpack.c.l.b16 %v756
      %v1045 = vunpack.c.l.b16 %v757
      %v1046 = vunpack.c.l.b16 %v758
      %v1047 = vunpack.c.l.b16 %v759
      %v1048 = vunpack.c.l.b16 %v760
      %v1049 = vunpack.c.l.b16 %v761
      %v1050 = vunpack.c.l.b16 %v762
      %v1051 = vunpack.c.l.b16 %v763
      %v1052 = vunpack.c.l.b16 %v764
      %v1053 = vunpack.c.l.b16 %v765
      %v1054 = vunpack.c.l.b16 %v766
      %v1055 = vunpack.c.l.b16 %v767
      %v1056 = vunpack.c.l.b16 %v768
      %v1057 = vunpack.c.l.b16 %v769
      %v1058 = vunpack.c.l.b16 %v770
      %v1059 = vunpack.c.l.b16 %v771
      %v1060 = vunpack.c.l.b16 %v772
      %v1061 = vunpack.c.l.b16 %v773
      %v1062 = vunpack.c.l.b16 %v774
      %v1063 = vunpack.c.l.b16 %v775
      %v1064 = vunpack.c.l.b16 %v776
      %v1065 = vunpack.c.l.b16 %v777
      %v1066 = vunpack.c.l.b16 %v778
      %v1067 = vunpack.c.l.b16 %v779
      %v1068 = vunpack.c.l.b16 %v780
      %v1069 = vunpack.c.l.b16 %v781
      %v1070 = vunpack.c.l.b16 %v782
      %v1071 = vunpack.c.l.b16 %v783
      %v1072 = vunpack.c.l.b16 %v784
      %v1073 = vunpack.c.l.b16 %v785
      %v1074 = vunpack.c.l.b16 %v786
      %v1075 = vunpack.c.l.b16 %v787
      %v1076 = vunpack.c.l.b16 %v788
      %v1077 = vunpack.c.l.b16 %v789
      %v1078 = vunpack.c.l.b16 %v790
      %v1079 = vunpack.c.l.b16 %v791
      %v1080 = vunpack.c.l.b16 %v792
      %v1081 = vunpack.c.l.b16 %v793
      %v1082 = vunpack.c.l.b16 %v794
      %v1083 = vunpack.c.l.b16 %v795
      %v1084 = vunpack.c.l.b16 %v796
      %v1085 = vunpack.c.l.b16 %v797
      %v1086 = vunpack.c.l.b16 %v798
      %v1087 = vunpack.c.l.b16 %v799
      %v1088 = vunpack.c.l.b16 %v800
      %v1089 = vunpack.c.l.b16 %v801
      %v1090 = vunpack.c.l.b16 %v802
      %v1091 = vunpack.c.l.b16 %v803
      %v1092 = vunpack.c.l.b16 %v804
      %v1093 = vunpack.c.l.b16 %v805
      %v1094 = vunpack.c.l.b16 %v806
      %v1095 = vunpack.c.l.b16 %v807
      %v1096 = vunpack.c.l.b16 %v808
      %v1097 = vunpack.c.l.b16 %v809
      %v1098 = vunpack.c.l.b16 %v810
      %v1099 = vunpack.c.l.b16 %v811
      %v1100 = vunpack.c.l.b16 %v812
      %v1101 = vunpack.c.l.b16 %v813
      %v1102 = vunpack.c.l.b16 %v814
      %v1103 = vunpack.c.l.b16 %v815
      %v1104 = vunpack.c.l.b16 %v816
      %v1105 = vunpack.c.l.b16 %v817
      %v1106 = vunpack.c.l.b16 %v818
      %v1107 = vunpack.c.l.b16 %v819
      %v1108 = vunpack.c.l.b16 %v820
      %v1109 = vunpack.c.l.b16 %v821
      %v1110 = vunpack.c.l.b16 %v822
      %v1111 = vunpack.c.l.b16 %v823
      %v1112 = vunpack.c.l.b16 %v824
      %v1113 = vunpack.c.l.b16 %v825
      %v1114 = vunpack.c.l.b16 %v826
      %v1115 = vunpack.c.l.b16 %v827
      %v1116 = vunpack.c.l.b16 %v828
      %v1117 = vunpack.c.l.b16 %v829
      %v1118 = vunpack.c.l.b16 %v830
      %v1119 = vunpack.c.l.b16 %v831
      %v1120 = vunpack.c.l.b16 %v832
      %v1121 = vunpack.c.l.b16 %v833
      %v1122 = vunpack.c.l.b16 %v834
      %v1123 = vunpack.c.l.b16 %v835
      %v1124 = vunpack.c.l.b16 %v836
      %v1125 = vunpack.c.l.b16 %v837
      %v1126 = vunpack.c.l.b16 %v838
      %v1127 = vunpack.c.l.b16 %v839
      %v1128 = vunpack.c.l.b16 %v840
      %v1129 = vunpack.c.l.b16 %v841
      %v1130 = vunpack.c.l.b16 %v842
      %v1131 = vunpack.c.l.b16 %v843
      %v1132 = vunpack.c.l.b16 %v844
      %v1133 = vunpack.c.l.b16 %v845
      %v1134 = vunpack.c.l.b16 %v846
      %v1135 = vunpack.c.l.b16 %v847
      %v1136 = vunpack.c.l.b16 %v848
      %v1137 = vunpack.c.l.b16 %v849
      %v1138 = vunpack.c.l.b16 %v850
      %v1139 = vunpack.c.l.b16 %v851
      %v1140 = vunpack.c.l.b16 %v852
      %v1141 = vunpack.c.l.b16 %v853
      %v1142 = vunpack.c.l.b16 %v854
      %v1143 = vunpack.c.l.b16 %v855
      %v1144 = vunpack.c.l.b16 %v856
      %v1145 = vunpack.c.l.b16 %v857
      %v1146 = vunpack.c.l.b16 %v858
      %v1147 = vunpack.c.l.b16 %v859
      %v1148 = vunpack.c.l.b16 %v860
      %v1149 = vunpack.c.l.b16 %v861
      %v1150 = vunpack.c.l.b16 %v862
      %v1151 = vunpack.c.l.b16 %v863
      %v1152 = vunpack.c.l.b16 %v864
      %v1153 = vunpack.c.l.b16 %v865
      %v1154 = vunpack.c.l.b16 %v866
      %v1155 = vunpack.c.l.b16 %v867
      %v1156 = vunpack.c.l.b16 %v868
      %v1157 = vunpack.c.l.b16 %v869
      %v1158 = vunpack.c.l.b16 %v870
      %v1159 = vunpack.c.l.b16 %v871
      %v1160 = vpack.c.b16 %v1017, %v1016
      %v1161 = vpack.c.b16 %v1019, %v1018
      %v1162 = vpack.c.b16 %v1021, %v1020
      %v1163 = vpack.c.b16 %v1023, %v1022
      %v1164 = vpack.c.b16 %v1025, %v1024
      %v1165 = vpack.c.b16 %v1027, %v1026
      %v1166 = vpack.c.b16 %v1029, %v1028
      %v1167 = vpack.c.b16 %v1031, %v1030
      %v1168 = vpack.c.b16 %v1033, %v1032
      %v1169 = vpack.c.b16 %v1035, %v1034
      %v1170 = vpack.c.b16 %v1037, %v1036
      %v1171 = vpack.c.b16 %v1039, %v1038
      %v1172 = vpack.c.b16 %v1041, %v1040
      %v1173 = vpack.c.b16 %v1043, %v1042
      %v1174 = vpack.c.b16 %v1045, %v1044
      %v1175 = vpack.c.b16 %v1047, %v1046
      %v1176 = vpack.c.b16 %v1049, %v1048
      %v1177 = vpack.c.b16 %v1051, %v1050
      %v1178 = vpack.c.b16 %v1053, %v1052
      %v1179 = vpack.c.b16 %v1055, %v1054
      %v1180 = vpack.c.b16 %v1057, %v1056
      %v1181 = vpack.c.b16 %v1059, %v1058
      %v1182 = vpack.c.b16 %v1061, %v1060
      %v1183 = vpack.c.b16 %v1063, %v1062
      %v1184 = vpack.c.b16 %v1065, %v1064
      %v1185 = vpack.c.b16 %v1067, %v1066
      %v1186 = vpack.c.b16 %v1069, %v1068
      %v1187 = vpack.c.b16 %v1071, %v1070
      %v1188 = vpack.c.b16 %v1073, %v1072
      %v1189 = vpack.c.b16 %v1075, %v1074
      %v1190 = vpack.c.b16 %v1077, %v1076
      %v1191 = vpack.c.b16 %v1079, %v1078
      %v1192 = vpack.c.b16 %v1081, %v1080
      %v1193 = vpack.c.b16 %v1083, %v1082
      %v1194 = vpack.c.b16 %v1085, %v1084
      %v1195 = vpack.c.b16 %v1087, %v1086
      %v1196 = vpack.c.b16 %v1089, %v1088
      %v1197 = vpack.c.b16 %v1091, %v1090
      %v1198 = vpack.c.b16 %v1093, %v1092
      %v1199 = vpack.c.b16 %v1095, %v1094
      %v1200 = vpack.c.b16 %v1097, %v1096
      %v1201 = vpack.c.b16 %v1099, %v1098
      %v1202 = vpack.c.b16 %v1101, %v1100
      %v1203 = vpack.c.b16 %v1103, %v1102
      %v1204 = vpack.c.b16 %v1105, %v1104
      %v1205 = vpack.c.b16 %v1107, %v1106
      %v1206 = vpack.c.b16 %v1109, %v1108
      %v1207 = vpack.c.b16 %v1111, %v1110
      %v1208 = vpack.c.b16 %v1113, %v1112
      %v1209 = vpack.c.b16 %v1115, %v1114
      %v1210 = vpack.c.b16 %v1117, %v1116
      %v1211 = vpack.c.b16 %v1119, %v1118
      %v1212 = vpack.c.b16 %v1121, %v1120
      %v1213 = vpack.c.b16 %v1123, %v1122
      %v1214 = vpack.c.b16 %v1125, %v1124
      %v1215 = vpack.c.b16 %v1127, %v1126
      %v1216 = vpack.c.b16 %v1129, %v1128
      %v1217 = vpack.c.b16 %v1131, %v1130
      %v1218 = vpack.c.b16 %v1133, %v1132
      %v1219 = vpack.c.b16 %v1135, %v1134
      %v1220 = vpack.c.b16 %v1137, %v1136
      %v1221 = vpack.c.b16 %v1139, %v1138
      %v1222 = vpack.c.b16 %v1141, %v1140
      %v1223 = vpack.c.b16 %v1143, %v1142
      %v1224 = vpack.c.b16 %v1145, %v1144
      %v1225 = vpack.c.b16 %v1147, %v1146
      %v1226 = vpack.c.b16 %v1149, %v1148
      %v1227 = vpack.c.b16 %v1151, %v1150
      %v1228 = vpack.c.b16 %v1153, %v1152
      %v1229 = vpack.c.b16 %v1155, %v1154
      %v1230 = vpack.c.b16 %v1157, %v1156
      %v1231 = vpack.c.b16 %v1159, %v1158
      %1304 = vmatprep.subr.bf16.mxu0 0
      %1305 = vmatpush1.bf16.msra.mxu0 %v1167
      %1306 = vmatprep.subr.bf16.mxu0 0
      %1307 = vmatpush1.bf16.msra.mxu0 %v1166
      %1308 = vmatprep.subr.bf16.mxu0 0
      %1309 = vmatpush1.bf16.msra.mxu0 %v1165
      %1310 = vmatprep.subr.bf16.mxu0 0
      %1311 = vmatpush1.bf16.msra.mxu0 %v1164
      %1312 = vmatprep.subr.bf16.mxu0 0
      %1313 = vmatpush1.bf16.msra.mxu0 %v1163
      %1314 = vmatprep.subr.bf16.mxu0 0
      %1315 = vmatpush1.bf16.msra.mxu0 %v1162
      %1316 = vmatprep.subr.bf16.mxu0 0
      %1317 = vmatpush1.bf16.msra.mxu0 %v1161
      %1318 = vmatprep.subr.bf16.mxu0 0
      %1319 = vmatpush1.bf16.msra.mxu0 %v1160
      %1320 = vmatprep.subr.bf16.mxu0 0
      %1321 = vmatpush2.bf16.msra.mxu0 %v1175
      %1322 = vmatprep.subr.bf16.mxu0 0
      %1323 = vmatpush2.bf16.msra.mxu0 %v1174
      %1324 = vmatprep.subr.bf16.mxu0 0
      %1325 = vmatpush2.bf16.msra.mxu0 %v1173
      %1326 = vmatprep.subr.bf16.mxu0 0
      %1327 = vmatpush2.bf16.msra.mxu0 %v1172
      %1328 = vmatprep.subr.bf16.mxu0 0
      %1329 = vmatpush2.bf16.msra.mxu0 %v1171
      %1330 = vmatprep.subr.bf16.mxu0 0
      %1331 = vmatpush2.bf16.msra.mxu0 %v1170
      %1332 = vmatprep.subr.bf16.mxu0 0
      %1333 = vmatpush2.bf16.msra.mxu0 %v1169
      %1334 = vmatprep.subr.bf16.mxu0 0
      %1335 = vmatpush2.bf16.msra.mxu0 %v1168
      %1336 = vmatprep.mubr.bf16.mxu0 %v375
      %1337 = vmatmul.mubr.bf16.gmra.mxu0 %v327
      %v1338 = vpop.f32.mrf.mxu0
      %v1339 = vadd.f32 0.0, %v1338
      %v1340 = vpop.f32.mrf.mxu0
      %v1341 = vpop.f32.mrf.mxu0
      %v1342 = vadd.f32 0.0, %v1341
      %v1343 = vpop.f32.mrf.mxu0
      %1344 = vmatprep.mubr.bf16.mxu0 %v376
      %1345 = vmatmul.mubr.bf16.gmra.mxu0 %v328
      %v1346 = vpop.f32.mrf.mxu0
      %v1347 = vadd.f32 0.0, %v1346
      %v1348 = vpop.f32.mrf.mxu0
      %v1349 = vpop.f32.mrf.mxu0
      %v1350 = vadd.f32 0.0, %v1349
      %v1351 = vpop.f32.mrf.mxu0
      %1352 = vmatprep.mubr.bf16.mxu0 %v377
      %1353 = vmatmul.mubr.bf16.gmra.mxu0 %v329
      %v1354 = vpop.f32.mrf.mxu0
      %v1355 = vadd.f32 0.0, %v1354
      %v1356 = vpop.f32.mrf.mxu0
      %v1357 = vpop.f32.mrf.mxu0
      %v1358 = vadd.f32 0.0, %v1357
      %v1359 = vpop.f32.mrf.mxu0
      %1360 = vmatprep.mubr.bf16.mxu0 %v378
      %1361 = vmatmul.mubr.bf16.gmra.mxu0 %v330
      %v1362 = vpop.f32.mrf.mxu0
      %v1363 = vadd.f32 0.0, %v1362
      %v1364 = vpop.f32.mrf.mxu0
      %v1365 = vpop.f32.mrf.mxu0
      %v1366 = vadd.f32 0.0, %v1365
      %v1367 = vpop.f32.mrf.mxu0
      %1368 = vmatprep.mubr.bf16.mxu0 %v379
      %1369 = vmatmul.mubr.bf16.gmra.mxu0 %v331
      %v1370 = vpop.f32.mrf.mxu0
      %v1371 = vadd.f32 0.0, %v1370
      %v1372 = vpop.f32.mrf.mxu0
      %v1373 = vpop.f32.mrf.mxu0
      %v1374 = vadd.f32 0.0, %v1373
      %v1375 = vpop.f32.mrf.mxu0
      %1376 = vmatprep.mubr.bf16.mxu0 %v380
      %1377 = vmatmul.mubr.bf16.gmra.mxu0 %v332
      %v1378 = vpop.f32.mrf.mxu0
      %v1379 = vadd.f32 0.0, %v1378
      %v1380 = vpop.f32.mrf.mxu0
      %v1381 = vpop.f32.mrf.mxu0
      %v1382 = vadd.f32 0.0, %v1381
      %v1383 = vpop.f32.mrf.mxu0
      %1384 = vmatprep.mubr.bf16.mxu0 %v381
      %1385 = vmatmul.mubr.bf16.gmra.mxu0 %v333
      %v1386 = vpop.f32.mrf.mxu0
      %v1387 = vadd.f32 0.0, %v1386
      %v1388 = vpop.f32.mrf.mxu0
      %v1389 = vpop.f32.mrf.mxu0
      %v1390 = vadd.f32 0.0, %v1389
      %v1391 = vpop.f32.mrf.mxu0
      %1392 = vmatprep.mubr.bf16.mxu0 %v382
      %1393 = vmatmul.mubr.bf16.gmra.mxu0 %v334
      %v1394 = vpop.f32.mrf.mxu0
      %v1395 = vadd.f32 0.0, %v1394
      %v1396 = vpop.f32.mrf.mxu0
      %v1397 = vpop.f32.mrf.mxu0
      %v1398 = vadd.f32 0.0, %v1397
      %v1399 = vpop.f32.mrf.mxu0
      %1400 = vmatprep.mubr.bf16.mxu0 %v383
      %1401 = vmatmul.mubr.bf16.gmra.mxu0 %v335
      %v1402 = vpop.f32.mrf.mxu0
      %v1403 = vadd.f32 0.0, %v1402
      %v1404 = vpop.f32.mrf.mxu0
      %v1405 = vpop.f32.mrf.mxu0
      %v1406 = vadd.f32 0.0, %v1405
      %v1407 = vpop.f32.mrf.mxu0
      %1408 = vmatprep.mubr.bf16.mxu0 %v384
      %1409 = vmatmul.mubr.bf16.gmra.mxu0 %v336
      %v1410 = vpop.f32.mrf.mxu0
      %v1411 = vadd.f32 0.0, %v1410
      %v1412 = vpop.f32.mrf.mxu0
      %v1413 = vpop.f32.mrf.mxu0
      %v1414 = vadd.f32 0.0, %v1413
      %v1415 = vpop.f32.mrf.mxu0
      %1416 = vmatprep.mubr.bf16.mxu0 %v385
      %1417 = vmatmul.mubr.bf16.gmra.mxu0 %v337
      %v1418 = vpop.f32.mrf.mxu0
      %v1419 = vadd.f32 0.0, %v1418
      %v1420 = vpop.f32.mrf.mxu0
      %v1421 = vpop.f32.mrf.mxu0
      %v1422 = vadd.f32 0.0, %v1421
      %v1423 = vpop.f32.mrf.mxu0
      %1424 = vmatprep.mubr.bf16.mxu0 %v386
      %1425 = vmatmul.mubr.bf16.gmra.mxu0 %v338
      %v1426 = vpop.f32.mrf.mxu0
      %v1427 = vadd.f32 0.0, %v1426
      %v1428 = vpop.f32.mrf.mxu0
      %v1429 = vpop.f32.mrf.mxu0
      %v1430 = vadd.f32 0.0, %v1429
      %v1431 = vpop.f32.mrf.mxu0
      %1432 = vmatprep.mubr.bf16.mxu0 %v387
      %1433 = vmatmul.mubr.bf16.gmra.mxu0 %v339
      %v1434 = vpop.f32.mrf.mxu0
      %v1435 = vadd.f32 0.0, %v1434
      %v1436 = vpop.f32.mrf.mxu0
      %v1437 = vpop.f32.mrf.mxu0
      %v1438 = vadd.f32 0.0, %v1437
      %v1439 = vpop.f32.mrf.mxu0
      %1440 = vmatprep.mubr.bf16.mxu0 %v388
      %1441 = vmatmul.mubr.bf16.gmra.mxu0 %v340
      %v1442 = vpop.f32.mrf.mxu0
      %v1443 = vadd.f32 0.0, %v1442
      %v1444 = vpop.f32.mrf.mxu0
      %v1445 = vpop.f32.mrf.mxu0
      %v1446 = vadd.f32 0.0, %v1445
      %v1447 = vpop.f32.mrf.mxu0
      %1448 = vmatprep.mubr.bf16.mxu0 %v389
      %1449 = vmatmul.mubr.bf16.gmra.mxu0 %v341
      %v1450 = vpop.f32.mrf.mxu0
      %v1451 = vadd.f32 0.0, %v1450
      %v1452 = vpop.f32.mrf.mxu0
      %v1453 = vpop.f32.mrf.mxu0
      %v1454 = vadd.f32 0.0, %v1453
      %v1455 = vpop.f32.mrf.mxu0
      %1456 = vmatprep.mubr.bf16.mxu0 %v390
      %1457 = vmatmul.mubr.bf16.gmra.mxu0 %v342
      %v1458 = vpop.f32.mrf.mxu0
      %v1459 = vadd.f32 0.0, %v1458
      %v1460 = vpop.f32.mrf.mxu0
      %v1461 = vpop.f32.mrf.mxu0
      %v1462 = vadd.f32 0.0, %v1461
      %v1463 = vpop.f32.mrf.mxu0
      %1464 = vdwg.mxu0
      %1465 = vmatprep.subr.bf16.mxu0 0
      %1466 = vmatpush1.bf16.msra.mxu0 %v1183
      %1467 = vmatprep.subr.bf16.mxu0 0
      %1468 = vmatpush1.bf16.msra.mxu0 %v1182
      %1469 = vmatprep.subr.bf16.mxu0 0
      %1470 = vmatpush1.bf16.msra.mxu0 %v1181
      %1471 = vmatprep.subr.bf16.mxu0 0
      %1472 = vmatpush1.bf16.msra.mxu0 %v1180
      %1473 = vmatprep.subr.bf16.mxu0 0
      %1474 = vmatpush1.bf16.msra.mxu0 %v1179
      %1475 = vmatprep.subr.bf16.mxu0 0
      %1476 = vmatpush1.bf16.msra.mxu0 %v1178
      %1477 = vmatprep.subr.bf16.mxu0 0
      %1478 = vmatpush1.bf16.msra.mxu0 %v1177
      %1479 = vmatprep.subr.bf16.mxu0 0
      %1480 = vmatpush1.bf16.msra.mxu0 %v1176
      %1481 = vmatprep.subr.bf16.mxu0 0
      %1482 = vmatpush2.bf16.msra.mxu0 %v1191
      %1483 = vmatprep.subr.bf16.mxu0 0
      %1484 = vmatpush2.bf16.msra.mxu0 %v1190
      %1485 = vmatprep.subr.bf16.mxu0 0
      %1486 = vmatpush2.bf16.msra.mxu0 %v1189
      %1487 = vmatprep.subr.bf16.mxu0 0
      %1488 = vmatpush2.bf16.msra.mxu0 %v1188
      %1489 = vmatprep.subr.bf16.mxu0 0
      %1490 = vmatpush2.bf16.msra.mxu0 %v1187
      %1491 = vmatprep.subr.bf16.mxu0 0
      %1492 = vmatpush2.bf16.msra.mxu0 %v1186
      %1493 = vmatprep.subr.bf16.mxu0 0
      %1494 = vmatpush2.bf16.msra.mxu0 %v1185
      %1495 = vmatprep.subr.bf16.mxu0 0
      %1496 = vmatpush2.bf16.msra.mxu0 %v1184
      %1497 = vmatprep.mubr.bf16.mxu0 %v471
      %1498 = vmatmul.mubr.bf16.gmra.mxu0 %v423
      %v1499 = vpop.f32.mrf.mxu0
      %v1500 = vadd.f32 %v1339, %v1499
      %v1501 = vpop.f32.mrf.mxu0
      %v1502 = vpop.f32.mrf.mxu0
      %v1503 = vadd.f32 %v1342, %v1502
      %v1504 = vpop.f32.mrf.mxu0
      %1505 = vmatprep.mubr.bf16.mxu0 %v472
      %1506 = vmatmul.mubr.bf16.gmra.mxu0 %v424
      %v1507 = vpop.f32.mrf.mxu0
      %v1508 = vadd.f32 %v1347, %v1507
      %v1509 = vpop.f32.mrf.mxu0
      %v1510 = vpop.f32.mrf.mxu0
      %v1511 = vadd.f32 %v1350, %v1510
      %v1512 = vpop.f32.mrf.mxu0
      %1513 = vmatprep.mubr.bf16.mxu0 %v473
      %1514 = vmatmul.mubr.bf16.gmra.mxu0 %v425
      %v1515 = vpop.f32.mrf.mxu0
      %v1516 = vadd.f32 %v1355, %v1515
      %v1517 = vpop.f32.mrf.mxu0
      %v1518 = vpop.f32.mrf.mxu0
      %v1519 = vadd.f32 %v1358, %v1518
      %v1520 = vpop.f32.mrf.mxu0
      %1521 = vmatprep.mubr.bf16.mxu0 %v474
      %1522 = vmatmul.mubr.bf16.gmra.mxu0 %v426
      %v1523 = vpop.f32.mrf.mxu0
      %v1524 = vadd.f32 %v1363, %v1523
      %v1525 = vpop.f32.mrf.mxu0
      %v1526 = vpop.f32.mrf.mxu0
      %v1527 = vadd.f32 %v1366, %v1526
      %v1528 = vpop.f32.mrf.mxu0
      %1529 = vmatprep.mubr.bf16.mxu0 %v475
      %1530 = vmatmul.mubr.bf16.gmra.mxu0 %v427
      %v1531 = vpop.f32.mrf.mxu0
      %v1532 = vadd.f32 %v1371, %v1531
      %v1533 = vpop.f32.mrf.mxu0
      %v1534 = vpop.f32.mrf.mxu0
      %v1535 = vadd.f32 %v1374, %v1534
      %v1536 = vpop.f32.mrf.mxu0
      %1537 = vmatprep.mubr.bf16.mxu0 %v476
      %1538 = vmatmul.mubr.bf16.gmra.mxu0 %v428
      %v1539 = vpop.f32.mrf.mxu0
      %v1540 = vadd.f32 %v1379, %v1539
      %v1541 = vpop.f32.mrf.mxu0
      %v1542 = vpop.f32.mrf.mxu0
      %v1543 = vadd.f32 %v1382, %v1542
      %v1544 = vpop.f32.mrf.mxu0
      %1545 = vmatprep.mubr.bf16.mxu0 %v477
      %1546 = vmatmul.mubr.bf16.gmra.mxu0 %v429
      %v1547 = vpop.f32.mrf.mxu0
      %v1548 = vadd.f32 %v1387, %v1547
      %v1549 = vpop.f32.mrf.mxu0
      %v1550 = vpop.f32.mrf.mxu0
      %v1551 = vadd.f32 %v1390, %v1550
      %v1552 = vpop.f32.mrf.mxu0
      %1553 = vmatprep.mubr.bf16.mxu0 %v478
      %1554 = vmatmul.mubr.bf16.gmra.mxu0 %v430
      %v1555 = vpop.f32.mrf.mxu0
      %v1556 = vadd.f32 %v1395, %v1555
      %v1557 = vpop.f32.mrf.mxu0
      %v1558 = vpop.f32.mrf.mxu0
      %v1559 = vadd.f32 %v1398, %v1558
      %v1560 = vpop.f32.mrf.mxu0
      %1561 = vmatprep.mubr.bf16.mxu0 %v479
      %1562 = vmatmul.mubr.bf16.gmra.mxu0 %v431
      %v1563 = vpop.f32.mrf.mxu0
      %v1564 = vadd.f32 %v1403, %v1563
      %v1565 = vpop.f32.mrf.mxu0
      %v1566 = vpop.f32.mrf.mxu0
      %v1567 = vadd.f32 %v1406, %v1566
      %v1568 = vpop.f32.mrf.mxu0
      %1569 = vmatprep.mubr.bf16.mxu0 %v480
      %1570 = vmatmul.mubr.bf16.gmra.mxu0 %v432
      %v1571 = vpop.f32.mrf.mxu0
      %v1572 = vadd.f32 %v1411, %v1571
      %v1573 = vpop.f32.mrf.mxu0
      %v1574 = vpop.f32.mrf.mxu0
      %v1575 = vadd.f32 %v1414, %v1574
      %v1576 = vpop.f32.mrf.mxu0
      %1577 = vmatprep.mubr.bf16.mxu0 %v481
      %1578 = vmatmul.mubr.bf16.gmra.mxu0 %v433
      %v1579 = vpop.f32.mrf.mxu0
      %v1580 = vadd.f32 %v1419, %v1579
      %v1581 = vpop.f32.mrf.mxu0
      %v1582 = vpop.f32.mrf.mxu0
      %v1583 = vadd.f32 %v1422, %v1582
      %v1584 = vpop.f32.mrf.mxu0
      %1585 = vmatprep.mubr.bf16.mxu0 %v482
      %1586 = vmatmul.mubr.bf16.gmra.mxu0 %v434
      %v1587 = vpop.f32.mrf.mxu0
      %v1588 = vadd.f32 %v1427, %v1587
      %v1589 = vpop.f32.mrf.mxu0
      %v1590 = vpop.f32.mrf.mxu0
      %v1591 = vadd.f32 %v1430, %v1590
      %v1592 = vpop.f32.mrf.mxu0
      %1593 = vmatprep.mubr.bf16.mxu0 %v483
      %1594 = vmatmul.mubr.bf16.gmra.mxu0 %v435
      %v1595 = vpop.f32.mrf.mxu0
      %v1596 = vadd.f32 %v1435, %v1595
      %v1597 = vpop.f32.mrf.mxu0
      %v1598 = vpop.f32.mrf.mxu0
      %v1599 = vadd.f32 %v1438, %v1598
      %v1600 = vpop.f32.mrf.mxu0
      %1601 = vmatprep.mubr.bf16.mxu0 %v484
      %1602 = vmatmul.mubr.bf16.gmra.mxu0 %v436
      %v1603 = vpop.f32.mrf.mxu0
      %v1604 = vadd.f32 %v1443, %v1603
      %v1605 = vpop.f32.mrf.mxu0
      %v1606 = vpop.f32.mrf.mxu0
      %v1607 = vadd.f32 %v1446, %v1606
      %v1608 = vpop.f32.mrf.mxu0
      %1609 = vmatprep.mubr.bf16.mxu0 %v485
      %1610 = vmatmul.mubr.bf16.gmra.mxu0 %v437
      %v1611 = vpop.f32.mrf.mxu0
      %v1612 = vadd.f32 %v1451, %v1611
      %v1613 = vpop.f32.mrf.mxu0
      %v1614 = vpop.f32.mrf.mxu0
      %v1615 = vadd.f32 %v1454, %v1614
      %v1616 = vpop.f32.mrf.mxu0
      %1617 = vmatprep.mubr.bf16.mxu0 %v486
      %1618 = vmatmul.mubr.bf16.gmra.mxu0 %v438
      %v1619 = vpop.f32.mrf.mxu0
      %v1620 = vadd.f32 %v1459, %v1619
      %v1621 = vpop.f32.mrf.mxu0
      %v1622 = vpop.f32.mrf.mxu0
      %v1623 = vadd.f32 %v1462, %v1622
      %v1624 = vpop.f32.mrf.mxu0
      %1625 = vdwg.mxu0
      %1626 = vmatprep.subr.bf16.mxu0 0
      %1627 = vmatpush1.bf16.msra.mxu0 %v1199
      %1628 = vmatprep.subr.bf16.mxu0 0
      %1629 = vmatpush1.bf16.msra.mxu0 %v1198
      %1630 = vmatprep.subr.bf16.mxu0 0
      %1631 = vmatpush1.bf16.msra.mxu0 %v1197
      %1632 = vmatprep.subr.bf16.mxu0 0
      %1633 = vmatpush1.bf16.msra.mxu0 %v1196
      %1634 = vmatprep.subr.bf16.mxu0 0
      %1635 = vmatpush1.bf16.msra.mxu0 %v1195
      %1636 = vmatprep.subr.bf16.mxu0 0
      %1637 = vmatpush1.bf16.msra.mxu0 %v1194
      %1638 = vmatprep.subr.bf16.mxu0 0
      %1639 = vmatpush1.bf16.msra.mxu0 %v1193
      %1640 = vmatprep.subr.bf16.mxu0 0
      %1641 = vmatpush1.bf16.msra.mxu0 %v1192
      %1642 = vmatprep.subr.bf16.mxu0 0
      %1643 = vmatpush2.bf16.msra.mxu0 %v1207
      %1644 = vmatprep.subr.bf16.mxu0 0
      %1645 = vmatpush2.bf16.msra.mxu0 %v1206
      %1646 = vmatprep.subr.bf16.mxu0 0
      %1647 = vmatpush2.bf16.msra.mxu0 %v1205
      %1648 = vmatprep.subr.bf16.mxu0 0
      %1649 = vmatpush2.bf16.msra.mxu0 %v1204
      %1650 = vmatprep.subr.bf16.mxu0 0
      %1651 = vmatpush2.bf16.msra.mxu0 %v1203
      %1652 = vmatprep.subr.bf16.mxu0 0
      %1653 = vmatpush2.bf16.msra.mxu0 %v1202
      %1654 = vmatprep.subr.bf16.mxu0 0
      %1655 = vmatpush2.bf16.msra.mxu0 %v1201
      %1656 = vmatprep.subr.bf16.mxu0 0
      %1657 = vmatpush2.bf16.msra.mxu0 %v1200
      %1658 = vmatprep.mubr.bf16.mxu0 %v567
      %1659 = vmatmul.mubr.bf16.gmra.mxu0 %v519
      %v1660 = vpop.f32.mrf.mxu0
      %v1661 = vadd.f32 %v1500, %v1660
      %v1662 = vpop.f32.mrf.mxu0
      %v1663 = vpop.f32.mrf.mxu0
      %v1664 = vadd.f32 %v1503, %v1663
      %v1665 = vpop.f32.mrf.mxu0
      %1666 = vmatprep.mubr.bf16.mxu0 %v568
      %1667 = vmatmul.mubr.bf16.gmra.mxu0 %v520
      %v1668 = vpop.f32.mrf.mxu0
      %v1669 = vadd.f32 %v1508, %v1668
      %v1670 = vpop.f32.mrf.mxu0
      %v1671 = vpop.f32.mrf.mxu0
      %v1672 = vadd.f32 %v1511, %v1671
      %v1673 = vpop.f32.mrf.mxu0
      %1674 = vmatprep.mubr.bf16.mxu0 %v569
      %1675 = vmatmul.mubr.bf16.gmra.mxu0 %v521
      %v1676 = vpop.f32.mrf.mxu0
      %v1677 = vadd.f32 %v1516, %v1676
      %v1678 = vpop.f32.mrf.mxu0
      %v1679 = vpop.f32.mrf.mxu0
      %v1680 = vadd.f32 %v1519, %v1679
      %v1681 = vpop.f32.mrf.mxu0
      %1682 = vmatprep.mubr.bf16.mxu0 %v570
      %1683 = vmatmul.mubr.bf16.gmra.mxu0 %v522
      %v1684 = vpop.f32.mrf.mxu0
      %v1685 = vadd.f32 %v1524, %v1684
      %v1686 = vpop.f32.mrf.mxu0
      %v1687 = vpop.f32.mrf.mxu0
      %v1688 = vadd.f32 %v1527, %v1687
      %v1689 = vpop.f32.mrf.mxu0
      %1690 = vmatprep.mubr.bf16.mxu0 %v571
      %1691 = vmatmul.mubr.bf16.gmra.mxu0 %v523
      %v1692 = vpop.f32.mrf.mxu0
      %v1693 = vadd.f32 %v1532, %v1692
      %v1694 = vpop.f32.mrf.mxu0
      %v1695 = vpop.f32.mrf.mxu0
      %v1696 = vadd.f32 %v1535, %v1695
      %v1697 = vpop.f32.mrf.mxu0
      %1698 = vmatprep.mubr.bf16.mxu0 %v572
      %1699 = vmatmul.mubr.bf16.gmra.mxu0 %v524
      %v1700 = vpop.f32.mrf.mxu0
      %v1701 = vadd.f32 %v1540, %v1700
      %v1702 = vpop.f32.mrf.mxu0
      %v1703 = vpop.f32.mrf.mxu0
      %v1704 = vadd.f32 %v1543, %v1703
      %v1705 = vpop.f32.mrf.mxu0
      %1706 = vmatprep.mubr.bf16.mxu0 %v573
      %1707 = vmatmul.mubr.bf16.gmra.mxu0 %v525
      %v1708 = vpop.f32.mrf.mxu0
      %v1709 = vadd.f32 %v1548, %v1708
      %v1710 = vpop.f32.mrf.mxu0
      %v1711 = vpop.f32.mrf.mxu0
      %v1712 = vadd.f32 %v1551, %v1711
      %v1713 = vpop.f32.mrf.mxu0
      %1714 = vmatprep.mubr.bf16.mxu0 %v574
      %1715 = vmatmul.mubr.bf16.gmra.mxu0 %v526
      %v1716 = vpop.f32.mrf.mxu0
      %v1717 = vadd.f32 %v1556, %v1716
      %v1718 = vpop.f32.mrf.mxu0
      %v1719 = vpop.f32.mrf.mxu0
      %v1720 = vadd.f32 %v1559, %v1719
      %v1721 = vpop.f32.mrf.mxu0
      %1722 = vmatprep.mubr.bf16.mxu0 %v575
      %1723 = vmatmul.mubr.bf16.gmra.mxu0 %v527
      %v1724 = vpop.f32.mrf.mxu0
      %v1725 = vadd.f32 %v1564, %v1724
      %v1726 = vpop.f32.mrf.mxu0
      %v1727 = vpop.f32.mrf.mxu0
      %v1728 = vadd.f32 %v1567, %v1727
      %v1729 = vpop.f32.mrf.mxu0
      %1730 = vmatprep.mubr.bf16.mxu0 %v576
      %1731 = vmatmul.mubr.bf16.gmra.mxu0 %v528
      %v1732 = vpop.f32.mrf.mxu0
      %v1733 = vadd.f32 %v1572, %v1732
      %v1734 = vpop.f32.mrf.mxu0
      %v1735 = vpop.f32.mrf.mxu0
      %v1736 = vadd.f32 %v1575, %v1735
      %v1737 = vpop.f32.mrf.mxu0
      %1738 = vmatprep.mubr.bf16.mxu0 %v577
      %1739 = vmatmul.mubr.bf16.gmra.mxu0 %v529
      %v1740 = vpop.f32.mrf.mxu0
      %v1741 = vadd.f32 %v1580, %v1740
      %v1742 = vpop.f32.mrf.mxu0
      %v1743 = vpop.f32.mrf.mxu0
      %v1744 = vadd.f32 %v1583, %v1743
      %v1745 = vpop.f32.mrf.mxu0
      %1746 = vmatprep.mubr.bf16.mxu0 %v578
      %1747 = vmatmul.mubr.bf16.gmra.mxu0 %v530
      %v1748 = vpop.f32.mrf.mxu0
      %v1749 = vadd.f32 %v1588, %v1748
      %v1750 = vpop.f32.mrf.mxu0
      %v1751 = vpop.f32.mrf.mxu0
      %v1752 = vadd.f32 %v1591, %v1751
      %v1753 = vpop.f32.mrf.mxu0
      %1754 = vmatprep.mubr.bf16.mxu0 %v579
      %1755 = vmatmul.mubr.bf16.gmra.mxu0 %v531
      %v1756 = vpop.f32.mrf.mxu0
      %v1757 = vadd.f32 %v1596, %v1756
      %v1758 = vpop.f32.mrf.mxu0
      %v1759 = vpop.f32.mrf.mxu0
      %v1760 = vadd.f32 %v1599, %v1759
      %v1761 = vpop.f32.mrf.mxu0
      %1762 = vmatprep.mubr.bf16.mxu0 %v580
      %1763 = vmatmul.mubr.bf16.gmra.mxu0 %v532
      %v1764 = vpop.f32.mrf.mxu0
      %v1765 = vadd.f32 %v1604, %v1764
      %v1766 = vpop.f32.mrf.mxu0
      %v1767 = vpop.f32.mrf.mxu0
      %v1768 = vadd.f32 %v1607, %v1767
      %v1769 = vpop.f32.mrf.mxu0
      %1770 = vmatprep.mubr.bf16.mxu0 %v581
      %1771 = vmatmul.mubr.bf16.gmra.mxu0 %v533
      %v1772 = vpop.f32.mrf.mxu0
      %v1773 = vadd.f32 %v1612, %v1772
      %v1774 = vpop.f32.mrf.mxu0
      %v1775 = vpop.f32.mrf.mxu0
      %v1776 = vadd.f32 %v1615, %v1775
      %v1777 = vpop.f32.mrf.mxu0
      %1778 = vmatprep.mubr.bf16.mxu0 %v582
      %1779 = vmatmul.mubr.bf16.gmra.mxu0 %v534
      %v1780 = vpop.f32.mrf.mxu0
      %v1781 = vadd.f32 %v1620, %v1780
      %v1782 = vpop.f32.mrf.mxu0
      %v1783 = vpop.f32.mrf.mxu0
      %v1784 = vadd.f32 %v1623, %v1783
      %v1785 = vpop.f32.mrf.mxu0
      %1786 = vdwg.mxu0
      %1787 = vmatprep.subr.bf16.mxu0 0
      %1788 = vmatpush1.bf16.msra.mxu0 %v1215
      %1789 = vmatprep.subr.bf16.mxu0 0
      %1790 = vmatpush1.bf16.msra.mxu0 %v1214
      %1791 = vmatprep.subr.bf16.mxu0 0
      %1792 = vmatpush1.bf16.msra.mxu0 %v1213
      %1793 = vmatprep.subr.bf16.mxu0 0
      %1794 = vmatpush1.bf16.msra.mxu0 %v1212
      %1795 = vmatprep.subr.bf16.mxu0 0
      %1796 = vmatpush1.bf16.msra.mxu0 %v1211
      %1797 = vmatprep.subr.bf16.mxu0 0
      %1798 = vmatpush1.bf16.msra.mxu0 %v1210
      %1799 = vmatprep.subr.bf16.mxu0 0
      %1800 = vmatpush1.bf16.msra.mxu0 %v1209
      %1801 = vmatprep.subr.bf16.mxu0 0
      %1802 = vmatpush1.bf16.msra.mxu0 %v1208
      %1803 = vmatprep.subr.bf16.mxu0 0
      %1804 = vmatpush2.bf16.msra.mxu0 %v1223
      %1805 = vmatprep.subr.bf16.mxu0 0
      %1806 = vmatpush2.bf16.msra.mxu0 %v1222
      %1807 = vmatprep.subr.bf16.mxu0 0
      %1808 = vmatpush2.bf16.msra.mxu0 %v1221
      %1809 = vmatprep.subr.bf16.mxu0 0
      %1810 = vmatpush2.bf16.msra.mxu0 %v1220
      %1811 = vmatprep.subr.bf16.mxu0 0
      %1812 = vmatpush2.bf16.msra.mxu0 %v1219
      %1813 = vmatprep.subr.bf16.mxu0 0
      %1814 = vmatpush2.bf16.msra.mxu0 %v1218
      %1815 = vmatprep.subr.bf16.mxu0 0
      %1816 = vmatpush2.bf16.msra.mxu0 %v1217
      %1817 = vmatprep.subr.bf16.mxu0 0
      %1818 = vmatpush2.bf16.msra.mxu0 %v1216
      %1819 = vmatprep.mubr.bf16.mxu0 %v664
      %1820 = vmatmul.mubr.bf16.gmra.mxu0 %v616
      %v1821 = vpop.f32.mrf.mxu0
      %v1822 = vadd.f32 %v1661, %v1821
      %v1823 = vpop.f32.mrf.mxu0
      %v1824 = vpop.f32.mrf.mxu0
      %v1825 = vadd.f32 %v1664, %v1824
      %v1826 = vpop.f32.mrf.mxu0
      %1827 = vmatprep.mubr.bf16.mxu0 %v665
      %1828 = vmatmul.mubr.bf16.gmra.mxu0 %v617
      %v1829 = vpop.f32.mrf.mxu0
      %v1830 = vadd.f32 %v1669, %v1829
      %v1831 = vpop.f32.mrf.mxu0
      %v1832 = vpop.f32.mrf.mxu0
      %v1833 = vadd.f32 %v1672, %v1832
      %v1834 = vpop.f32.mrf.mxu0
      %1835 = vmatprep.mubr.bf16.mxu0 %v666
      %1836 = vmatmul.mubr.bf16.gmra.mxu0 %v618
      %v1837 = vpop.f32.mrf.mxu0
      %v1838 = vadd.f32 %v1677, %v1837
      %v1839 = vpop.f32.mrf.mxu0
      %v1840 = vpop.f32.mrf.mxu0
      %v1841 = vadd.f32 %v1680, %v1840
      %v1842 = vpop.f32.mrf.mxu0
      %1843 = vmatprep.mubr.bf16.mxu0 %v667
      %1844 = vmatmul.mubr.bf16.gmra.mxu0 %v619
      %v1845 = vpop.f32.mrf.mxu0
      %v1846 = vadd.f32 %v1685, %v1845
      %v1847 = vpop.f32.mrf.mxu0
      %v1848 = vpop.f32.mrf.mxu0
      %v1849 = vadd.f32 %v1688, %v1848
      %v1850 = vpop.f32.mrf.mxu0
      %1851 = vmatprep.mubr.bf16.mxu0 %v668
      %1852 = vmatmul.mubr.bf16.gmra.mxu0 %v620
      %v1853 = vpop.f32.mrf.mxu0
      %v1854 = vadd.f32 %v1693, %v1853
      %v1855 = vpop.f32.mrf.mxu0
      %v1856 = vpop.f32.mrf.mxu0
      %v1857 = vadd.f32 %v1696, %v1856
      %v1858 = vpop.f32.mrf.mxu0
      %1859 = vmatprep.mubr.bf16.mxu0 %v669
      %1860 = vmatmul.mubr.bf16.gmra.mxu0 %v621
      %v1861 = vpop.f32.mrf.mxu0
      %v1862 = vadd.f32 %v1701, %v1861
      %v1863 = vpop.f32.mrf.mxu0
      %v1864 = vpop.f32.mrf.mxu0
      %v1865 = vadd.f32 %v1704, %v1864
      %v1866 = vpop.f32.mrf.mxu0
      %1867 = vmatprep.mubr.bf16.mxu0 %v670
      %1868 = vmatmul.mubr.bf16.gmra.mxu0 %v622
      %v1869 = vpop.f32.mrf.mxu0
      %v1870 = vadd.f32 %v1709, %v1869
      %v1871 = vpop.f32.mrf.mxu0
      %v1872 = vpop.f32.mrf.mxu0
      %v1873 = vadd.f32 %v1712, %v1872
      %v1874 = vpop.f32.mrf.mxu0
      %1875 = vmatprep.mubr.bf16.mxu0 %v671
      %1876 = vmatmul.mubr.bf16.gmra.mxu0 %v623
      %v1877 = vpop.f32.mrf.mxu0
      %v1878 = vadd.f32 %v1717, %v1877
      %v1879 = vpop.f32.mrf.mxu0
      %v1880 = vpop.f32.mrf.mxu0
      %v1881 = vadd.f32 %v1720, %v1880
      %v1882 = vpop.f32.mrf.mxu0
      %1883 = vmatprep.mubr.bf16.mxu0 %v672
      %1884 = vmatmul.mubr.bf16.gmra.mxu0 %v624
      %v1885 = vpop.f32.mrf.mxu0
      %v1886 = vadd.f32 %v1725, %v1885
      %v1887 = vpop.f32.mrf.mxu0
      %v1888 = vpop.f32.mrf.mxu0
      %v1889 = vadd.f32 %v1728, %v1888
      %v1890 = vpop.f32.mrf.mxu0
      %1891 = vmatprep.mubr.bf16.mxu0 %v673
      %1892 = vmatmul.mubr.bf16.gmra.mxu0 %v625
      %v1893 = vpop.f32.mrf.mxu0
      %v1894 = vadd.f32 %v1733, %v1893
      %v1895 = vpop.f32.mrf.mxu0
      %v1896 = vpop.f32.mrf.mxu0
      %v1897 = vadd.f32 %v1736, %v1896
      %v1898 = vpop.f32.mrf.mxu0
      %1899 = vmatprep.mubr.bf16.mxu0 %v674
      %1900 = vmatmul.mubr.bf16.gmra.mxu0 %v626
      %v1901 = vpop.f32.mrf.mxu0
      %v1902 = vadd.f32 %v1741, %v1901
      %v1903 = vpop.f32.mrf.mxu0
      %v1904 = vpop.f32.mrf.mxu0
      %v1905 = vadd.f32 %v1744, %v1904
      %v1906 = vpop.f32.mrf.mxu0
      %1907 = vmatprep.mubr.bf16.mxu0 %v675
      %1908 = vmatmul.mubr.bf16.gmra.mxu0 %v627
      %v1909 = vpop.f32.mrf.mxu0
      %v1910 = vadd.f32 %v1749, %v1909
      %v1911 = vpop.f32.mrf.mxu0
      %v1912 = vpop.f32.mrf.mxu0
      %v1913 = vadd.f32 %v1752, %v1912
      %v1914 = vpop.f32.mrf.mxu0
      %1915 = vmatprep.mubr.bf16.mxu0 %v676
      %1916 = vmatmul.mubr.bf16.gmra.mxu0 %v628
      %v1917 = vpop.f32.mrf.mxu0
      %v1918 = vadd.f32 %v1757, %v1917
      %v1919 = vpop.f32.mrf.mxu0
      %v1920 = vpop.f32.mrf.mxu0
      %v1921 = vadd.f32 %v1760, %v1920
      %v1922 = vpop.f32.mrf.mxu0
      %1923 = vmatprep.mubr.bf16.mxu0 %v677
      %1924 = vmatmul.mubr.bf16.gmra.mxu0 %v629
      %v1925 = vpop.f32.mrf.mxu0
      %v1926 = vadd.f32 %v1765, %v1925
      %v1927 = vpop.f32.mrf.mxu0
      %v1928 = vpop.f32.mrf.mxu0
      %v1929 = vadd.f32 %v1768, %v1928
      %v1930 = vpop.f32.mrf.mxu0
      %1931 = vmatprep.mubr.bf16.mxu0 %v678
      %1932 = vmatmul.mubr.bf16.gmra.mxu0 %v630
      %v1933 = vpop.f32.mrf.mxu0
      %v1934 = vadd.f32 %v1773, %v1933
      %v1935 = vpop.f32.mrf.mxu0
      %v1936 = vpop.f32.mrf.mxu0
      %v1937 = vadd.f32 %v1776, %v1936
      %v1938 = vpop.f32.mrf.mxu0
      %1939 = vmatprep.mubr.bf16.mxu0 %v679
      %1940 = vmatmul.mubr.bf16.gmra.mxu0 %v631
      %v1941 = vpop.f32.mrf.mxu0
      %v1942 = vadd.f32 %v1781, %v1941
      %v1943 = vpop.f32.mrf.mxu0
      %v1944 = vpop.f32.mrf.mxu0
      %v1945 = vadd.f32 %v1784, %v1944
      %v1946 = vpop.f32.mrf.mxu0
      %1947 = vdwg.mxu0
      %1948 = vmatprep.subr.bf16.mxu0 0
      %1949 = vmatpush1.bf16.msra.mxu0 %v1231
      %1950 = vmatprep.subr.bf16.mxu0 0
      %1951 = vmatpush1.bf16.msra.mxu0 %v1230
      %1952 = vmatprep.subr.bf16.mxu0 0
      %1953 = vmatpush1.bf16.msra.mxu0 %v1229
      %1954 = vmatprep.subr.bf16.mxu0 0
      %1955 = vmatpush1.bf16.msra.mxu0 %v1228
      %1956 = vmatprep.subr.bf16.mxu0 0
      %1957 = vmatpush1.bf16.msra.mxu0 %v1227
      %1958 = vmatprep.subr.bf16.mxu0 0
      %1959 = vmatpush1.bf16.msra.mxu0 %v1226
      %1960 = vmatprep.subr.bf16.mxu0 0
      %1961 = vmatpush1.bf16.msra.mxu0 %v1225
      %1962 = vmatprep.subr.bf16.mxu0 0
      %1963 = vmatpush1.bf16.msra.mxu0 %v1224
      %1964 = vmatprep.subr.bf16.mxu0 0
      %1965 = vmatpush2.bf16.msra.mxu0 0
      %1966 = vmatprep.subr.bf16.mxu0 0
      %1967 = vmatpush2.bf16.msra.mxu0 0
      %1968 = vmatprep.subr.bf16.mxu0 0
      %1969 = vmatpush2.bf16.msra.mxu0 0
      %1970 = vmatprep.subr.bf16.mxu0 0
      %1971 = vmatpush2.bf16.msra.mxu0 0
      %1972 = vmatprep.subr.bf16.mxu0 0
      %1973 = vmatpush2.bf16.msra.mxu0 0
      %1974 = vmatprep.subr.bf16.mxu0 0
      %1975 = vmatpush2.bf16.msra.mxu0 0
      %1976 = vmatprep.subr.bf16.mxu0 0
      %1977 = vmatpush2.bf16.msra.mxu0 0
      %1978 = vmatprep.subr.bf16.mxu0 0
      %1979 = vmatpush2.bf16.msra.mxu0 0
      %1980 = vmatprep.mubr.bf16.mxu0 0
      %1981 = vmatmul.mubr.bf16.gmra.mxu0 %v712
      %v1982 = vpop.f32.mrf.mxu0
      %v1983 = vadd.f32 %v1822, %v1982
      %v1984 = vpop.f32.mrf.mxu0
      %v1985 = vpop.f32.mrf.mxu0
      %v1986 = vadd.f32 %v1825, %v1985
      %v1987 = vpop.f32.mrf.mxu0
      %1988 = vmatprep.mubr.bf16.mxu0 0
      %1989 = vmatmul.mubr.bf16.gmra.mxu0 %v713
      %v1990 = vpop.f32.mrf.mxu0
      %v1991 = vadd.f32 %v1830, %v1990
      %v1992 = vpop.f32.mrf.mxu0
      %v1993 = vpop.f32.mrf.mxu0
      %v1994 = vadd.f32 %v1833, %v1993
      %v1995 = vpop.f32.mrf.mxu0
      %1996 = vmatprep.mubr.bf16.mxu0 0
      %1997 = vmatmul.mubr.bf16.gmra.mxu0 %v714
      %v1998 = vpop.f32.mrf.mxu0
      %v1999 = vadd.f32 %v1838, %v1998
      %v2000 = vpop.f32.mrf.mxu0
      %v2001 = vpop.f32.mrf.mxu0
      %v2002 = vadd.f32 %v1841, %v2001
      %v2003 = vpop.f32.mrf.mxu0
      %2004 = vmatprep.mubr.bf16.mxu0 0
      %2005 = vmatmul.mubr.bf16.gmra.mxu0 %v715
      %v2006 = vpop.f32.mrf.mxu0
      %v2007 = vadd.f32 %v1846, %v2006
      %v2008 = vpop.f32.mrf.mxu0
      %v2009 = vpop.f32.mrf.mxu0
      %v2010 = vadd.f32 %v1849, %v2009
      %v2011 = vpop.f32.mrf.mxu0
      %2012 = vmatprep.mubr.bf16.mxu0 0
      %2013 = vmatmul.mubr.bf16.gmra.mxu0 %v716
      %v2014 = vpop.f32.mrf.mxu0
      %v2015 = vadd.f32 %v1854, %v2014
      %v2016 = vpop.f32.mrf.mxu0
      %v2017 = vpop.f32.mrf.mxu0
      %v2018 = vadd.f32 %v1857, %v2017
      %v2019 = vpop.f32.mrf.mxu0
      %2020 = vmatprep.mubr.bf16.mxu0 0
      %2021 = vmatmul.mubr.bf16.gmra.mxu0 %v717
      %v2022 = vpop.f32.mrf.mxu0
      %v2023 = vadd.f32 %v1862, %v2022
      %v2024 = vpop.f32.mrf.mxu0
      %v2025 = vpop.f32.mrf.mxu0
      %v2026 = vadd.f32 %v1865, %v2025
      %v2027 = vpop.f32.mrf.mxu0
      %2028 = vmatprep.mubr.bf16.mxu0 0
      %2029 = vmatmul.mubr.bf16.gmra.mxu0 %v718
      %v2030 = vpop.f32.mrf.mxu0
      %v2031 = vadd.f32 %v1870, %v2030
      %v2032 = vpop.f32.mrf.mxu0
      %v2033 = vpop.f32.mrf.mxu0
      %v2034 = vadd.f32 %v1873, %v2033
      %v2035 = vpop.f32.mrf.mxu0
      %2036 = vmatprep.mubr.bf16.mxu0 0
      %2037 = vmatmul.mubr.bf16.gmra.mxu0 %v719
      %v2038 = vpop.f32.mrf.mxu0
      %v2039 = vadd.f32 %v1878, %v2038
      %v2040 = vpop.f32.mrf.mxu0
      %v2041 = vpop.f32.mrf.mxu0
      %v2042 = vadd.f32 %v1881, %v2041
      %v2043 = vpop.f32.mrf.mxu0
      %2044 = vmatprep.mubr.bf16.mxu0 0
      %2045 = vmatmul.mubr.bf16.gmra.mxu0 %v720
      %v2046 = vpop.f32.mrf.mxu0
      %v2047 = vadd.f32 %v1886, %v2046
      %v2048 = vpop.f32.mrf.mxu0
      %v2049 = vpop.f32.mrf.mxu0
      %v2050 = vadd.f32 %v1889, %v2049
      %v2051 = vpop.f32.mrf.mxu0
      %2052 = vmatprep.mubr.bf16.mxu0 0
      %2053 = vmatmul.mubr.bf16.gmra.mxu0 %v721
      %v2054 = vpop.f32.mrf.mxu0
      %v2055 = vadd.f32 %v1894, %v2054
      %v2056 = vpop.f32.mrf.mxu0
      %v2057 = vpop.f32.mrf.mxu0
      %v2058 = vadd.f32 %v1897, %v2057
      %v2059 = vpop.f32.mrf.mxu0
      %2060 = vmatprep.mubr.bf16.mxu0 0
      %2061 = vmatmul.mubr.bf16.gmra.mxu0 %v722
      %v2062 = vpop.f32.mrf.mxu0
      %v2063 = vadd.f32 %v1902, %v2062
      %v2064 = vpop.f32.mrf.mxu0
      %v2065 = vpop.f32.mrf.mxu0
      %v2066 = vadd.f32 %v1905, %v2065
      %v2067 = vpop.f32.mrf.mxu0
      %2068 = vmatprep.mubr.bf16.mxu0 0
      %2069 = vmatmul.mubr.bf16.gmra.mxu0 %v723
      %v2070 = vpop.f32.mrf.mxu0
      %v2071 = vadd.f32 %v1910, %v2070
      %v2072 = vpop.f32.mrf.mxu0
      %v2073 = vpop.f32.mrf.mxu0
      %v2074 = vadd.f32 %v1913, %v2073
      %v2075 = vpop.f32.mrf.mxu0
      %2076 = vmatprep.mubr.bf16.mxu0 0
      %2077 = vmatmul.mubr.bf16.gmra.mxu0 %v724
      %v2078 = vpop.f32.mrf.mxu0
      %v2079 = vadd.f32 %v1918, %v2078
      %v2080 = vpop.f32.mrf.mxu0
      %v2081 = vpop.f32.mrf.mxu0
      %v2082 = vadd.f32 %v1921, %v2081
      %v2083 = vpop.f32.mrf.mxu0
      %2084 = vmatprep.mubr.bf16.mxu0 0
      %2085 = vmatmul.mubr.bf16.gmra.mxu0 %v725
      %v2086 = vpop.f32.mrf.mxu0
      %v2087 = vadd.f32 %v1926, %v2086
      %v2088 = vpop.f32.mrf.mxu0
      %v2089 = vpop.f32.mrf.mxu0
      %v2090 = vadd.f32 %v1929, %v2089
      %v2091 = vpop.f32.mrf.mxu0
      %2092 = vmatprep.mubr.bf16.mxu0 0
      %2093 = vmatmul.mubr.bf16.gmra.mxu0 %v726
      %v2094 = vpop.f32.mrf.mxu0
      %v2095 = vadd.f32 %v1934, %v2094
      %v2096 = vpop.f32.mrf.mxu0
      %v2097 = vpop.f32.mrf.mxu0
      %v2098 = vadd.f32 %v1937, %v2097
      %v2099 = vpop.f32.mrf.mxu0
      %2100 = vmatprep.mubr.bf16.mxu0 0
      %2101 = vmatmul.mubr.bf16.gmra.mxu0 %v727
      %v2102 = vpop.f32.mrf.mxu0
      %v2103 = vadd.f32 %v1942, %v2102
      %v2104 = vpop.f32.mrf.mxu0
      %v2105 = vpop.f32.mrf.mxu0
      %v2106 = vadd.f32 %v1945, %v2105
      %v2107 = vpop.f32.mrf.mxu0
      %2108 = vdwg.mxu0
      %v2109 = vadd.f32 %v1983, %v1986
      %v2110 = vadd.f32 %v2109, %v1991
      %v2111 = vadd.f32 %v2110, %v1994
      %v2112 = vadd.f32 %v2111, %v1999
      %v2113 = vadd.f32 %v2112, %v2002
      %v2114 = vadd.f32 %v2113, %v2007
      %v2115 = vadd.f32 %v2114, %v2010
      %v2116 = vadd.f32 %v2115, %v2015
      %v2117 = vadd.f32 %v2116, %v2018
      %v2118 = vadd.f32 %v2117, %v2023
      %v2119 = vadd.f32 %v2118, %v2026
      %v2120 = vadd.f32 %v2119, %v2031
      %v2121 = vadd.f32 %v2120, %v2034
      %v2122 = vadd.f32 %v2121, %v2039
      %v2123 = vadd.f32 %v2122, %v2042
      %v2124 = vadd.f32 %v2123, %v2047
      %v2125 = vadd.f32 %v2124, %v2050
      %v2126 = vadd.f32 %v2125, %v2055
      %v2127 = vadd.f32 %v2126, %v2058
      %v2128 = vadd.f32 %v2127, %v2063
      %v2129 = vadd.f32 %v2128, %v2066
      %v2130 = vadd.f32 %v2129, %v2071
      %v2131 = vadd.f32 %v2130, %v2074
      %v2132 = vadd.f32 %v2131, %v2079
      %v2133 = vadd.f32 %v2132, %v2082
      %v2134 = vadd.f32 %v2133, %v2087
      %v2135 = vadd.f32 %v2134, %v2090
      %v2136 = vadd.f32 %v2135, %v2095
      %v2137 = vadd.f32 %v2136, %v2098
      %v2138 = vadd.f32 %v2137, %v2103
      %v2139 = vadd.f32 %v2138, %v2106
      %v2140 = vrot.slane %v2139, 4
      %v2141 = vadd.f32 %v2139, %v2140
      %v2142 = vrot.slane %v2141, 2
      %v2143 = vadd.f32 %v2141, %v2142
      %v2144 = vrot.slane %v2143, 1
      %v2145 = vadd.f32 %v2143, %v2144
      %v2146 = vrcp.pop 256.0
      %v2147 = vmul.f32 %v2145, %v2146
      %v2148 = vmul.f32 %v1983, %v1983
      %v2149 = vmul.f32 %v1986, %v1986
      %v2150 = vmul.f32 %v1991, %v1991
      %v2151 = vmul.f32 %v1994, %v1994
      %v2152 = vmul.f32 %v1999, %v1999
      %v2153 = vmul.f32 %v2002, %v2002
      %v2154 = vmul.f32 %v2007, %v2007
      %v2155 = vmul.f32 %v2010, %v2010
      %v2156 = vmul.f32 %v2015, %v2015
      %v2157 = vmul.f32 %v2018, %v2018
      %v2158 = vmul.f32 %v2023, %v2023
      %v2159 = vmul.f32 %v2026, %v2026
      %v2160 = vmul.f32 %v2031, %v2031
      %v2161 = vmul.f32 %v2034, %v2034
      %v2162 = vmul.f32 %v2039, %v2039
      %v2163 = vmul.f32 %v2042, %v2042
      %v2164 = vmul.f32 %v2047, %v2047
      %v2165 = vmul.f32 %v2050, %v2050
      %v2166 = vmul.f32 %v2055, %v2055
      %v2167 = vmul.f32 %v2058, %v2058
      %v2168 = vmul.f32 %v2063, %v2063
      %v2169 = vmul.f32 %v2066, %v2066
      %v2170 = vmul.f32 %v2071, %v2071
      %v2171 = vmul.f32 %v2074, %v2074
      %v2172 = vmul.f32 %v2079, %v2079
      %v2173 = vmul.f32 %v2082, %v2082
      %v2174 = vmul.f32 %v2087, %v2087
      %v2175 = vmul.f32 %v2090, %v2090
      %v2176 = vmul.f32 %v2095, %v2095
      %v2177 = vmul.f32 %v2098, %v2098
      %v2178 = vmul.f32 %v2103, %v2103
      %v2179 = vmul.f32 %v2106, %v2106
      %v2180 = vadd.f32 %v2148, %v2149
      %v2181 = vadd.f32 %v2180, %v2150
      %v2182 = vadd.f32 %v2181, %v2151
      %v2183 = vadd.f32 %v2182, %v2152
      %v2184 = vadd.f32 %v2183, %v2153
      %v2185 = vadd.f32 %v2184, %v2154
      %v2186 = vadd.f32 %v2185, %v2155
      %v2187 = vadd.f32 %v2186, %v2156
      %v2188 = vadd.f32 %v2187, %v2157
      %v2189 = vadd.f32 %v2188, %v2158
      %v2190 = vadd.f32 %v2189, %v2159
      %v2191 = vadd.f32 %v2190, %v2160
      %v2192 = vadd.f32 %v2191, %v2161
      %v2193 = vadd.f32 %v2192, %v2162
      %v2194 = vadd.f32 %v2193, %v2163
      %v2195 = vadd.f32 %v2194, %v2164
      %v2196 = vadd.f32 %v2195, %v2165
      %v2197 = vadd.f32 %v2196, %v2166
      %v2198 = vadd.f32 %v2197, %v2167
      %v2199 = vadd.f32 %v2198, %v2168
      %v2200 = vadd.f32 %v2199, %v2169
      %v2201 = vadd.f32 %v2200, %v2170
      %v2202 = vadd.f32 %v2201, %v2171
      %v2203 = vadd.f32 %v2202, %v2172
      %v2204 = vadd.f32 %v2203, %v2173
      %v2205 = vadd.f32 %v2204, %v2174
      %v2206 = vadd.f32 %v2205, %v2175
      %v2207 = vadd.f32 %v2206, %v2176
      %v2208 = vadd.f32 %v2207, %v2177
      %v2209 = vadd.f32 %v2208, %v2178
      %v2210 = vadd.f32 %v2209, %v2179
      %v2211 = vrot.slane %v2210, 4
      %v2212 = vadd.f32 %v2210, %v2211
      %v2213 = vrot.slane %v2212, 2
      %v2214 = vadd.f32 %v2212, %v2213
      %v2215 = vrot.slane %v2214, 1
      %v2216 = vadd.f32 %v2214, %v2215
      %v2217 = vmul.f32 %v2216, %v2146
      %v2218 = vmul.f32 %v2147, %v2147
      %v2219 = vsub.f32 %v2217, %v2218
      %v2220 = vsub.f32 %v1983, %v2147
      %v2221 = vsub.f32 %v1986, %v2147
      %v2222 = vsub.f32 %v1991, %v2147
      %v2223 = vsub.f32 %v1994, %v2147
      %v2224 = vsub.f32 %v1999, %v2147
      %v2225 = vsub.f32 %v2002, %v2147
      %v2226 = vsub.f32 %v2007, %v2147
      %v2227 = vsub.f32 %v2010, %v2147
      %v2228 = vsub.f32 %v2015, %v2147
      %v2229 = vsub.f32 %v2018, %v2147
      %v2230 = vsub.f32 %v2023, %v2147
      %v2231 = vsub.f32 %v2026, %v2147
      %v2232 = vsub.f32 %v2031, %v2147
      %v2233 = vsub.f32 %v2034, %v2147
      %v2234 = vsub.f32 %v2039, %v2147
      %v2235 = vsub.f32 %v2042, %v2147
      %v2236 = vsub.f32 %v2047, %v2147
      %v2237 = vsub.f32 %v2050, %v2147
      %v2238 = vsub.f32 %v2055, %v2147
      %v2239 = vsub.f32 %v2058, %v2147
      %v2240 = vsub.f32 %v2063, %v2147
      %v2241 = vsub.f32 %v2066, %v2147
      %v2242 = vsub.f32 %v2071, %v2147
      %v2243 = vsub.f32 %v2074, %v2147
      %v2244 = vsub.f32 %v2079, %v2147
      %v2245 = vsub.f32 %v2082, %v2147
      %v2246 = vsub.f32 %v2087, %v2147
      %v2247 = vsub.f32 %v2090, %v2147
      %v2248 = vsub.f32 %v2095, %v2147
      %v2249 = vsub.f32 %v2098, %v2147
      %v2250 = vsub.f32 %v2103, %v2147
      %v2251 = vsub.f32 %v2106, %v2147
      %v2252 = vadd.f32 %v2219, 1e-05
      %v2253 = vrsqrt.pop %v2252
      %v2254 = vmul.f32 %v2220, %v2253
      %v2255 = vmul.f32 %v2221, %v2253
      %v2256 = vmul.f32 %v2222, %v2253
      %v2257 = vmul.f32 %v2223, %v2253
      %v2258 = vmul.f32 %v2224, %v2253
      %v2259 = vmul.f32 %v2225, %v2253
      %v2260 = vmul.f32 %v2226, %v2253
      %v2261 = vmul.f32 %v2227, %v2253
      %v2262 = vmul.f32 %v2228, %v2253
      %v2263 = vmul.f32 %v2229, %v2253
      %v2264 = vmul.f32 %v2230, %v2253
      %v2265 = vmul.f32 %v2231, %v2253
      %v2266 = vmul.f32 %v2232, %v2253
      %v2267 = vmul.f32 %v2233, %v2253
      %v2268 = vmul.f32 %v2234, %v2253
      %v2269 = vmul.f32 %v2235, %v2253
      %v2270 = vmul.f32 %v2236, %v2253
      %v2271 = vmul.f32 %v2237, %v2253
      %v2272 = vmul.f32 %v2238, %v2253
      %v2273 = vmul.f32 %v2239, %v2253
      %v2274 = vmul.f32 %v2240, %v2253
      %v2275 = vmul.f32 %v2241, %v2253
      %v2276 = vmul.f32 %v2242, %v2253
      %v2277 = vmul.f32 %v2243, %v2253
      %v2278 = vmul.f32 %v2244, %v2253
      %v2279 = vmul.f32 %v2245, %v2253
      %v2280 = vmul.f32 %v2246, %v2253
      %v2281 = vmul.f32 %v2247, %v2253
      %v2282 = vmul.f32 %v2248, %v2253
      %v2283 = vmul.f32 %v2249, %v2253
      %v2284 = vmul.f32 %v2250, %v2253
      %v2285 = vmul.f32 %v2251, %v2253
      %v2286 = vmax.f32 %v2254, 0.0
      %v2287 = vmax.f32 %v2255, 0.0
      %v2288 = vmax.f32 %v2256, 0.0
      %v2289 = vmax.f32 %v2257, 0.0
      %v2290 = vmax.f32 %v2258, 0.0
      %v2291 = vmax.f32 %v2259, 0.0
      %v2292 = vmax.f32 %v2260, 0.0
      %v2293 = vmax.f32 %v2261, 0.0
      %v2294 = vmax.f32 %v2262, 0.0
      %v2295 = vmax.f32 %v2263, 0.0
      %v2296 = vmax.f32 %v2264, 0.0
      %v2297 = vmax.f32 %v2265, 0.0
      %v2298 = vmax.f32 %v2266, 0.0
      %v2299 = vmax.f32 %v2267, 0.0
      %v2300 = vmax.f32 %v2268, 0.0
      %v2301 = vmax.f32 %v2269, 0.0
      %v2302 = vmax.f32 %v2270, 0.0
      %v2303 = vmax.f32 %v2271, 0.0
      %v2304 = vmax.f32 %v2272, 0.0
      %v2305 = vmax.f32 %v2273, 0.0
      %v2306 = vmax.f32 %v2274, 0.0
      %v2307 = vmax.f32 %v2275, 0.0
      %v2308 = vmax.f32 %v2276, 0.0
      %v2309 = vmax.f32 %v2277, 0.0
      %v2310 = vmax.f32 %v2278, 0.0
      %v2311 = vmax.f32 %v2279, 0.0
      %v2312 = vmax.f32 %v2280, 0.0
      %v2313 = vmax.f32 %v2281, 0.0
      %v2314 = vmax.f32 %v2282, 0.0
      %v2315 = vmax.f32 %v2283, 0.0
      %v2316 = vmax.f32 %v2284, 0.0
      %v2317 = vmax.f32 %v2285, 0.0
      %2318 = vst [vmem:[%s262 + $0x1] sm:$0xff] %v2286
      %2319 = vst [vmem:[%s262 + $0x9] sm:$0xff] %v2287
      %2320 = vst [vmem:[%s262 + $0x19] sm:$0xff] %v2288
      %2321 = vst [vmem:[%s262 + $0x21] sm:$0xff] %v2289
      %2322 = vst [vmem:[%s262 + $0x31] sm:$0xff] %v2290
      %2323 = vst [vmem:[%s262 + $0x39] sm:$0xff] %v2291
      %2324 = vst [vmem:[%s262 + $0x49] sm:$0xff] %v2292
      %2325 = vst [vmem:[%s262 + $0x51] sm:$0xff] %v2293
      %2326 = vst [vmem:[%s262 + $0x61] sm:$0xff] %v2294
      %2327 = vst [vmem:[%s262 + $0x69] sm:$0xff] %v2295
      %2328 = vst [vmem:[%s262 + $0x79] sm:$0xff] %v2296
      %2329 = vst [vmem:[%s262 + $0x81] sm:$0xff] %v2297
      %2330 = vst [vmem:[%s262 + $0x91] sm:$0xff] %v2298
      %2331 = vst [vmem:[%s262 + $0x99] sm:$0xff] %v2299
      %2332 = vst [vmem:[%s262 + $0xa9] sm:$0xff] %v2300
      %2333 = vst [vmem:[%s262 + $0xb1] sm:$0xff] %v2301
      %2334 = vst [vmem:[%s262 + $0xc1] sm:$0xff] %v2302
      %2335 = vst [vmem:[%s262 + $0xc9] sm:$0xff] %v2303
      %2336 = vst [vmem:[%s262 + $0xd9] sm:$0xff] %v2304
      %2337 = vst [vmem:[%s262 + $0xe1] sm:$0xff] %v2305
      %2338 = vst [vmem:[%s262 + $0xf1] sm:$0xff] %v2306
      %2339 = vst [vmem:[%s262 + $0xf9] sm:$0xff] %v2307
      %2340 = vst [vmem:[%s262 + $0x109] sm:$0xff] %v2308
      %2341 = vst [vmem:[%s262 + $0x111] sm:$0xff] %v2309
      %2342 = vst [vmem:[%s262 + $0x121] sm:$0xff] %v2310
      %2343 = vst [vmem:[%s262 + $0x129] sm:$0xff] %v2311
      %2344 = vst [vmem:[%s262 + $0x139] sm:$0xff] %v2312
      %2345 = vst [vmem:[%s262 + $0x141] sm:$0xff] %v2313
      %2346 = vst [vmem:[%s262 + $0x151] sm:$0xff] %v2314
      %2347 = vst [vmem:[%s262 + $0x159] sm:$0xff] %v2315
      %2348 = vst [vmem:[%s262 + $0x169] sm:$0xff] %v2316
      %2349 = vst [vmem:[%s262 + $0x171] sm:$0xff] %v2317
      %v2350 = vld [vmem:[#allocation2] sm:$0xff]
      %v2351 = vld [vmem:[#allocation2 + $0x8] sm:$0xff]
      %v2352 = vld [vmem:[#allocation2 + $0x18] sm:$0xff]
      %v2353 = vld [vmem:[#allocation2 + $0x20] sm:$0xff]
      %v2354 = vld [vmem:[#allocation2 + $0x30] sm:$0xff]
      %v2355 = vld [vmem:[#allocation2 + $0x38] sm:$0xff]
      %v2356 = vld [vmem:[#allocation2 + $0x48] sm:$0xff]
      %v2357 = vld [vmem:[#allocation2 + $0x50] sm:$0xff]
      %v2358 = vld [vmem:[#allocation2 + $0x60] sm:$0xff]
      %v2359 = vld [vmem:[#allocation2 + $0x68] sm:$0xff]
      %v2360 = vld [vmem:[#allocation2 + $0x78] sm:$0xff]
      %v2361 = vld [vmem:[#allocation2 + $0x80] sm:$0xff]
      %v2362 = vld [vmem:[#allocation2 + $0x90] sm:$0xff]
      %v2363 = vld [vmem:[#allocation2 + $0x98] sm:$0xff]
      %v2364 = vld [vmem:[#allocation2 + $0xa8] sm:$0xff]
      %v2365 = vld [vmem:[#allocation2 + $0xb0] sm:$0xff]
      %v2366 = vld [vmem:[#allocation2 + $0xc0] sm:$0xff]
      %v2367 = vld [vmem:[#allocation2 + $0xc8] sm:$0xff]
      %v2368 = vld [vmem:[#allocation2 + $0xd8] sm:$0xff]
      %v2369 = vld [vmem:[#allocation2 + $0xe0] sm:$0xff]
      %v2370 = vld [vmem:[#allocation2 + $0xf0] sm:$0xff]
      %v2371 = vld [vmem:[#allocation2 + $0xf8] sm:$0xff]
      %v2372 = vld [vmem:[#allocation2 + $0x108] sm:$0xff]
      %v2373 = vld [vmem:[#allocation2 + $0x110] sm:$0xff]
      %v2374 = vld [vmem:[#allocation2 + $0x120] sm:$0xff]
      %v2375 = vld [vmem:[#allocation2 + $0x128] sm:$0xff]
      %v2376 = vld [vmem:[#allocation2 + $0x138] sm:$0xff]
      %v2377 = vld [vmem:[#allocation2 + $0x140] sm:$0xff]
      %v2378 = vld [vmem:[#allocation2 + $0x150] sm:$0xff]
      %v2379 = vld [vmem:[#allocation2 + $0x158] sm:$0xff]
      %v2380 = vld [vmem:[#allocation2 + $0x168] sm:$0xff]
      %v2381 = vld [vmem:[#allocation2 + $0x170] sm:$0xff]
      %v2382 = vpack.c.bf16 %v2351, %v2350
      %v2383 = vpack.c.bf16 %v2353, %v2352
      %v2384 = vpack.c.bf16 %v2355, %v2354
      %v2385 = vpack.c.bf16 %v2357, %v2356
      %v2386 = vpack.c.bf16 %v2359, %v2358
      %v2387 = vpack.c.bf16 %v2361, %v2360
      %v2388 = vpack.c.bf16 %v2363, %v2362
      %v2389 = vpack.c.bf16 %v2365, %v2364
      %v2390 = vpack.c.bf16 %v2367, %v2366
      %v2391 = vpack.c.bf16 %v2369, %v2368
      %v2392 = vpack.c.bf16 %v2371, %v2370
      %v2393 = vpack.c.bf16 %v2373, %v2372
      %v2394 = vpack.c.bf16 %v2375, %v2374
      %v2395 = vpack.c.bf16 %v2377, %v2376
      %v2396 = vpack.c.bf16 %v2379, %v2378
      %v2397 = vpack.c.bf16 %v2381, %v2380
      %v2398 = vld [vmem:[#allocation2 + $0x1] sm:$0xff]
      %v2399 = vld [vmem:[#allocation2 + $0x9] sm:$0xff]
      %v2400 = vld [vmem:[#allocation2 + $0x19] sm:$0xff]
      %v2401 = vld [vmem:[#allocation2 + $0x21] sm:$0xff]
      %v2402 = vld [vmem:[#allocation2 + $0x31] sm:$0xff]
      %v2403 = vld [vmem:[#allocation2 + $0x39] sm:$0xff]
      %v2404 = vld [vmem:[#allocation2 + $0x49] sm:$0xff]
      %v2405 = vld [vmem:[#allocation2 + $0x51] sm:$0xff]
      %v2406 = vld [vmem:[#allocation2 + $0x61] sm:$0xff]
      %v2407 = vld [vmem:[#allocation2 + $0x69] sm:$0xff]
      %v2408 = vld [vmem:[#allocation2 + $0x79] sm:$0xff]
      %v2409 = vld [vmem:[#allocation2 + $0x81] sm:$0xff]
      %v2410 = vld [vmem:[#allocation2 + $0x91] sm:$0xff]
      %v2411 = vld [vmem:[#allocation2 + $0x99] sm:$0xff]
      %v2412 = vld [vmem:[#allocation2 + $0xa9] sm:$0xff]
      %v2413 = vld [vmem:[#allocation2 + $0xb1] sm:$0xff]
      %v2414 = vld [vmem:[#allocation2 + $0xc1] sm:$0xff]
      %v2415 = vld [vmem:[#allocation2 + $0xc9] sm:$0xff]
      %v2416 = vld [vmem:[#allocation2 + $0xd9] sm:$0xff]
      %v2417 = vld [vmem:[#allocation2 + $0xe1] sm:$0xff]
      %v2418 = vld [vmem:[#allocation2 + $0xf1] sm:$0xff]
      %v2419 = vld [vmem:[#allocation2 + $0xf9] sm:$0xff]
      %v2420 = vld [vmem:[#allocation2 + $0x109] sm:$0xff]
      %v2421 = vld [vmem:[#allocation2 + $0x111] sm:$0xff]
      %v2422 = vld [vmem:[#allocation2 + $0x121] sm:$0xff]
      %v2423 = vld [vmem:[#allocation2 + $0x129] sm:$0xff]
      %v2424 = vld [vmem:[#allocation2 + $0x139] sm:$0xff]
      %v2425 = vld [vmem:[#allocation2 + $0x141] sm:$0xff]
      %v2426 = vld [vmem:[#allocation2 + $0x151] sm:$0xff]
      %v2427 = vld [vmem:[#allocation2 + $0x159] sm:$0xff]
      %v2428 = vld [vmem:[#allocation2 + $0x169] sm:$0xff]
      %v2429 = vld [vmem:[#allocation2 + $0x171] sm:$0xff]
      %v2430 = vpack.c.bf16 %v2399, %v2398
      %v2431 = vpack.c.bf16 %v2401, %v2400
      %v2432 = vpack.c.bf16 %v2403, %v2402
      %v2433 = vpack.c.bf16 %v2405, %v2404
      %v2434 = vpack.c.bf16 %v2407, %v2406
      %v2435 = vpack.c.bf16 %v2409, %v2408
      %v2436 = vpack.c.bf16 %v2411, %v2410
      %v2437 = vpack.c.bf16 %v2413, %v2412
      %v2438 = vpack.c.bf16 %v2415, %v2414
      %v2439 = vpack.c.bf16 %v2417, %v2416
      %v2440 = vpack.c.bf16 %v2419, %v2418
      %v2441 = vpack.c.bf16 %v2421, %v2420
      %v2442 = vpack.c.bf16 %v2423, %v2422
      %v2443 = vpack.c.bf16 %v2425, %v2424
      %v2444 = vpack.c.bf16 %v2427, %v2426
      %v2445 = vpack.c.bf16 %v2429, %v2428
      %v2446 = vld [vmem:[#allocation2 + $0x2] sm:$0xff]
      %v2447 = vld [vmem:[#allocation2 + $0xa] sm:$0xff]
      %v2448 = vld [vmem:[#allocation2 + $0x1a] sm:$0xff]
      %v2449 = vld [vmem:[#allocation2 + $0x22] sm:$0xff]
      %v2450 = vld [vmem:[#allocation2 + $0x32] sm:$0xff]
      %v2451 = vld [vmem:[#allocation2 + $0x3a] sm:$0xff]
      %v2452 = vld [vmem:[#allocation2 + $0x4a] sm:$0xff]
      %v2453 = vld [vmem:[#allocation2 + $0x52] sm:$0xff]
      %v2454 = vld [vmem:[#allocation2 + $0x62] sm:$0xff]
      %v2455 = vld [vmem:[#allocation2 + $0x6a] sm:$0xff]
      %v2456 = vld [vmem:[#allocation2 + $0x7a] sm:$0xff]
      %v2457 = vld [vmem:[#allocation2 + $0x82] sm:$0xff]
      %v2458 = vld [vmem:[#allocation2 + $0x92] sm:$0xff]
      %v2459 = vld [vmem:[#allocation2 + $0x9a] sm:$0xff]
      %v2460 = vld [vmem:[#allocation2 + $0xaa] sm:$0xff]
      %v2461 = vld [vmem:[#allocation2 + $0xb2] sm:$0xff]
      %v2462 = vld [vmem:[#allocation2 + $0xc2] sm:$0xff]
      %v2463 = vld [vmem:[#allocation2 + $0xca] sm:$0xff]
      %v2464 = vld [vmem:[#allocation2 + $0xda] sm:$0xff]
      %v2465 = vld [vmem:[#allocation2 + $0xe2] sm:$0xff]
      %v2466 = vld [vmem:[#allocation2 + $0xf2] sm:$0xff]
      %v2467 = vld [vmem:[#allocation2 + $0xfa] sm:$0xff]
      %v2468 = vld [vmem:[#allocation2 + $0x10a] sm:$0xff]
      %v2469 = vld [vmem:[#allocation2 + $0x112] sm:$0xff]
      %v2470 = vld [vmem:[#allocation2 + $0x122] sm:$0xff]
      %v2471 = vld [vmem:[#allocation2 + $0x12a] sm:$0xff]
      %v2472 = vld [vmem:[#allocation2 + $0x13a] sm:$0xff]
      %v2473 = vld [vmem:[#allocation2 + $0x142] sm:$0xff]
      %v2474 = vld [vmem:[#allocation2 + $0x152] sm:$0xff]
      %v2475 = vld [vmem:[#allocation2 + $0x15a] sm:$0xff]
      %v2476 = vld [vmem:[#allocation2 + $0x16a] sm:$0xff]
      %v2477 = vld [vmem:[#allocation2 + $0x172] sm:$0xff]
      %v2478 = vpack.c.bf16 %v2447, %v2446
      %v2479 = vpack.c.bf16 %v2449, %v2448
      %v2480 = vpack.c.bf16 %v2451, %v2450
      %v2481 = vpack.c.bf16 %v2453, %v2452
      %v2482 = vpack.c.bf16 %v2455, %v2454
      %v2483 = vpack.c.bf16 %v2457, %v2456
      %v2484 = vpack.c.bf16 %v2459, %v2458
      %v2485 = vpack.c.bf16 %v2461, %v2460
      %v2486 = vpack.c.bf16 %v2463, %v2462
      %v2487 = vpack.c.bf16 %v2465, %v2464
      %v2488 = vpack.c.bf16 %v2467, %v2466
      %v2489 = vpack.c.bf16 %v2469, %v2468
      %v2490 = vpack.c.bf16 %v2471, %v2470
      %v2491 = vpack.c.bf16 %v2473, %v2472
      %v2492 = vpack.c.bf16 %v2475, %v2474
      %v2493 = vpack.c.bf16 %v2477, %v2476
      %v2494 = vld [vmem:[%s262] sm:$0xff]
      %v2495 = vld [vmem:[%s262 + $0x8] sm:$0xff]
      %v2496 = vld [vmem:[%s262 + $0x18] sm:$0xff]
      %v2497 = vld [vmem:[%s262 + $0x20] sm:$0xff]
      %v2498 = vld [vmem:[%s262 + $0x30] sm:$0xff]
      %v2499 = vld [vmem:[%s262 + $0x38] sm:$0xff]
      %v2500 = vld [vmem:[%s262 + $0x48] sm:$0xff]
      %v2501 = vld [vmem:[%s262 + $0x50] sm:$0xff]
      %v2502 = vld [vmem:[%s262 + $0x60] sm:$0xff]
      %v2503 = vld [vmem:[%s262 + $0x68] sm:$0xff]
      %v2504 = vld [vmem:[%s262 + $0x78] sm:$0xff]
      %v2505 = vld [vmem:[%s262 + $0x80] sm:$0xff]
      %v2506 = vld [vmem:[%s262 + $0x90] sm:$0xff]
      %v2507 = vld [vmem:[%s262 + $0x98] sm:$0xff]
      %v2508 = vld [vmem:[%s262 + $0xa8] sm:$0xff]
      %v2509 = vld [vmem:[%s262 + $0xb0] sm:$0xff]
      %v2510 = vld [vmem:[%s262 + $0xc0] sm:$0xff]
      %v2511 = vld [vmem:[%s262 + $0xc8] sm:$0xff]
      %v2512 = vld [vmem:[%s262 + $0xd8] sm:$0xff]
      %v2513 = vld [vmem:[%s262 + $0xe0] sm:$0xff]
      %v2514 = vld [vmem:[%s262 + $0xf0] sm:$0xff]
      %v2515 = vld [vmem:[%s262 + $0xf8] sm:$0xff]
      %v2516 = vld [vmem:[%s262 + $0x108] sm:$0xff]
      %v2517 = vld [vmem:[%s262 + $0x110] sm:$0xff]
      %v2518 = vld [vmem:[%s262 + $0x120] sm:$0xff]
      %v2519 = vld [vmem:[%s262 + $0x128] sm:$0xff]
      %v2520 = vld [vmem:[%s262 + $0x138] sm:$0xff]
      %v2521 = vld [vmem:[%s262 + $0x140] sm:$0xff]
      %v2522 = vld [vmem:[%s262 + $0x150] sm:$0xff]
      %v2523 = vld [vmem:[%s262 + $0x158] sm:$0xff]
      %v2524 = vld [vmem:[%s262 + $0x168] sm:$0xff]
      %v2525 = vld [vmem:[%s262 + $0x170] sm:$0xff]
      %v2526 = vpack.c.bf16 %v2495, %v2494
      %v2527 = vpack.c.bf16 %v2497, %v2496
      %v2528 = vpack.c.bf16 %v2499, %v2498
      %v2529 = vpack.c.bf16 %v2501, %v2500
      %v2530 = vpack.c.bf16 %v2503, %v2502
      %v2531 = vpack.c.bf16 %v2505, %v2504
      %v2532 = vpack.c.bf16 %v2507, %v2506
      %v2533 = vpack.c.bf16 %v2509, %v2508
      %v2534 = vpack.c.bf16 %v2511, %v2510
      %v2535 = vpack.c.bf16 %v2513, %v2512
      %v2536 = vpack.c.bf16 %v2515, %v2514
      %v2537 = vpack.c.bf16 %v2517, %v2516
      %v2538 = vpack.c.bf16 %v2519, %v2518
      %v2539 = vpack.c.bf16 %v2521, %v2520
      %v2540 = vpack.c.bf16 %v2523, %v2522
      %v2541 = vpack.c.bf16 %v2525, %v2524
      %v2542 = vld [vmem:[%s262 + $0x1] sm:$0xff]
      %v2543 = vld [vmem:[%s262 + $0x9] sm:$0xff]
      %v2544 = vld [vmem:[%s262 + $0x19] sm:$0xff]
      %v2545 = vld [vmem:[%s262 + $0x21] sm:$0xff]
      %v2546 = vld [vmem:[%s262 + $0x31] sm:$0xff]
      %v2547 = vld [vmem:[%s262 + $0x39] sm:$0xff]
      %v2548 = vld [vmem:[%s262 + $0x49] sm:$0xff]
      %v2549 = vld [vmem:[%s262 + $0x51] sm:$0xff]
      %v2550 = vld [vmem:[%s262 + $0x61] sm:$0xff]
      %v2551 = vld [vmem:[%s262 + $0x69] sm:$0xff]
      %v2552 = vld [vmem:[%s262 + $0x79] sm:$0xff]
      %v2553 = vld [vmem:[%s262 + $0x81] sm:$0xff]
      %v2554 = vld [vmem:[%s262 + $0x91] sm:$0xff]
      %v2555 = vld [vmem:[%s262 + $0x99] sm:$0xff]
      %v2556 = vld [vmem:[%s262 + $0xa9] sm:$0xff]
      %v2557 = vld [vmem:[%s262 + $0xb1] sm:$0xff]
      %v2558 = vld [vmem:[%s262 + $0xc1] sm:$0xff]
      %v2559 = vld [vmem:[%s262 + $0xc9] sm:$0xff]
      %v2560 = vld [vmem:[%s262 + $0xd9] sm:$0xff]
      %v2561 = vld [vmem:[%s262 + $0xe1] sm:$0xff]
      %v2562 = vld [vmem:[%s262 + $0xf1] sm:$0xff]
      %v2563 = vld [vmem:[%s262 + $0xf9] sm:$0xff]
      %v2564 = vld [vmem:[%s262 + $0x109] sm:$0xff]
      %v2565 = vld [vmem:[%s262 + $0x111] sm:$0xff]
      %v2566 = vld [vmem:[%s262 + $0x121] sm:$0xff]
      %v2567 = vld [vmem:[%s262 + $0x129] sm:$0xff]
      %v2568 = vld [vmem:[%s262 + $0x139] sm:$0xff]
      %v2569 = vld [vmem:[%s262 + $0x141] sm:$0xff]
      %v2570 = vld [vmem:[%s262 + $0x151] sm:$0xff]
      %v2571 = vld [vmem:[%s262 + $0x159] sm:$0xff]
      %v2572 = vld [vmem:[%s262 + $0x169] sm:$0xff]
      %v2573 = vld [vmem:[%s262 + $0x171] sm:$0xff]
      %v2574 = vpack.c.bf16 %v2543, %v2542
      %v2575 = vpack.c.bf16 %v2545, %v2544
      %v2576 = vpack.c.bf16 %v2547, %v2546
      %v2577 = vpack.c.bf16 %v2549, %v2548
      %v2578 = vpack.c.bf16 %v2551, %v2550
      %v2579 = vpack.c.bf16 %v2553, %v2552
      %v2580 = vpack.c.bf16 %v2555, %v2554
      %v2581 = vpack.c.bf16 %v2557, %v2556
      %v2582 = vpack.c.bf16 %v2559, %v2558
      %v2583 = vpack.c.bf16 %v2561, %v2560
      %v2584 = vpack.c.bf16 %v2563, %v2562
      %v2585 = vpack.c.bf16 %v2565, %v2564
      %v2586 = vpack.c.bf16 %v2567, %v2566
      %v2587 = vpack.c.bf16 %v2569, %v2568
      %v2588 = vpack.c.bf16 %v2571, %v2570
      %v2589 = vpack.c.bf16 %v2573, %v2572
      %v2590 = vld [vmem:[%s262 + $0x2] sm:$0xff]
      %v2591 = vld [vmem:[%s262 + $0xa] sm:$0xff]
      %v2592 = vld [vmem:[%s262 + $0x1a] sm:$0xff]
      %v2593 = vld [vmem:[%s262 + $0x22] sm:$0xff]
      %v2594 = vld [vmem:[%s262 + $0x32] sm:$0xff]
      %v2595 = vld [vmem:[%s262 + $0x3a] sm:$0xff]
      %v2596 = vld [vmem:[%s262 + $0x4a] sm:$0xff]
      %v2597 = vld [vmem:[%s262 + $0x52] sm:$0xff]
      %v2598 = vld [vmem:[%s262 + $0x62] sm:$0xff]
      %v2599 = vld [vmem:[%s262 + $0x6a] sm:$0xff]
      %v2600 = vld [vmem:[%s262 + $0x7a] sm:$0xff]
      %v2601 = vld [vmem:[%s262 + $0x82] sm:$0xff]
      %v2602 = vld [vmem:[%s262 + $0x92] sm:$0xff]
      %v2603 = vld [vmem:[%s262 + $0x9a] sm:$0xff]
      %v2604 = vld [vmem:[%s262 + $0xaa] sm:$0xff]
      %v2605 = vld [vmem:[%s262 + $0xb2] sm:$0xff]
      %v2606 = vld [vmem:[%s262 + $0xc2] sm:$0xff]
      %v2607 = vld [vmem:[%s262 + $0xca] sm:$0xff]
      %v2608 = vld [vmem:[%s262 + $0xda] sm:$0xff]
      %v2609 = vld [vmem:[%s262 + $0xe2] sm:$0xff]
      %v2610 = vld [vmem:[%s262 + $0xf2] sm:$0xff]
      %v2611 = vld [vmem:[%s262 + $0xfa] sm:$0xff]
      %v2612 = vld [vmem:[%s262 + $0x10a] sm:$0xff]
      %v2613 = vld [vmem:[%s262 + $0x112] sm:$0xff]
      %v2614 = vld [vmem:[%s262 + $0x122] sm:$0xff]
      %v2615 = vld [vmem:[%s262 + $0x12a] sm:$0xff]
      %v2616 = vld [vmem:[%s262 + $0x13a] sm:$0xff]
      %v2617 = vld [vmem:[%s262 + $0x142] sm:$0xff]
      %v2618 = vld [vmem:[%s262 + $0x152] sm:$0xff]
      %v2619 = vld [vmem:[%s262 + $0x15a] sm:$0xff]
      %v2620 = vld [vmem:[%s262 + $0x16a] sm:$0xff]
      %v2621 = vld [vmem:[%s262 + $0x172] sm:$0xff]
      %v2622 = vpack.c.bf16 %v2591, %v2590
      %v2623 = vpack.c.bf16 %v2593, %v2592
      %v2624 = vpack.c.bf16 %v2595, %v2594
      %v2625 = vpack.c.bf16 %v2597, %v2596
      %v2626 = vpack.c.bf16 %v2599, %v2598
      %v2627 = vpack.c.bf16 %v2601, %v2600
      %v2628 = vpack.c.bf16 %v2603, %v2602
      %v2629 = vpack.c.bf16 %v2605, %v2604
      %v2630 = vpack.c.bf16 %v2607, %v2606
      %v2631 = vpack.c.bf16 %v2609, %v2608
      %v2632 = vpack.c.bf16 %v2611, %v2610
      %v2633 = vpack.c.bf16 %v2613, %v2612
      %v2634 = vpack.c.bf16 %v2615, %v2614
      %v2635 = vpack.c.bf16 %v2617, %v2616
      %v2636 = vpack.c.bf16 %v2619, %v2618
      %v2637 = vpack.c.bf16 %v2621, %v2620
      %v2638 = vld [vmem:[%s583] sm:$0xff]
      %v2639 = vld [vmem:[%s583 + $0x8] sm:$0xff]
      %v2640 = vld [vmem:[%s583 + $0x18] sm:$0xff]
      %v2641 = vld [vmem:[%s583 + $0x20] sm:$0xff]
      %v2642 = vld [vmem:[%s583 + $0x30] sm:$0xff]
      %v2643 = vld [vmem:[%s583 + $0x38] sm:$0xff]
      %v2644 = vld [vmem:[%s583 + $0x48] sm:$0xff]
      %v2645 = vld [vmem:[%s583 + $0x50] sm:$0xff]
      %v2646 = vld [vmem:[%s583 + $0x60] sm:$0xff]
      %v2647 = vld [vmem:[%s583 + $0x68] sm:$0xff]
      %v2648 = vld [vmem:[%s583 + $0x78] sm:$0xff]
      %v2649 = vld [vmem:[%s583 + $0x80] sm:$0xff]
      %v2650 = vld [vmem:[%s583 + $0x90] sm:$0xff]
      %v2651 = vld [vmem:[%s583 + $0x98] sm:$0xff]
      %v2652 = vld [vmem:[%s583 + $0xa8] sm:$0xff]
      %v2653 = vld [vmem:[%s583 + $0xb0] sm:$0xff]
      %v2654 = vld [vmem:[%s583 + $0xc0] sm:$0xff]
      %v2655 = vld [vmem:[%s583 + $0xc8] sm:$0xff]
      %v2656 = vld [vmem:[%s583 + $0xd8] sm:$0xff]
      %v2657 = vld [vmem:[%s583 + $0xe0] sm:$0xff]
      %v2658 = vld [vmem:[%s583 + $0xf0] sm:$0xff]
      %v2659 = vld [vmem:[%s583 + $0xf8] sm:$0xff]
      %v2660 = vld [vmem:[%s583 + $0x108] sm:$0xff]
      %v2661 = vld [vmem:[%s583 + $0x110] sm:$0xff]
      %v2662 = vld [vmem:[%s583 + $0x120] sm:$0xff]
      %v2663 = vld [vmem:[%s583 + $0x128] sm:$0xff]
      %v2664 = vld [vmem:[%s583 + $0x138] sm:$0xff]
      %v2665 = vld [vmem:[%s583 + $0x140] sm:$0xff]
      %v2666 = vld [vmem:[%s583 + $0x150] sm:$0xff]
      %v2667 = vld [vmem:[%s583 + $0x158] sm:$0xff]
      %v2668 = vld [vmem:[%s583 + $0x168] sm:$0xff]
      %v2669 = vld [vmem:[%s583 + $0x170] sm:$0xff]
      %v2670 = vpack.c.bf16 %v2639, %v2638
      %v2671 = vpack.c.bf16 %v2641, %v2640
      %v2672 = vpack.c.bf16 %v2643, %v2642
      %v2673 = vpack.c.bf16 %v2645, %v2644
      %v2674 = vpack.c.bf16 %v2647, %v2646
      %v2675 = vpack.c.bf16 %v2649, %v2648
      %v2676 = vpack.c.bf16 %v2651, %v2650
      %v2677 = vpack.c.bf16 %v2653, %v2652
      %v2678 = vpack.c.bf16 %v2655, %v2654
      %v2679 = vpack.c.bf16 %v2657, %v2656
      %v2680 = vpack.c.bf16 %v2659, %v2658
      %v2681 = vpack.c.bf16 %v2661, %v2660
      %v2682 = vpack.c.bf16 %v2663, %v2662
      %v2683 = vpack.c.bf16 %v2665, %v2664
      %v2684 = vpack.c.bf16 %v2667, %v2666
      %v2685 = vpack.c.bf16 %v2669, %v2668
      %v2686 = vld [vmem:[%s583 + $0x1] sm:$0xff]
      %v2687 = vld [vmem:[%s583 + $0x9] sm:$0xff]
      %v2688 = vld [vmem:[%s583 + $0x19] sm:$0xff]
      %v2689 = vld [vmem:[%s583 + $0x21] sm:$0xff]
      %v2690 = vld [vmem:[%s583 + $0x31] sm:$0xff]
      %v2691 = vld [vmem:[%s583 + $0x39] sm:$0xff]
      %v2692 = vld [vmem:[%s583 + $0x49] sm:$0xff]
      %v2693 = vld [vmem:[%s583 + $0x51] sm:$0xff]
      %v2694 = vld [vmem:[%s583 + $0x61] sm:$0xff]
      %v2695 = vld [vmem:[%s583 + $0x69] sm:$0xff]
      %v2696 = vld [vmem:[%s583 + $0x79] sm:$0xff]
      %v2697 = vld [vmem:[%s583 + $0x81] sm:$0xff]
      %v2698 = vld [vmem:[%s583 + $0x91] sm:$0xff]
      %v2699 = vld [vmem:[%s583 + $0x99] sm:$0xff]
      %v2700 = vld [vmem:[%s583 + $0xa9] sm:$0xff]
      %v2701 = vld [vmem:[%s583 + $0xb1] sm:$0xff]
      %v2702 = vld [vmem:[%s583 + $0xc1] sm:$0xff]
      %v2703 = vld [vmem:[%s583 + $0xc9] sm:$0xff]
      %v2704 = vld [vmem:[%s583 + $0xd9] sm:$0xff]
      %v2705 = vld [vmem:[%s583 + $0xe1] sm:$0xff]
      %v2706 = vld [vmem:[%s583 + $0xf1] sm:$0xff]
      %v2707 = vld [vmem:[%s583 + $0xf9] sm:$0xff]
      %v2708 = vld [vmem:[%s583 + $0x109] sm:$0xff]
      %v2709 = vld [vmem:[%s583 + $0x111] sm:$0xff]
      %v2710 = vld [vmem:[%s583 + $0x121] sm:$0xff]
      %v2711 = vld [vmem:[%s583 + $0x129] sm:$0xff]
      %v2712 = vld [vmem:[%s583 + $0x139] sm:$0xff]
      %v2713 = vld [vmem:[%s583 + $0x141] sm:$0xff]
      %v2714 = vld [vmem:[%s583 + $0x151] sm:$0xff]
      %v2715 = vld [vmem:[%s583 + $0x159] sm:$0xff]
      %v2716 = vld [vmem:[%s583 + $0x169] sm:$0xff]
      %v2717 = vld [vmem:[%s583 + $0x171] sm:$0xff]
      %v2718 = vpack.c.bf16 %v2687, %v2686
      %v2719 = vpack.c.bf16 %v2689, %v2688
      %v2720 = vpack.c.bf16 %v2691, %v2690
      %v2721 = vpack.c.bf16 %v2693, %v2692
      %v2722 = vpack.c.bf16 %v2695, %v2694
      %v2723 = vpack.c.bf16 %v2697, %v2696
      %v2724 = vpack.c.bf16 %v2699, %v2698
      %v2725 = vpack.c.bf16 %v2701, %v2700
      %v2726 = vpack.c.bf16 %v2703, %v2702
      %v2727 = vpack.c.bf16 %v2705, %v2704
      %v2728 = vpack.c.bf16 %v2707, %v2706
      %v2729 = vpack.c.bf16 %v2709, %v2708
      %v2730 = vpack.c.bf16 %v2711, %v2710
      %v2731 = vpack.c.bf16 %v2713, %v2712
      %v2732 = vpack.c.bf16 %v2715, %v2714
      %v2733 = vpack.c.bf16 %v2717, %v2716
      %v2734 = vld [vmem:[%s583 + $0x2] sm:$0xff]
      %v2735 = vld [vmem:[%s583 + $0xa] sm:$0xff]
      %v2736 = vld [vmem:[%s583 + $0x1a] sm:$0xff]
      %v2737 = vld [vmem:[%s583 + $0x22] sm:$0xff]
      %v2738 = vld [vmem:[%s583 + $0x32] sm:$0xff]
      %v2739 = vld [vmem:[%s583 + $0x3a] sm:$0xff]
      %v2740 = vld [vmem:[%s583 + $0x4a] sm:$0xff]
      %v2741 = vld [vmem:[%s583 + $0x52] sm:$0xff]
      %v2742 = vld [vmem:[%s583 + $0x62] sm:$0xff]
      %v2743 = vld [vmem:[%s583 + $0x6a] sm:$0xff]
      %v2744 = vld [vmem:[%s583 + $0x7a] sm:$0xff]
      %v2745 = vld [vmem:[%s583 + $0x82] sm:$0xff]
      %v2746 = vld [vmem:[%s583 + $0x92] sm:$0xff]
      %v2747 = vld [vmem:[%s583 + $0x9a] sm:$0xff]
      %v2748 = vld [vmem:[%s583 + $0xaa] sm:$0xff]
      %v2749 = vld [vmem:[%s583 + $0xb2] sm:$0xff]
      %v2750 = vld [vmem:[%s583 + $0xc2] sm:$0xff]
      %v2751 = vld [vmem:[%s583 + $0xca] sm:$0xff]
      %v2752 = vld [vmem:[%s583 + $0xda] sm:$0xff]
      %v2753 = vld [vmem:[%s583 + $0xe2] sm:$0xff]
      %v2754 = vld [vmem:[%s583 + $0xf2] sm:$0xff]
      %v2755 = vld [vmem:[%s583 + $0xfa] sm:$0xff]
      %v2756 = vld [vmem:[%s583 + $0x10a] sm:$0xff]
      %v2757 = vld [vmem:[%s583 + $0x112] sm:$0xff]
      %v2758 = vld [vmem:[%s583 + $0x122] sm:$0xff]
      %v2759 = vld [vmem:[%s583 + $0x12a] sm:$0xff]
      %v2760 = vld [vmem:[%s583 + $0x13a] sm:$0xff]
      %v2761 = vld [vmem:[%s583 + $0x142] sm:$0xff]
      %v2762 = vld [vmem:[%s583 + $0x152] sm:$0xff]
      %v2763 = vld [vmem:[%s583 + $0x15a] sm:$0xff]
      %v2764 = vld [vmem:[%s583 + $0x16a] sm:$0xff]
      %v2765 = vld [vmem:[%s583 + $0x172] sm:$0xff]
      %v2766 = vpack.c.bf16 %v2735, %v2734
      %v2767 = vpack.c.bf16 %v2737, %v2736
      %v2768 = vpack.c.bf16 %v2739, %v2738
      %v2769 = vpack.c.bf16 %v2741, %v2740
      %v2770 = vpack.c.bf16 %v2743, %v2742
      %v2771 = vpack.c.bf16 %v2745, %v2744
      %v2772 = vpack.c.bf16 %v2747, %v2746
      %v2773 = vpack.c.bf16 %v2749, %v2748
      %v2774 = vpack.c.bf16 %v2751, %v2750
      %v2775 = vpack.c.bf16 %v2753, %v2752
      %v2776 = vpack.c.bf16 %v2755, %v2754
      %v2777 = vpack.c.bf16 %v2757, %v2756
      %v2778 = vpack.c.bf16 %v2759, %v2758
      %v2779 = vpack.c.bf16 %v2761, %v2760
      %v2780 = vpack.c.bf16 %v2763, %v2762
      %v2781 = vpack.c.bf16 %v2765, %v2764
      %v2782 = vld [vmem:[%s2] sm:$0xf]
      %v2783 = vld [vmem:[%s2 + $0x4] sm:$0xf]
      %v2784 = vld [vmem:[%s2 + $0x8] sm:$0xf]
      %v2785 = vld [vmem:[%s2 + $0xc] sm:$0xf]
      %v2786 = vld [vmem:[%s2 + $0x10] sm:$0xf]
      %v2787 = vld [vmem:[%s2 + $0x14] sm:$0xf]
      %v2788 = vld [vmem:[%s2 + $0x18] sm:$0xf]
      %v2789 = vld [vmem:[%s2 + $0x1c] sm:$0xf]
      %v2790 = vld [vmem:[%s2 + $0x20] sm:$0xf]
      %v2791 = vld [vmem:[%s2 + $0x24] sm:$0xf]
      %v2792 = vld [vmem:[%s2 + $0x28] sm:$0xf]
      %v2793 = vld [vmem:[%s2 + $0x2c] sm:$0xf]
      %v2794 = vld [vmem:[%s2 + $0x30] sm:$0xf]
      %v2795 = vld [vmem:[%s2 + $0x34] sm:$0xf]
      %v2796 = vld [vmem:[%s2 + $0x38] sm:$0xf]
      %v2797 = vld [vmem:[%s2 + $0x3c] sm:$0xf]
      %v2798 = vld [vmem:[%s2 + $0x40] sm:$0xf]
      %v2799 = vld [vmem:[%s2 + $0x44] sm:$0xf]
      %v2800 = vld [vmem:[%s2 + $0x48] sm:$0xf]
      %v2801 = vld [vmem:[%s2 + $0x4c] sm:$0xf]
      %v2802 = vld [vmem:[%s2 + $0x50] sm:$0xf]
      %v2803 = vld [vmem:[%s2 + $0x54] sm:$0xf]
      %v2804 = vld [vmem:[%s2 + $0x58] sm:$0xf]
      %v2805 = vld [vmem:[%s2 + $0x5c] sm:$0xf]
      %v2806 = vld [vmem:[%s2 + $0x60] sm:$0xf]
      %v2807 = vld [vmem:[%s2 + $0x64] sm:$0xf]
      %v2808 = vld [vmem:[%s2 + $0x68] sm:$0xf]
      %v2809 = vld [vmem:[%s2 + $0x6c] sm:$0xf]
      %v2810 = vld [vmem:[%s2 + $0x70] sm:$0xf]
      %v2811 = vld [vmem:[%s2 + $0x74] sm:$0xf]
      %v2812 = vld [vmem:[%s2 + $0x78] sm:$0xf]
      %v2813 = vld [vmem:[%s2 + $0x7c] sm:$0xf]
      %v2814 = vld [vmem:[%s2 + $0x80] sm:$0xf]
      %v2815 = vld [vmem:[%s2 + $0x84] sm:$0xf]
      %v2816 = vld [vmem:[%s2 + $0x88] sm:$0xf]
      %v2817 = vld [vmem:[%s2 + $0x8c] sm:$0xf]
      %v2818 = vld [vmem:[%s2 + $0x90] sm:$0xf]
      %v2819 = vld [vmem:[%s2 + $0x94] sm:$0xf]
      %v2820 = vld [vmem:[%s2 + $0x98] sm:$0xf]
      %v2821 = vld [vmem:[%s2 + $0x9c] sm:$0xf]
      %v2822 = vld [vmem:[%s2 + $0xa0] sm:$0xf]
      %v2823 = vld [vmem:[%s2 + $0xa4] sm:$0xf]
      %v2824 = vld [vmem:[%s2 + $0xa8] sm:$0xf]
      %v2825 = vld [vmem:[%s2 + $0xac] sm:$0xf]
      %v2826 = vld [vmem:[%s2 + $0xb0] sm:$0xf]
      %v2827 = vld [vmem:[%s2 + $0xb4] sm:$0xf]
      %v2828 = vld [vmem:[%s2 + $0xb8] sm:$0xf]
      %v2829 = vld [vmem:[%s2 + $0xbc] sm:$0xf]
      %v2830 = vld [vmem:[%s2 + $0xc0] sm:$0xf]
      %v2831 = vld [vmem:[%s2 + $0xc4] sm:$0xf]
      %v2832 = vld [vmem:[%s2 + $0xc8] sm:$0xf]
      %v2833 = vld [vmem:[%s2 + $0xcc] sm:$0xf]
      %v2834 = vld [vmem:[%s2 + $0xd0] sm:$0xf]
      %v2835 = vld [vmem:[%s2 + $0xd4] sm:$0xf]
      %v2836 = vld [vmem:[%s2 + $0xd8] sm:$0xf]
      %v2837 = vld [vmem:[%s2 + $0xdc] sm:$0xf]
      %v2838 = vld [vmem:[%s2 + $0xe0] sm:$0xf]
      %v2839 = vld [vmem:[%s2 + $0xe4] sm:$0xf]
      %v2840 = vld [vmem:[%s2 + $0xe8] sm:$0xf]
      %v2841 = vld [vmem:[%s2 + $0xec] sm:$0xf]
      %v2842 = vld [vmem:[%s2 + $0xf0] sm:$0xf]
      %v2843 = vld [vmem:[%s2 + $0xf4] sm:$0xf]
      %v2844 = vld [vmem:[%s2 + $0xf8] sm:$0xf]
      %v2845 = vld [vmem:[%s2 + $0xfc] sm:$0xf]
      %v2846 = vld [vmem:[%s2 + $0x100] sm:$0xf]
      %v2847 = vld [vmem:[%s2 + $0x104] sm:$0xf]
      %v2848 = vld [vmem:[%s2 + $0x108] sm:$0xf]
      %v2849 = vld [vmem:[%s2 + $0x10c] sm:$0xf]
      %v2850 = vld [vmem:[%s2 + $0x110] sm:$0xf]
      %v2851 = vld [vmem:[%s2 + $0x114] sm:$0xf]
      %v2852 = vld [vmem:[%s2 + $0x118] sm:$0xf]
      %v2853 = vld [vmem:[%s2 + $0x11c] sm:$0xf]
      %v2854 = vld [vmem:[%s2 + $0x120] sm:$0xf]
      %v2855 = vld [vmem:[%s2 + $0x124] sm:$0xf]
      %v2856 = vld [vmem:[%s2 + $0x128] sm:$0xf]
      %v2857 = vld [vmem:[%s2 + $0x12c] sm:$0xf]
      %v2858 = vld [vmem:[%s2 + $0x130] sm:$0xf]
      %v2859 = vld [vmem:[%s2 + $0x134] sm:$0xf]
      %v2860 = vld [vmem:[%s2 + $0x138] sm:$0xf]
      %v2861 = vld [vmem:[%s2 + $0x13c] sm:$0xf]
      %v2862 = vld [vmem:[%s2 + $0x140] sm:$0xf]
      %v2863 = vld [vmem:[%s2 + $0x144] sm:$0xf]
      %v2864 = vld [vmem:[%s2 + $0x148] sm:$0xf]
      %v2865 = vld [vmem:[%s2 + $0x14c] sm:$0xf]
      %v2866 = vld [vmem:[%s2 + $0x150] sm:$0xf]
      %v2867 = vld [vmem:[%s2 + $0x154] sm:$0xf]
      %v2868 = vld [vmem:[%s2 + $0x158] sm:$0xf]
      %v2869 = vld [vmem:[%s2 + $0x15c] sm:$0xf]
      %v2870 = vld [vmem:[%s2 + $0x160] sm:$0xf]
      %v2871 = vld [vmem:[%s2 + $0x164] sm:$0xf]
      %v2872 = vld [vmem:[%s2 + $0x168] sm:$0xf]
      %v2873 = vld [vmem:[%s2 + $0x16c] sm:$0xf]
      %v2874 = vld [vmem:[%s2 + $0x170] sm:$0xf]
      %v2875 = vld [vmem:[%s2 + $0x174] sm:$0xf]
      %v2876 = vld [vmem:[%s2 + $0x178] sm:$0xf]
      %v2877 = vld [vmem:[%s2 + $0x17c] sm:$0xf]
      %v2878 = vld [vmem:[%s2 + $0x180] sm:$0xf]
      %v2879 = vld [vmem:[%s2 + $0x184] sm:$0xf]
      %v2880 = vld [vmem:[%s2 + $0x188] sm:$0xf]
      %v2881 = vld [vmem:[%s2 + $0x18c] sm:$0xf]
      %v2882 = vld [vmem:[%s2 + $0x190] sm:$0xf]
      %v2883 = vld [vmem:[%s2 + $0x194] sm:$0xf]
      %v2884 = vld [vmem:[%s2 + $0x198] sm:$0xf]
      %v2885 = vld [vmem:[%s2 + $0x19c] sm:$0xf]
      %v2886 = vld [vmem:[%s2 + $0x1a0] sm:$0xf]
      %v2887 = vld [vmem:[%s2 + $0x1a4] sm:$0xf]
      %v2888 = vld [vmem:[%s2 + $0x1a8] sm:$0xf]
      %v2889 = vld [vmem:[%s2 + $0x1ac] sm:$0xf]
      %v2890 = vld [vmem:[%s2 + $0x1b0] sm:$0xf]
      %v2891 = vld [vmem:[%s2 + $0x1b4] sm:$0xf]
      %v2892 = vld [vmem:[%s2 + $0x1b8] sm:$0xf]
      %v2893 = vld [vmem:[%s2 + $0x1bc] sm:$0xf]
      %v2894 = vld [vmem:[%s2 + $0x1c0] sm:$0xf]
      %v2895 = vld [vmem:[%s2 + $0x1c4] sm:$0xf]
      %v2896 = vld [vmem:[%s2 + $0x1c8] sm:$0xf]
      %v2897 = vld [vmem:[%s2 + $0x1cc] sm:$0xf]
      %v2898 = vld [vmem:[%s2 + $0x1d0] sm:$0xf]
      %v2899 = vld [vmem:[%s2 + $0x1d4] sm:$0xf]
      %v2900 = vld [vmem:[%s2 + $0x1d8] sm:$0xf]
      %v2901 = vld [vmem:[%s2 + $0x1dc] sm:$0xf]
      %v2902 = vld [vmem:[%s2 + $0x1e0] sm:$0xf]
      %v2903 = vld [vmem:[%s2 + $0x1e4] sm:$0xf]
      %v2904 = vld [vmem:[%s2 + $0x1e8] sm:$0xf]
      %v2905 = vld [vmem:[%s2 + $0x1ec] sm:$0xf]
      %v2906 = vld [vmem:[%s2 + $0x1f0] sm:$0xf]
      %v2907 = vld [vmem:[%s2 + $0x1f4] sm:$0xf]
      %v2908 = vld [vmem:[%s2 + $0x1f8] sm:$0xf]
      %v2909 = vld [vmem:[%s2 + $0x1fc] sm:$0xf]
      %v2910 = vld [vmem:[%s2 + $0x200] sm:$0xf]
      %v2911 = vld [vmem:[%s2 + $0x204] sm:$0xf]
      %v2912 = vld [vmem:[%s2 + $0x208] sm:$0xf]
      %v2913 = vld [vmem:[%s2 + $0x20c] sm:$0xf]
      %v2914 = vld [vmem:[%s2 + $0x210] sm:$0xf]
      %v2915 = vld [vmem:[%s2 + $0x214] sm:$0xf]
      %v2916 = vld [vmem:[%s2 + $0x218] sm:$0xf]
      %v2917 = vld [vmem:[%s2 + $0x21c] sm:$0xf]
      %v2918 = vld [vmem:[%s2 + $0x220] sm:$0xf]
      %v2919 = vld [vmem:[%s2 + $0x224] sm:$0xf]
      %v2920 = vld [vmem:[%s2 + $0x228] sm:$0xf]
      %v2921 = vld [vmem:[%s2 + $0x22c] sm:$0xf]
      %v2922 = vld [vmem:[%s2 + $0x230] sm:$0xf]
      %v2923 = vld [vmem:[%s2 + $0x234] sm:$0xf]
      %v2924 = vld [vmem:[%s2 + $0x238] sm:$0xf]
      %v2925 = vld [vmem:[%s2 + $0x23c] sm:$0xf]
      %v3070 = vunpack.c.l.b16 %v2782
      %v3071 = vunpack.c.l.b16 %v2783
      %v3072 = vunpack.c.l.b16 %v2784
      %v3073 = vunpack.c.l.b16 %v2785
      %v3074 = vunpack.c.l.b16 %v2786
      %v3075 = vunpack.c.l.b16 %v2787
      %v3076 = vunpack.c.l.b16 %v2788
      %v3077 = vunpack.c.l.b16 %v2789
      %v3078 = vunpack.c.l.b16 %v2790
      %v3079 = vunpack.c.l.b16 %v2791
      %v3080 = vunpack.c.l.b16 %v2792
      %v3081 = vunpack.c.l.b16 %v2793
      %v3082 = vunpack.c.l.b16 %v2794
      %v3083 = vunpack.c.l.b16 %v2795
      %v3084 = vunpack.c.l.b16 %v2796
      %v3085 = vunpack.c.l.b16 %v2797
      %v3086 = vunpack.c.l.b16 %v2798
      %v3087 = vunpack.c.l.b16 %v2799
      %v3088 = vunpack.c.l.b16 %v2800
      %v3089 = vunpack.c.l.b16 %v2801
      %v3090 = vunpack.c.l.b16 %v2802
      %v3091 = vunpack.c.l.b16 %v2803
      %v3092 = vunpack.c.l.b16 %v2804
      %v3093 = vunpack.c.l.b16 %v2805
      %v3094 = vunpack.c.l.b16 %v2806
      %v3095 = vunpack.c.l.b16 %v2807
      %v3096 = vunpack.c.l.b16 %v2808
      %v3097 = vunpack.c.l.b16 %v2809
      %v3098 = vunpack.c.l.b16 %v2810
      %v3099 = vunpack.c.l.b16 %v2811
      %v3100 = vunpack.c.l.b16 %v2812
      %v3101 = vunpack.c.l.b16 %v2813
      %v3102 = vunpack.c.l.b16 %v2814
      %v3103 = vunpack.c.l.b16 %v2815
      %v3104 = vunpack.c.l.b16 %v2816
      %v3105 = vunpack.c.l.b16 %v2817
      %v3106 = vunpack.c.l.b16 %v2818
      %v3107 = vunpack.c.l.b16 %v2819
      %v3108 = vunpack.c.l.b16 %v2820
      %v3109 = vunpack.c.l.b16 %v2821
      %v3110 = vunpack.c.l.b16 %v2822
      %v3111 = vunpack.c.l.b16 %v2823
      %v3112 = vunpack.c.l.b16 %v2824
      %v3113 = vunpack.c.l.b16 %v2825
      %v3114 = vunpack.c.l.b16 %v2826
      %v3115 = vunpack.c.l.b16 %v2827
      %v3116 = vunpack.c.l.b16 %v2828
      %v3117 = vunpack.c.l.b16 %v2829
      %v3118 = vunpack.c.l.b16 %v2830
      %v3119 = vunpack.c.l.b16 %v2831
      %v3120 = vunpack.c.l.b16 %v2832
      %v3121 = vunpack.c.l.b16 %v2833
      %v3122 = vunpack.c.l.b16 %v2834
      %v3123 = vunpack.c.l.b16 %v2835
      %v3124 = vunpack.c.l.b16 %v2836
      %v3125 = vunpack.c.l.b16 %v2837
      %v3126 = vunpack.c.l.b16 %v2838
      %v3127 = vunpack.c.l.b16 %v2839
      %v3128 = vunpack.c.l.b16 %v2840
      %v3129 = vunpack.c.l.b16 %v2841
      %v3130 = vunpack.c.l.b16 %v2842
      %v3131 = vunpack.c.l.b16 %v2843
      %v3132 = vunpack.c.l.b16 %v2844
      %v3133 = vunpack.c.l.b16 %v2845
      %v3134 = vunpack.c.l.b16 %v2846
      %v3135 = vunpack.c.l.b16 %v2847
      %v3136 = vunpack.c.l.b16 %v2848
      %v3137 = vunpack.c.l.b16 %v2849
      %v3138 = vunpack.c.l.b16 %v2850
      %v3139 = vunpack.c.l.b16 %v2851
      %v3140 = vunpack.c.l.b16 %v2852
      %v3141 = vunpack.c.l.b16 %v2853
      %v3142 = vunpack.c.l.b16 %v2854
      %v3143 = vunpack.c.l.b16 %v2855
      %v3144 = vunpack.c.l.b16 %v2856
      %v3145 = vunpack.c.l.b16 %v2857
      %v3146 = vunpack.c.l.b16 %v2858
      %v3147 = vunpack.c.l.b16 %v2859
      %v3148 = vunpack.c.l.b16 %v2860
      %v3149 = vunpack.c.l.b16 %v2861
      %v3150 = vunpack.c.l.b16 %v2862
      %v3151 = vunpack.c.l.b16 %v2863
      %v3152 = vunpack.c.l.b16 %v2864
      %v3153 = vunpack.c.l.b16 %v2865
      %v3154 = vunpack.c.l.b16 %v2866
      %v3155 = vunpack.c.l.b16 %v2867
      %v3156 = vunpack.c.l.b16 %v2868
      %v3157 = vunpack.c.l.b16 %v2869
      %v3158 = vunpack.c.l.b16 %v2870
      %v3159 = vunpack.c.l.b16 %v2871
      %v3160 = vunpack.c.l.b16 %v2872
      %v3161 = vunpack.c.l.b16 %v2873
      %v3162 = vunpack.c.l.b16 %v2874
      %v3163 = vunpack.c.l.b16 %v2875
      %v3164 = vunpack.c.l.b16 %v2876
      %v3165 = vunpack.c.l.b16 %v2877
      %v3166 = vunpack.c.l.b16 %v2878
      %v3167 = vunpack.c.l.b16 %v2879
      %v3168 = vunpack.c.l.b16 %v2880
      %v3169 = vunpack.c.l.b16 %v2881
      %v3170 = vunpack.c.l.b16 %v2882
      %v3171 = vunpack.c.l.b16 %v2883
      %v3172 = vunpack.c.l.b16 %v2884
      %v3173 = vunpack.c.l.b16 %v2885
      %v3174 = vunpack.c.l.b16 %v2886
      %v3175 = vunpack.c.l.b16 %v2887
      %v3176 = vunpack.c.l.b16 %v2888
      %v3177 = vunpack.c.l.b16 %v2889
      %v3178 = vunpack.c.l.b16 %v2890
      %v3179 = vunpack.c.l.b16 %v2891
      %v3180 = vunpack.c.l.b16 %v2892
      %v3181 = vunpack.c.l.b16 %v2893
      %v3182 = vunpack.c.l.b16 %v2894
      %v3183 = vunpack.c.l.b16 %v2895
      %v3184 = vunpack.c.l.b16 %v2896
      %v3185 = vunpack.c.l.b16 %v2897
      %v3186 = vunpack.c.l.b16 %v2898
      %v3187 = vunpack.c.l.b16 %v2899
      %v3188 = vunpack.c.l.b16 %v2900
      %v3189 = vunpack.c.l.b16 %v2901
      %v3190 = vunpack.c.l.b16 %v2902
      %v3191 = vunpack.c.l.b16 %v2903
      %v3192 = vunpack.c.l.b16 %v2904
      %v3193 = vunpack.c.l.b16 %v2905
      %v3194 = vunpack.c.l.b16 %v2906
      %v3195 = vunpack.c.l.b16 %v2907
      %v3196 = vunpack.c.l.b16 %v2908
      %v3197 = vunpack.c.l.b16 %v2909
      %v3198 = vunpack.c.l.b16 %v2910
      %v3199 = vunpack.c.l.b16 %v2911
      %v3200 = vunpack.c.l.b16 %v2912
      %v3201 = vunpack.c.l.b16 %v2913
      %v3202 = vunpack.c.l.b16 %v2914
      %v3203 = vunpack.c.l.b16 %v2915
      %v3204 = vunpack.c.l.b16 %v2916
      %v3205 = vunpack.c.l.b16 %v2917
      %v3206 = vunpack.c.l.b16 %v2918
      %v3207 = vunpack.c.l.b16 %v2919
      %v3208 = vunpack.c.l.b16 %v2920
      %v3209 = vunpack.c.l.b16 %v2921
      %v3210 = vunpack.c.l.b16 %v2922
      %v3211 = vunpack.c.l.b16 %v2923
      %v3212 = vunpack.c.l.b16 %v2924
      %v3213 = vunpack.c.l.b16 %v2925
      %v3214 = vpack.c.b16 %v3071, %v3070
      %v3215 = vpack.c.b16 %v3073, %v3072
      %v3216 = vpack.c.b16 %v3075, %v3074
      %v3217 = vpack.c.b16 %v3077, %v3076
      %v3218 = vpack.c.b16 %v3079, %v3078
      %v3219 = vpack.c.b16 %v3081, %v3080
      %v3220 = vpack.c.b16 %v3083, %v3082
      %v3221 = vpack.c.b16 %v3085, %v3084
      %v3222 = vpack.c.b16 %v3087, %v3086
      %v3223 = vpack.c.b16 %v3089, %v3088
      %v3224 = vpack.c.b16 %v3091, %v3090
      %v3225 = vpack.c.b16 %v3093, %v3092
      %v3226 = vpack.c.b16 %v3095, %v3094
      %v3227 = vpack.c.b16 %v3097, %v3096
      %v3228 = vpack.c.b16 %v3099, %v3098
      %v3229 = vpack.c.b16 %v3101, %v3100
      %v3230 = vpack.c.b16 %v3103, %v3102
      %v3231 = vpack.c.b16 %v3105, %v3104
      %v3232 = vpack.c.b16 %v3107, %v3106
      %v3233 = vpack.c.b16 %v3109, %v3108
      %v3234 = vpack.c.b16 %v3111, %v3110
      %v3235 = vpack.c.b16 %v3113, %v3112
      %v3236 = vpack.c.b16 %v3115, %v3114
      %v3237 = vpack.c.b16 %v3117, %v3116
      %v3238 = vpack.c.b16 %v3119, %v3118
      %v3239 = vpack.c.b16 %v3121, %v3120
      %v3240 = vpack.c.b16 %v3123, %v3122
      %v3241 = vpack.c.b16 %v3125, %v3124
      %v3242 = vpack.c.b16 %v3127, %v3126
      %v3243 = vpack.c.b16 %v3129, %v3128
      %v3244 = vpack.c.b16 %v3131, %v3130
      %v3245 = vpack.c.b16 %v3133, %v3132
      %v3246 = vpack.c.b16 %v3135, %v3134
      %v3247 = vpack.c.b16 %v3137, %v3136
      %v3248 = vpack.c.b16 %v3139, %v3138
      %v3249 = vpack.c.b16 %v3141, %v3140
      %v3250 = vpack.c.b16 %v3143, %v3142
      %v3251 = vpack.c.b16 %v3145, %v3144
      %v3252 = vpack.c.b16 %v3147, %v3146
      %v3253 = vpack.c.b16 %v3149, %v3148
      %v3254 = vpack.c.b16 %v3151, %v3150
      %v3255 = vpack.c.b16 %v3153, %v3152
      %v3256 = vpack.c.b16 %v3155, %v3154
      %v3257 = vpack.c.b16 %v3157, %v3156
      %v3258 = vpack.c.b16 %v3159, %v3158
      %v3259 = vpack.c.b16 %v3161, %v3160
      %v3260 = vpack.c.b16 %v3163, %v3162
      %v3261 = vpack.c.b16 %v3165, %v3164
      %v3262 = vpack.c.b16 %v3167, %v3166
      %v3263 = vpack.c.b16 %v3169, %v3168
      %v3264 = vpack.c.b16 %v3171, %v3170
      %v3265 = vpack.c.b16 %v3173, %v3172
      %v3266 = vpack.c.b16 %v3175, %v3174
      %v3267 = vpack.c.b16 %v3177, %v3176
      %v3268 = vpack.c.b16 %v3179, %v3178
      %v3269 = vpack.c.b16 %v3181, %v3180
      %v3270 = vpack.c.b16 %v3183, %v3182
      %v3271 = vpack.c.b16 %v3185, %v3184
      %v3272 = vpack.c.b16 %v3187, %v3186
      %v3273 = vpack.c.b16 %v3189, %v3188
      %v3274 = vpack.c.b16 %v3191, %v3190
      %v3275 = vpack.c.b16 %v3193, %v3192
      %v3276 = vpack.c.b16 %v3195, %v3194
      %v3277 = vpack.c.b16 %v3197, %v3196
      %v3278 = vpack.c.b16 %v3199, %v3198
      %v3279 = vpack.c.b16 %v3201, %v3200
      %v3280 = vpack.c.b16 %v3203, %v3202
      %v3281 = vpack.c.b16 %v3205, %v3204
      %v3282 = vpack.c.b16 %v3207, %v3206
      %v3283 = vpack.c.b16 %v3209, %v3208
      %v3284 = vpack.c.b16 %v3211, %v3210
      %v3285 = vpack.c.b16 %v3213, %v3212
      %3358 = vmatprep.subr.bf16.mxu0 0
      %3359 = vmatpush1.bf16.msra.mxu0 %v3221
      %3360 = vmatprep.subr.bf16.mxu0 0
      %3361 = vmatpush1.bf16.msra.mxu0 %v3220
      %3362 = vmatprep.subr.bf16.mxu0 0
      %3363 = vmatpush1.bf16.msra.mxu0 %v3219
      %3364 = vmatprep.subr.bf16.mxu0 0
      %3365 = vmatpush1.bf16.msra.mxu0 %v3218
      %3366 = vmatprep.subr.bf16.mxu0 0
      %3367 = vmatpush1.bf16.msra.mxu0 %v3217
      %3368 = vmatprep.subr.bf16.mxu0 0
      %3369 = vmatpush1.bf16.msra.mxu0 %v3216
      %3370 = vmatprep.subr.bf16.mxu0 0
      %3371 = vmatpush1.bf16.msra.mxu0 %v3215
      %3372 = vmatprep.subr.bf16.mxu0 0
      %3373 = vmatpush1.bf16.msra.mxu0 %v3214
      %3374 = vmatprep.subr.bf16.mxu0 0
      %3375 = vmatpush2.bf16.msra.mxu0 %v3229
      %3376 = vmatprep.subr.bf16.mxu0 0
      %3377 = vmatpush2.bf16.msra.mxu0 %v3228
      %3378 = vmatprep.subr.bf16.mxu0 0
      %3379 = vmatpush2.bf16.msra.mxu0 %v3227
      %3380 = vmatprep.subr.bf16.mxu0 0
      %3381 = vmatpush2.bf16.msra.mxu0 %v3226
      %3382 = vmatprep.subr.bf16.mxu0 0
      %3383 = vmatpush2.bf16.msra.mxu0 %v3225
      %3384 = vmatprep.subr.bf16.mxu0 0
      %3385 = vmatpush2.bf16.msra.mxu0 %v3224
      %3386 = vmatprep.subr.bf16.mxu0 0
      %3387 = vmatpush2.bf16.msra.mxu0 %v3223
      %3388 = vmatprep.subr.bf16.mxu0 0
      %3389 = vmatpush2.bf16.msra.mxu0 %v3222
      %3390 = vmatprep.mubr.bf16.mxu0 %v2430
      %3391 = vmatmul.mubr.bf16.gmra.mxu0 %v2382
      %v3392 = vpop.f32.mrf.mxu0
      %v3393 = vadd.f32 0.0, %v3392
      %v3394 = vpop.f32.mrf.mxu0
      %v3395 = vpop.f32.mrf.mxu0
      %v3396 = vadd.f32 0.0, %v3395
      %v3397 = vpop.f32.mrf.mxu0
      %3398 = vmatprep.mubr.bf16.mxu0 %v2431
      %3399 = vmatmul.mubr.bf16.gmra.mxu0 %v2383
      %v3400 = vpop.f32.mrf.mxu0
      %v3401 = vadd.f32 0.0, %v3400
      %v3402 = vpop.f32.mrf.mxu0
      %v3403 = vpop.f32.mrf.mxu0
      %v3404 = vadd.f32 0.0, %v3403
      %v3405 = vpop.f32.mrf.mxu0
      %3406 = vmatprep.mubr.bf16.mxu0 %v2432
      %3407 = vmatmul.mubr.bf16.gmra.mxu0 %v2384
      %v3408 = vpop.f32.mrf.mxu0
      %v3409 = vadd.f32 0.0, %v3408
      %v3410 = vpop.f32.mrf.mxu0
      %v3411 = vpop.f32.mrf.mxu0
      %v3412 = vadd.f32 0.0, %v3411
      %v3413 = vpop.f32.mrf.mxu0
      %3414 = vmatprep.mubr.bf16.mxu0 %v2433
      %3415 = vmatmul.mubr.bf16.gmra.mxu0 %v2385
      %v3416 = vpop.f32.mrf.mxu0
      %v3417 = vadd.f32 0.0, %v3416
      %v3418 = vpop.f32.mrf.mxu0
      %v3419 = vpop.f32.mrf.mxu0
      %v3420 = vadd.f32 0.0, %v3419
      %v3421 = vpop.f32.mrf.mxu0
      %3422 = vmatprep.mubr.bf16.mxu0 %v2434
      %3423 = vmatmul.mubr.bf16.gmra.mxu0 %v2386
      %v3424 = vpop.f32.mrf.mxu0
      %v3425 = vadd.f32 0.0, %v3424
      %v3426 = vpop.f32.mrf.mxu0
      %v3427 = vpop.f32.mrf.mxu0
      %v3428 = vadd.f32 0.0, %v3427
      %v3429 = vpop.f32.mrf.mxu0
      %3430 = vmatprep.mubr.bf16.mxu0 %v2435
      %3431 = vmatmul.mubr.bf16.gmra.mxu0 %v2387
      %v3432 = vpop.f32.mrf.mxu0
      %v3433 = vadd.f32 0.0, %v3432
      %v3434 = vpop.f32.mrf.mxu0
      %v3435 = vpop.f32.mrf.mxu0
      %v3436 = vadd.f32 0.0, %v3435
      %v3437 = vpop.f32.mrf.mxu0
      %3438 = vmatprep.mubr.bf16.mxu0 %v2436
      %3439 = vmatmul.mubr.bf16.gmra.mxu0 %v2388
      %v3440 = vpop.f32.mrf.mxu0
      %v3441 = vadd.f32 0.0, %v3440
      %v3442 = vpop.f32.mrf.mxu0
      %v3443 = vpop.f32.mrf.mxu0
      %v3444 = vadd.f32 0.0, %v3443
      %v3445 = vpop.f32.mrf.mxu0
      %3446 = vmatprep.mubr.bf16.mxu0 %v2437
      %3447 = vmatmul.mubr.bf16.gmra.mxu0 %v2389
      %v3448 = vpop.f32.mrf.mxu0
      %v3449 = vadd.f32 0.0, %v3448
      %v3450 = vpop.f32.mrf.mxu0
      %v3451 = vpop.f32.mrf.mxu0
      %v3452 = vadd.f32 0.0, %v3451
      %v3453 = vpop.f32.mrf.mxu0
      %3454 = vmatprep.mubr.bf16.mxu0 %v2438
      %3455 = vmatmul.mubr.bf16.gmra.mxu0 %v2390
      %v3456 = vpop.f32.mrf.mxu0
      %v3457 = vadd.f32 0.0, %v3456
      %v3458 = vpop.f32.mrf.mxu0
      %v3459 = vpop.f32.mrf.mxu0
      %v3460 = vadd.f32 0.0, %v3459
      %v3461 = vpop.f32.mrf.mxu0
      %3462 = vmatprep.mubr.bf16.mxu0 %v2439
      %3463 = vmatmul.mubr.bf16.gmra.mxu0 %v2391
      %v3464 = vpop.f32.mrf.mxu0
      %v3465 = vadd.f32 0.0, %v3464
      %v3466 = vpop.f32.mrf.mxu0
      %v3467 = vpop.f32.mrf.mxu0
      %v3468 = vadd.f32 0.0, %v3467
      %v3469 = vpop.f32.mrf.mxu0
      %3470 = vmatprep.mubr.bf16.mxu0 %v2440
      %3471 = vmatmul.mubr.bf16.gmra.mxu0 %v2392
      %v3472 = vpop.f32.mrf.mxu0
      %v3473 = vadd.f32 0.0, %v3472
      %v3474 = vpop.f32.mrf.mxu0
      %v3475 = vpop.f32.mrf.mxu0
      %v3476 = vadd.f32 0.0, %v3475
      %v3477 = vpop.f32.mrf.mxu0
      %3478 = vmatprep.mubr.bf16.mxu0 %v2441
      %3479 = vmatmul.mubr.bf16.gmra.mxu0 %v2393
      %v3480 = vpop.f32.mrf.mxu0
      %v3481 = vadd.f32 0.0, %v3480
      %v3482 = vpop.f32.mrf.mxu0
      %v3483 = vpop.f32.mrf.mxu0
      %v3484 = vadd.f32 0.0, %v3483
      %v3485 = vpop.f32.mrf.mxu0
      %3486 = vmatprep.mubr.bf16.mxu0 %v2442
      %3487 = vmatmul.mubr.bf16.gmra.mxu0 %v2394
      %v3488 = vpop.f32.mrf.mxu0
      %v3489 = vadd.f32 0.0, %v3488
      %v3490 = vpop.f32.mrf.mxu0
      %v3491 = vpop.f32.mrf.mxu0
      %v3492 = vadd.f32 0.0, %v3491
      %v3493 = vpop.f32.mrf.mxu0
      %3494 = vmatprep.mubr.bf16.mxu0 %v2443
      %3495 = vmatmul.mubr.bf16.gmra.mxu0 %v2395
      %v3496 = vpop.f32.mrf.mxu0
      %v3497 = vadd.f32 0.0, %v3496
      %v3498 = vpop.f32.mrf.mxu0
      %v3499 = vpop.f32.mrf.mxu0
      %v3500 = vadd.f32 0.0, %v3499
      %v3501 = vpop.f32.mrf.mxu0
      %3502 = vmatprep.mubr.bf16.mxu0 %v2444
      %3503 = vmatmul.mubr.bf16.gmra.mxu0 %v2396
      %v3504 = vpop.f32.mrf.mxu0
      %v3505 = vadd.f32 0.0, %v3504
      %v3506 = vpop.f32.mrf.mxu0
      %v3507 = vpop.f32.mrf.mxu0
      %v3508 = vadd.f32 0.0, %v3507
      %v3509 = vpop.f32.mrf.mxu0
      %3510 = vmatprep.mubr.bf16.mxu0 %v2445
      %3511 = vmatmul.mubr.bf16.gmra.mxu0 %v2397
      %v3512 = vpop.f32.mrf.mxu0
      %v3513 = vadd.f32 0.0, %v3512
      %v3514 = vpop.f32.mrf.mxu0
      %v3515 = vpop.f32.mrf.mxu0
      %v3516 = vadd.f32 0.0, %v3515
      %v3517 = vpop.f32.mrf.mxu0
      %3518 = vdwg.mxu0
      %3519 = vmatprep.subr.bf16.mxu0 0
      %3520 = vmatpush1.bf16.msra.mxu0 %v3237
      %3521 = vmatprep.subr.bf16.mxu0 0
      %3522 = vmatpush1.bf16.msra.mxu0 %v3236
      %3523 = vmatprep.subr.bf16.mxu0 0
      %3524 = vmatpush1.bf16.msra.mxu0 %v3235
      %3525 = vmatprep.subr.bf16.mxu0 0
      %3526 = vmatpush1.bf16.msra.mxu0 %v3234
      %3527 = vmatprep.subr.bf16.mxu0 0
      %3528 = vmatpush1.bf16.msra.mxu0 %v3233
      %3529 = vmatprep.subr.bf16.mxu0 0
      %3530 = vmatpush1.bf16.msra.mxu0 %v3232
      %3531 = vmatprep.subr.bf16.mxu0 0
      %3532 = vmatpush1.bf16.msra.mxu0 %v3231
      %3533 = vmatprep.subr.bf16.mxu0 0
      %3534 = vmatpush1.bf16.msra.mxu0 %v3230
      %3535 = vmatprep.subr.bf16.mxu0 0
      %3536 = vmatpush2.bf16.msra.mxu0 %v3245
      %3537 = vmatprep.subr.bf16.mxu0 0
      %3538 = vmatpush2.bf16.msra.mxu0 %v3244
      %3539 = vmatprep.subr.bf16.mxu0 0
      %3540 = vmatpush2.bf16.msra.mxu0 %v3243
      %3541 = vmatprep.subr.bf16.mxu0 0
      %3542 = vmatpush2.bf16.msra.mxu0 %v3242
      %3543 = vmatprep.subr.bf16.mxu0 0
      %3544 = vmatpush2.bf16.msra.mxu0 %v3241
      %3545 = vmatprep.subr.bf16.mxu0 0
      %3546 = vmatpush2.bf16.msra.mxu0 %v3240
      %3547 = vmatprep.subr.bf16.mxu0 0
      %3548 = vmatpush2.bf16.msra.mxu0 %v3239
      %3549 = vmatprep.subr.bf16.mxu0 0
      %3550 = vmatpush2.bf16.msra.mxu0 %v3238
      %3551 = vmatprep.mubr.bf16.mxu0 %v2526
      %3552 = vmatmul.mubr.bf16.gmra.mxu0 %v2478
      %v3553 = vpop.f32.mrf.mxu0
      %v3554 = vadd.f32 %v3393, %v3553
      %v3555 = vpop.f32.mrf.mxu0
      %v3556 = vpop.f32.mrf.mxu0
      %v3557 = vadd.f32 %v3396, %v3556
      %v3558 = vpop.f32.mrf.mxu0
      %3559 = vmatprep.mubr.bf16.mxu0 %v2527
      %3560 = vmatmul.mubr.bf16.gmra.mxu0 %v2479
      %v3561 = vpop.f32.mrf.mxu0
      %v3562 = vadd.f32 %v3401, %v3561
      %v3563 = vpop.f32.mrf.mxu0
      %v3564 = vpop.f32.mrf.mxu0
      %v3565 = vadd.f32 %v3404, %v3564
      %v3566 = vpop.f32.mrf.mxu0
      %3567 = vmatprep.mubr.bf16.mxu0 %v2528
      %3568 = vmatmul.mubr.bf16.gmra.mxu0 %v2480
      %v3569 = vpop.f32.mrf.mxu0
      %v3570 = vadd.f32 %v3409, %v3569
      %v3571 = vpop.f32.mrf.mxu0
      %v3572 = vpop.f32.mrf.mxu0
      %v3573 = vadd.f32 %v3412, %v3572
      %v3574 = vpop.f32.mrf.mxu0
      %3575 = vmatprep.mubr.bf16.mxu0 %v2529
      %3576 = vmatmul.mubr.bf16.gmra.mxu0 %v2481
      %v3577 = vpop.f32.mrf.mxu0
      %v3578 = vadd.f32 %v3417, %v3577
      %v3579 = vpop.f32.mrf.mxu0
      %v3580 = vpop.f32.mrf.mxu0
      %v3581 = vadd.f32 %v3420, %v3580
      %v3582 = vpop.f32.mrf.mxu0
      %3583 = vmatprep.mubr.bf16.mxu0 %v2530
      %3584 = vmatmul.mubr.bf16.gmra.mxu0 %v2482
      %v3585 = vpop.f32.mrf.mxu0
      %v3586 = vadd.f32 %v3425, %v3585
      %v3587 = vpop.f32.mrf.mxu0
      %v3588 = vpop.f32.mrf.mxu0
      %v3589 = vadd.f32 %v3428, %v3588
      %v3590 = vpop.f32.mrf.mxu0
      %3591 = vmatprep.mubr.bf16.mxu0 %v2531
      %3592 = vmatmul.mubr.bf16.gmra.mxu0 %v2483
      %v3593 = vpop.f32.mrf.mxu0
      %v3594 = vadd.f32 %v3433, %v3593
      %v3595 = vpop.f32.mrf.mxu0
      %v3596 = vpop.f32.mrf.mxu0
      %v3597 = vadd.f32 %v3436, %v3596
      %v3598 = vpop.f32.mrf.mxu0
      %3599 = vmatprep.mubr.bf16.mxu0 %v2532
      %3600 = vmatmul.mubr.bf16.gmra.mxu0 %v2484
      %v3601 = vpop.f32.mrf.mxu0
      %v3602 = vadd.f32 %v3441, %v3601
      %v3603 = vpop.f32.mrf.mxu0
      %v3604 = vpop.f32.mrf.mxu0
      %v3605 = vadd.f32 %v3444, %v3604
      %v3606 = vpop.f32.mrf.mxu0
      %3607 = vmatprep.mubr.bf16.mxu0 %v2533
      %3608 = vmatmul.mubr.bf16.gmra.mxu0 %v2485
      %v3609 = vpop.f32.mrf.mxu0
      %v3610 = vadd.f32 %v3449, %v3609
      %v3611 = vpop.f32.mrf.mxu0
      %v3612 = vpop.f32.mrf.mxu0
      %v3613 = vadd.f32 %v3452, %v3612
      %v3614 = vpop.f32.mrf.mxu0
      %3615 = vmatprep.mubr.bf16.mxu0 %v2534
      %3616 = vmatmul.mubr.bf16.gmra.mxu0 %v2486
      %v3617 = vpop.f32.mrf.mxu0
      %v3618 = vadd.f32 %v3457, %v3617
      %v3619 = vpop.f32.mrf.mxu0
      %v3620 = vpop.f32.mrf.mxu0
      %v3621 = vadd.f32 %v3460, %v3620
      %v3622 = vpop.f32.mrf.mxu0
      %3623 = vmatprep.mubr.bf16.mxu0 %v2535
      %3624 = vmatmul.mubr.bf16.gmra.mxu0 %v2487
      %v3625 = vpop.f32.mrf.mxu0
      %v3626 = vadd.f32 %v3465, %v3625
      %v3627 = vpop.f32.mrf.mxu0
      %v3628 = vpop.f32.mrf.mxu0
      %v3629 = vadd.f32 %v3468, %v3628
      %v3630 = vpop.f32.mrf.mxu0
      %3631 = vmatprep.mubr.bf16.mxu0 %v2536
      %3632 = vmatmul.mubr.bf16.gmra.mxu0 %v2488
      %v3633 = vpop.f32.mrf.mxu0
      %v3634 = vadd.f32 %v3473, %v3633
      %v3635 = vpop.f32.mrf.mxu0
      %v3636 = vpop.f32.mrf.mxu0
      %v3637 = vadd.f32 %v3476, %v3636
      %v3638 = vpop.f32.mrf.mxu0
      %3639 = vmatprep.mubr.bf16.mxu0 %v2537
      %3640 = vmatmul.mubr.bf16.gmra.mxu0 %v2489
      %v3641 = vpop.f32.mrf.mxu0
      %v3642 = vadd.f32 %v3481, %v3641
      %v3643 = vpop.f32.mrf.mxu0
      %v3644 = vpop.f32.mrf.mxu0
      %v3645 = vadd.f32 %v3484, %v3644
      %v3646 = vpop.f32.mrf.mxu0
      %3647 = vmatprep.mubr.bf16.mxu0 %v2538
      %3648 = vmatmul.mubr.bf16.gmra.mxu0 %v2490
      %v3649 = vpop.f32.mrf.mxu0
      %v3650 = vadd.f32 %v3489, %v3649
      %v3651 = vpop.f32.mrf.mxu0
      %v3652 = vpop.f32.mrf.mxu0
      %v3653 = vadd.f32 %v3492, %v3652
      %v3654 = vpop.f32.mrf.mxu0
      %3655 = vmatprep.mubr.bf16.mxu0 %v2539
      %3656 = vmatmul.mubr.bf16.gmra.mxu0 %v2491
      %v3657 = vpop.f32.mrf.mxu0
      %v3658 = vadd.f32 %v3497, %v3657
      %v3659 = vpop.f32.mrf.mxu0
      %v3660 = vpop.f32.mrf.mxu0
      %v3661 = vadd.f32 %v3500, %v3660
      %v3662 = vpop.f32.mrf.mxu0
      %3663 = vmatprep.mubr.bf16.mxu0 %v2540
      %3664 = vmatmul.mubr.bf16.gmra.mxu0 %v2492
      %v3665 = vpop.f32.mrf.mxu0
      %v3666 = vadd.f32 %v3505, %v3665
      %v3667 = vpop.f32.mrf.mxu0
      %v3668 = vpop.f32.mrf.mxu0
      %v3669 = vadd.f32 %v3508, %v3668
      %v3670 = vpop.f32.mrf.mxu0
      %3671 = vmatprep.mubr.bf16.mxu0 %v2541
      %3672 = vmatmul.mubr.bf16.gmra.mxu0 %v2493
      %v3673 = vpop.f32.mrf.mxu0
      %v3674 = vadd.f32 %v3513, %v3673
      %v3675 = vpop.f32.mrf.mxu0
      %v3676 = vpop.f32.mrf.mxu0
      %v3677 = vadd.f32 %v3516, %v3676
      %v3678 = vpop.f32.mrf.mxu0
      %3679 = vdwg.mxu0
      %3680 = vmatprep.subr.bf16.mxu0 0
      %3681 = vmatpush1.bf16.msra.mxu0 %v3253
      %3682 = vmatprep.subr.bf16.mxu0 0
      %3683 = vmatpush1.bf16.msra.mxu0 %v3252
      %3684 = vmatprep.subr.bf16.mxu0 0
      %3685 = vmatpush1.bf16.msra.mxu0 %v3251
      %3686 = vmatprep.subr.bf16.mxu0 0
      %3687 = vmatpush1.bf16.msra.mxu0 %v3250
      %3688 = vmatprep.subr.bf16.mxu0 0
      %3689 = vmatpush1.bf16.msra.mxu0 %v3249
      %3690 = vmatprep.subr.bf16.mxu0 0
      %3691 = vmatpush1.bf16.msra.mxu0 %v3248
      %3692 = vmatprep.subr.bf16.mxu0 0
      %3693 = vmatpush1.bf16.msra.mxu0 %v3247
      %3694 = vmatprep.subr.bf16.mxu0 0
      %3695 = vmatpush1.bf16.msra.mxu0 %v3246
      %3696 = vmatprep.subr.bf16.mxu0 0
      %3697 = vmatpush2.bf16.msra.mxu0 %v3261
      %3698 = vmatprep.subr.bf16.mxu0 0
      %3699 = vmatpush2.bf16.msra.mxu0 %v3260
      %3700 = vmatprep.subr.bf16.mxu0 0
      %3701 = vmatpush2.bf16.msra.mxu0 %v3259
      %3702 = vmatprep.subr.bf16.mxu0 0
      %3703 = vmatpush2.bf16.msra.mxu0 %v3258
      %3704 = vmatprep.subr.bf16.mxu0 0
      %3705 = vmatpush2.bf16.msra.mxu0 %v3257
      %3706 = vmatprep.subr.bf16.mxu0 0
      %3707 = vmatpush2.bf16.msra.mxu0 %v3256
      %3708 = vmatprep.subr.bf16.mxu0 0
      %3709 = vmatpush2.bf16.msra.mxu0 %v3255
      %3710 = vmatprep.subr.bf16.mxu0 0
      %3711 = vmatpush2.bf16.msra.mxu0 %v3254
      %3712 = vmatprep.mubr.bf16.mxu0 %v2622
      %3713 = vmatmul.mubr.bf16.gmra.mxu0 %v2574
      %v3714 = vpop.f32.mrf.mxu0
      %v3715 = vadd.f32 %v3554, %v3714
      %v3716 = vpop.f32.mrf.mxu0
      %v3717 = vpop.f32.mrf.mxu0
      %v3718 = vadd.f32 %v3557, %v3717
      %v3719 = vpop.f32.mrf.mxu0
      %3720 = vmatprep.mubr.bf16.mxu0 %v2623
      %3721 = vmatmul.mubr.bf16.gmra.mxu0 %v2575
      %v3722 = vpop.f32.mrf.mxu0
      %v3723 = vadd.f32 %v3562, %v3722
      %v3724 = vpop.f32.mrf.mxu0
      %v3725 = vpop.f32.mrf.mxu0
      %v3726 = vadd.f32 %v3565, %v3725
      %v3727 = vpop.f32.mrf.mxu0
      %3728 = vmatprep.mubr.bf16.mxu0 %v2624
      %3729 = vmatmul.mubr.bf16.gmra.mxu0 %v2576
      %v3730 = vpop.f32.mrf.mxu0
      %v3731 = vadd.f32 %v3570, %v3730
      %v3732 = vpop.f32.mrf.mxu0
      %v3733 = vpop.f32.mrf.mxu0
      %v3734 = vadd.f32 %v3573, %v3733
      %v3735 = vpop.f32.mrf.mxu0
      %3736 = vmatprep.mubr.bf16.mxu0 %v2625
      %3737 = vmatmul.mubr.bf16.gmra.mxu0 %v2577
      %v3738 = vpop.f32.mrf.mxu0
      %v3739 = vadd.f32 %v3578, %v3738
      %v3740 = vpop.f32.mrf.mxu0
      %v3741 = vpop.f32.mrf.mxu0
      %v3742 = vadd.f32 %v3581, %v3741
      %v3743 = vpop.f32.mrf.mxu0
      %3744 = vmatprep.mubr.bf16.mxu0 %v2626
      %3745 = vmatmul.mubr.bf16.gmra.mxu0 %v2578
      %v3746 = vpop.f32.mrf.mxu0
      %v3747 = vadd.f32 %v3586, %v3746
      %v3748 = vpop.f32.mrf.mxu0
      %v3749 = vpop.f32.mrf.mxu0
      %v3750 = vadd.f32 %v3589, %v3749
      %v3751 = vpop.f32.mrf.mxu0
      %3752 = vmatprep.mubr.bf16.mxu0 %v2627
      %3753 = vmatmul.mubr.bf16.gmra.mxu0 %v2579
      %v3754 = vpop.f32.mrf.mxu0
      %v3755 = vadd.f32 %v3594, %v3754
      %v3756 = vpop.f32.mrf.mxu0
      %v3757 = vpop.f32.mrf.mxu0
      %v3758 = vadd.f32 %v3597, %v3757
      %v3759 = vpop.f32.mrf.mxu0
      %3760 = vmatprep.mubr.bf16.mxu0 %v2628
      %3761 = vmatmul.mubr.bf16.gmra.mxu0 %v2580
      %v3762 = vpop.f32.mrf.mxu0
      %v3763 = vadd.f32 %v3602, %v3762
      %v3764 = vpop.f32.mrf.mxu0
      %v3765 = vpop.f32.mrf.mxu0
      %v3766 = vadd.f32 %v3605, %v3765
      %v3767 = vpop.f32.mrf.mxu0
      %3768 = vmatprep.mubr.bf16.mxu0 %v2629
      %3769 = vmatmul.mubr.bf16.gmra.mxu0 %v2581
      %v3770 = vpop.f32.mrf.mxu0
      %v3771 = vadd.f32 %v3610, %v3770
      %v3772 = vpop.f32.mrf.mxu0
      %v3773 = vpop.f32.mrf.mxu0
      %v3774 = vadd.f32 %v3613, %v3773
      %v3775 = vpop.f32.mrf.mxu0
      %3776 = vmatprep.mubr.bf16.mxu0 %v2630
      %3777 = vmatmul.mubr.bf16.gmra.mxu0 %v2582
      %v3778 = vpop.f32.mrf.mxu0
      %v3779 = vadd.f32 %v3618, %v3778
      %v3780 = vpop.f32.mrf.mxu0
      %v3781 = vpop.f32.mrf.mxu0
      %v3782 = vadd.f32 %v3621, %v3781
      %v3783 = vpop.f32.mrf.mxu0
      %3784 = vmatprep.mubr.bf16.mxu0 %v2631
      %3785 = vmatmul.mubr.bf16.gmra.mxu0 %v2583
      %v3786 = vpop.f32.mrf.mxu0
      %v3787 = vadd.f32 %v3626, %v3786
      %v3788 = vpop.f32.mrf.mxu0
      %v3789 = vpop.f32.mrf.mxu0
      %v3790 = vadd.f32 %v3629, %v3789
      %v3791 = vpop.f32.mrf.mxu0
      %3792 = vmatprep.mubr.bf16.mxu0 %v2632
      %3793 = vmatmul.mubr.bf16.gmra.mxu0 %v2584
      %v3794 = vpop.f32.mrf.mxu0
      %v3795 = vadd.f32 %v3634, %v3794
      %v3796 = vpop.f32.mrf.mxu0
      %v3797 = vpop.f32.mrf.mxu0
      %v3798 = vadd.f32 %v3637, %v3797
      %v3799 = vpop.f32.mrf.mxu0
      %3800 = vmatprep.mubr.bf16.mxu0 %v2633
      %3801 = vmatmul.mubr.bf16.gmra.mxu0 %v2585
      %v3802 = vpop.f32.mrf.mxu0
      %v3803 = vadd.f32 %v3642, %v3802
      %v3804 = vpop.f32.mrf.mxu0
      %v3805 = vpop.f32.mrf.mxu0
      %v3806 = vadd.f32 %v3645, %v3805
      %v3807 = vpop.f32.mrf.mxu0
      %3808 = vmatprep.mubr.bf16.mxu0 %v2634
      %3809 = vmatmul.mubr.bf16.gmra.mxu0 %v2586
      %v3810 = vpop.f32.mrf.mxu0
      %v3811 = vadd.f32 %v3650, %v3810
      %v3812 = vpop.f32.mrf.mxu0
      %v3813 = vpop.f32.mrf.mxu0
      %v3814 = vadd.f32 %v3653, %v3813
      %v3815 = vpop.f32.mrf.mxu0
      %3816 = vmatprep.mubr.bf16.mxu0 %v2635
      %3817 = vmatmul.mubr.bf16.gmra.mxu0 %v2587
      %v3818 = vpop.f32.mrf.mxu0
      %v3819 = vadd.f32 %v3658, %v3818
      %v3820 = vpop.f32.mrf.mxu0
      %v3821 = vpop.f32.mrf.mxu0
      %v3822 = vadd.f32 %v3661, %v3821
      %v3823 = vpop.f32.mrf.mxu0
      %3824 = vmatprep.mubr.bf16.mxu0 %v2636
      %3825 = vmatmul.mubr.bf16.gmra.mxu0 %v2588
      %v3826 = vpop.f32.mrf.mxu0
      %v3827 = vadd.f32 %v3666, %v3826
      %v3828 = vpop.f32.mrf.mxu0
      %v3829 = vpop.f32.mrf.mxu0
      %v3830 = vadd.f32 %v3669, %v3829
      %v3831 = vpop.f32.mrf.mxu0
      %3832 = vmatprep.mubr.bf16.mxu0 %v2637
      %3833 = vmatmul.mubr.bf16.gmra.mxu0 %v2589
      %v3834 = vpop.f32.mrf.mxu0
      %v3835 = vadd.f32 %v3674, %v3834
      %v3836 = vpop.f32.mrf.mxu0
      %v3837 = vpop.f32.mrf.mxu0
      %v3838 = vadd.f32 %v3677, %v3837
      %v3839 = vpop.f32.mrf.mxu0
      %3840 = vdwg.mxu0
      %3841 = vmatprep.subr.bf16.mxu0 0
      %3842 = vmatpush1.bf16.msra.mxu0 %v3269
      %3843 = vmatprep.subr.bf16.mxu0 0
      %3844 = vmatpush1.bf16.msra.mxu0 %v3268
      %3845 = vmatprep.subr.bf16.mxu0 0
      %3846 = vmatpush1.bf16.msra.mxu0 %v3267
      %3847 = vmatprep.subr.bf16.mxu0 0
      %3848 = vmatpush1.bf16.msra.mxu0 %v3266
      %3849 = vmatprep.subr.bf16.mxu0 0
      %3850 = vmatpush1.bf16.msra.mxu0 %v3265
      %3851 = vmatprep.subr.bf16.mxu0 0
      %3852 = vmatpush1.bf16.msra.mxu0 %v3264
      %3853 = vmatprep.subr.bf16.mxu0 0
      %3854 = vmatpush1.bf16.msra.mxu0 %v3263
      %3855 = vmatprep.subr.bf16.mxu0 0
      %3856 = vmatpush1.bf16.msra.mxu0 %v3262
      %3857 = vmatprep.subr.bf16.mxu0 0
      %3858 = vmatpush2.bf16.msra.mxu0 %v3277
      %3859 = vmatprep.subr.bf16.mxu0 0
      %3860 = vmatpush2.bf16.msra.mxu0 %v3276
      %3861 = vmatprep.subr.bf16.mxu0 0
      %3862 = vmatpush2.bf16.msra.mxu0 %v3275
      %3863 = vmatprep.subr.bf16.mxu0 0
      %3864 = vmatpush2.bf16.msra.mxu0 %v3274
      %3865 = vmatprep.subr.bf16.mxu0 0
      %3866 = vmatpush2.bf16.msra.mxu0 %v3273
      %3867 = vmatprep.subr.bf16.mxu0 0
      %3868 = vmatpush2.bf16.msra.mxu0 %v3272
      %3869 = vmatprep.subr.bf16.mxu0 0
      %3870 = vmatpush2.bf16.msra.mxu0 %v3271
      %3871 = vmatprep.subr.bf16.mxu0 0
      %3872 = vmatpush2.bf16.msra.mxu0 %v3270
      %3873 = vmatprep.mubr.bf16.mxu0 %v2718
      %3874 = vmatmul.mubr.bf16.gmra.mxu0 %v2670
      %v3875 = vpop.f32.mrf.mxu0
      %v3876 = vadd.f32 %v3715, %v3875
      %v3877 = vpop.f32.mrf.mxu0
      %v3878 = vpop.f32.mrf.mxu0
      %v3879 = vadd.f32 %v3718, %v3878
      %v3880 = vpop.f32.mrf.mxu0
      %3881 = vmatprep.mubr.bf16.mxu0 %v2719
      %3882 = vmatmul.mubr.bf16.gmra.mxu0 %v2671
      %v3883 = vpop.f32.mrf.mxu0
      %v3884 = vadd.f32 %v3723, %v3883
      %v3885 = vpop.f32.mrf.mxu0
      %v3886 = vpop.f32.mrf.mxu0
      %v3887 = vadd.f32 %v3726, %v3886
      %v3888 = vpop.f32.mrf.mxu0
      %3889 = vmatprep.mubr.bf16.mxu0 %v2720
      %3890 = vmatmul.mubr.bf16.gmra.mxu0 %v2672
      %v3891 = vpop.f32.mrf.mxu0
      %v3892 = vadd.f32 %v3731, %v3891
      %v3893 = vpop.f32.mrf.mxu0
      %v3894 = vpop.f32.mrf.mxu0
      %v3895 = vadd.f32 %v3734, %v3894
      %v3896 = vpop.f32.mrf.mxu0
      %3897 = vmatprep.mubr.bf16.mxu0 %v2721
      %3898 = vmatmul.mubr.bf16.gmra.mxu0 %v2673
      %v3899 = vpop.f32.mrf.mxu0
      %v3900 = vadd.f32 %v3739, %v3899
      %v3901 = vpop.f32.mrf.mxu0
      %v3902 = vpop.f32.mrf.mxu0
      %v3903 = vadd.f32 %v3742, %v3902
      %v3904 = vpop.f32.mrf.mxu0
      %3905 = vmatprep.mubr.bf16.mxu0 %v2722
      %3906 = vmatmul.mubr.bf16.gmra.mxu0 %v2674
      %v3907 = vpop.f32.mrf.mxu0
      %v3908 = vadd.f32 %v3747, %v3907
      %v3909 = vpop.f32.mrf.mxu0
      %v3910 = vpop.f32.mrf.mxu0
      %v3911 = vadd.f32 %v3750, %v3910
      %v3912 = vpop.f32.mrf.mxu0
      %3913 = vmatprep.mubr.bf16.mxu0 %v2723
      %3914 = vmatmul.mubr.bf16.gmra.mxu0 %v2675
      %v3915 = vpop.f32.mrf.mxu0
      %v3916 = vadd.f32 %v3755, %v3915
      %v3917 = vpop.f32.mrf.mxu0
      %v3918 = vpop.f32.mrf.mxu0
      %v3919 = vadd.f32 %v3758, %v3918
      %v3920 = vpop.f32.mrf.mxu0
      %3921 = vmatprep.mubr.bf16.mxu0 %v2724
      %3922 = vmatmul.mubr.bf16.gmra.mxu0 %v2676
      %v3923 = vpop.f32.mrf.mxu0
      %v3924 = vadd.f32 %v3763, %v3923
      %v3925 = vpop.f32.mrf.mxu0
      %v3926 = vpop.f32.mrf.mxu0
      %v3927 = vadd.f32 %v3766, %v3926
      %v3928 = vpop.f32.mrf.mxu0
      %3929 = vmatprep.mubr.bf16.mxu0 %v2725
      %3930 = vmatmul.mubr.bf16.gmra.mxu0 %v2677
      %v3931 = vpop.f32.mrf.mxu0
      %v3932 = vadd.f32 %v3771, %v3931
      %v3933 = vpop.f32.mrf.mxu0
      %v3934 = vpop.f32.mrf.mxu0
      %v3935 = vadd.f32 %v3774, %v3934
      %v3936 = vpop.f32.mrf.mxu0
      %3937 = vmatprep.mubr.bf16.mxu0 %v2726
      %3938 = vmatmul.mubr.bf16.gmra.mxu0 %v2678
      %v3939 = vpop.f32.mrf.mxu0
      %v3940 = vadd.f32 %v3779, %v3939
      %v3941 = vpop.f32.mrf.mxu0
      %v3942 = vpop.f32.mrf.mxu0
      %v3943 = vadd.f32 %v3782, %v3942
      %v3944 = vpop.f32.mrf.mxu0
      %3945 = vmatprep.mubr.bf16.mxu0 %v2727
      %3946 = vmatmul.mubr.bf16.gmra.mxu0 %v2679
      %v3947 = vpop.f32.mrf.mxu0
      %v3948 = vadd.f32 %v3787, %v3947
      %v3949 = vpop.f32.mrf.mxu0
      %v3950 = vpop.f32.mrf.mxu0
      %v3951 = vadd.f32 %v3790, %v3950
      %v3952 = vpop.f32.mrf.mxu0
      %3953 = vmatprep.mubr.bf16.mxu0 %v2728
      %3954 = vmatmul.mubr.bf16.gmra.mxu0 %v2680
      %v3955 = vpop.f32.mrf.mxu0
      %v3956 = vadd.f32 %v3795, %v3955
      %v3957 = vpop.f32.mrf.mxu0
      %v3958 = vpop.f32.mrf.mxu0
      %v3959 = vadd.f32 %v3798, %v3958
      %v3960 = vpop.f32.mrf.mxu0
      %3961 = vmatprep.mubr.bf16.mxu0 %v2729
      %3962 = vmatmul.mubr.bf16.gmra.mxu0 %v2681
      %v3963 = vpop.f32.mrf.mxu0
      %v3964 = vadd.f32 %v3803, %v3963
      %v3965 = vpop.f32.mrf.mxu0
      %v3966 = vpop.f32.mrf.mxu0
      %v3967 = vadd.f32 %v3806, %v3966
      %v3968 = vpop.f32.mrf.mxu0
      %3969 = vmatprep.mubr.bf16.mxu0 %v2730
      %3970 = vmatmul.mubr.bf16.gmra.mxu0 %v2682
      %v3971 = vpop.f32.mrf.mxu0
      %v3972 = vadd.f32 %v3811, %v3971
      %v3973 = vpop.f32.mrf.mxu0
      %v3974 = vpop.f32.mrf.mxu0
      %v3975 = vadd.f32 %v3814, %v3974
      %v3976 = vpop.f32.mrf.mxu0
      %3977 = vmatprep.mubr.bf16.mxu0 %v2731
      %3978 = vmatmul.mubr.bf16.gmra.mxu0 %v2683
      %v3979 = vpop.f32.mrf.mxu0
      %v3980 = vadd.f32 %v3819, %v3979
      %v3981 = vpop.f32.mrf.mxu0
      %v3982 = vpop.f32.mrf.mxu0
      %v3983 = vadd.f32 %v3822, %v3982
      %v3984 = vpop.f32.mrf.mxu0
      %3985 = vmatprep.mubr.bf16.mxu0 %v2732
      %3986 = vmatmul.mubr.bf16.gmra.mxu0 %v2684
      %v3987 = vpop.f32.mrf.mxu0
      %v3988 = vadd.f32 %v3827, %v3987
      %v3989 = vpop.f32.mrf.mxu0
      %v3990 = vpop.f32.mrf.mxu0
      %v3991 = vadd.f32 %v3830, %v3990
      %v3992 = vpop.f32.mrf.mxu0
      %3993 = vmatprep.mubr.bf16.mxu0 %v2733
      %3994 = vmatmul.mubr.bf16.gmra.mxu0 %v2685
      %v3995 = vpop.f32.mrf.mxu0
      %v3996 = vadd.f32 %v3835, %v3995
      %v3997 = vpop.f32.mrf.mxu0
      %v3998 = vpop.f32.mrf.mxu0
      %v3999 = vadd.f32 %v3838, %v3998
      %v4000 = vpop.f32.mrf.mxu0
      %4001 = vdwg.mxu0
      %4002 = vmatprep.subr.bf16.mxu0 0
      %4003 = vmatpush1.bf16.msra.mxu0 %v3285
      %4004 = vmatprep.subr.bf16.mxu0 0
      %4005 = vmatpush1.bf16.msra.mxu0 %v3284
      %4006 = vmatprep.subr.bf16.mxu0 0
      %4007 = vmatpush1.bf16.msra.mxu0 %v3283
      %4008 = vmatprep.subr.bf16.mxu0 0
      %4009 = vmatpush1.bf16.msra.mxu0 %v3282
      %4010 = vmatprep.subr.bf16.mxu0 0
      %4011 = vmatpush1.bf16.msra.mxu0 %v3281
      %4012 = vmatprep.subr.bf16.mxu0 0
      %4013 = vmatpush1.bf16.msra.mxu0 %v3280
      %4014 = vmatprep.subr.bf16.mxu0 0
      %4015 = vmatpush1.bf16.msra.mxu0 %v3279
      %4016 = vmatprep.subr.bf16.mxu0 0
      %4017 = vmatpush1.bf16.msra.mxu0 %v3278
      %4018 = vmatprep.subr.bf16.mxu0 0
      %4019 = vmatpush2.bf16.msra.mxu0 0
      %4020 = vmatprep.subr.bf16.mxu0 0
      %4021 = vmatpush2.bf16.msra.mxu0 0
      %4022 = vmatprep.subr.bf16.mxu0 0
      %4023 = vmatpush2.bf16.msra.mxu0 0
      %4024 = vmatprep.subr.bf16.mxu0 0
      %4025 = vmatpush2.bf16.msra.mxu0 0
      %4026 = vmatprep.subr.bf16.mxu0 0
      %4027 = vmatpush2.bf16.msra.mxu0 0
      %4028 = vmatprep.subr.bf16.mxu0 0
      %4029 = vmatpush2.bf16.msra.mxu0 0
      %4030 = vmatprep.subr.bf16.mxu0 0
      %4031 = vmatpush2.bf16.msra.mxu0 0
      %4032 = vmatprep.subr.bf16.mxu0 0
      %4033 = vmatpush2.bf16.msra.mxu0 0
      %4034 = vmatprep.mubr.bf16.mxu0 0
      %4035 = vmatmul.mubr.bf16.gmra.mxu0 %v2766
      %v4036 = vpop.f32.mrf.mxu0
      %v4037 = vadd.f32 %v3876, %v4036
      %v4038 = vpop.f32.mrf.mxu0
      %v4039 = vpop.f32.mrf.mxu0
      %v4040 = vadd.f32 %v3879, %v4039
      %v4041 = vpop.f32.mrf.mxu0
      %4042 = vmatprep.mubr.bf16.mxu0 0
      %4043 = vmatmul.mubr.bf16.gmra.mxu0 %v2767
      %v4044 = vpop.f32.mrf.mxu0
      %v4045 = vadd.f32 %v3884, %v4044
      %v4046 = vpop.f32.mrf.mxu0
      %v4047 = vpop.f32.mrf.mxu0
      %v4048 = vadd.f32 %v3887, %v4047
      %v4049 = vpop.f32.mrf.mxu0
      %4050 = vmatprep.mubr.bf16.mxu0 0
      %4051 = vmatmul.mubr.bf16.gmra.mxu0 %v2768
      %v4052 = vpop.f32.mrf.mxu0
      %v4053 = vadd.f32 %v3892, %v4052
      %v4054 = vpop.f32.mrf.mxu0
      %v4055 = vpop.f32.mrf.mxu0
      %v4056 = vadd.f32 %v3895, %v4055
      %v4057 = vpop.f32.mrf.mxu0
      %4058 = vmatprep.mubr.bf16.mxu0 0
      %4059 = vmatmul.mubr.bf16.gmra.mxu0 %v2769
      %v4060 = vpop.f32.mrf.mxu0
      %v4061 = vadd.f32 %v3900, %v4060
      %v4062 = vpop.f32.mrf.mxu0
      %v4063 = vpop.f32.mrf.mxu0
      %v4064 = vadd.f32 %v3903, %v4063
      %v4065 = vpop.f32.mrf.mxu0
      %4066 = vmatprep.mubr.bf16.mxu0 0
      %4067 = vmatmul.mubr.bf16.gmra.mxu0 %v2770
      %v4068 = vpop.f32.mrf.mxu0
      %v4069 = vadd.f32 %v3908, %v4068
      %v4070 = vpop.f32.mrf.mxu0
      %v4071 = vpop.f32.mrf.mxu0
      %v4072 = vadd.f32 %v3911, %v4071
      %v4073 = vpop.f32.mrf.mxu0
      %4074 = vmatprep.mubr.bf16.mxu0 0
      %4075 = vmatmul.mubr.bf16.gmra.mxu0 %v2771
      %v4076 = vpop.f32.mrf.mxu0
      %v4077 = vadd.f32 %v3916, %v4076
      %v4078 = vpop.f32.mrf.mxu0
      %v4079 = vpop.f32.mrf.mxu0
      %v4080 = vadd.f32 %v3919, %v4079
      %v4081 = vpop.f32.mrf.mxu0
      %4082 = vmatprep.mubr.bf16.mxu0 0
      %4083 = vmatmul.mubr.bf16.gmra.mxu0 %v2772
      %v4084 = vpop.f32.mrf.mxu0
      %v4085 = vadd.f32 %v3924, %v4084
      %v4086 = vpop.f32.mrf.mxu0
      %v4087 = vpop.f32.mrf.mxu0
      %v4088 = vadd.f32 %v3927, %v4087
      %v4089 = vpop.f32.mrf.mxu0
      %4090 = vmatprep.mubr.bf16.mxu0 0
      %4091 = vmatmul.mubr.bf16.gmra.mxu0 %v2773
      %v4092 = vpop.f32.mrf.mxu0
      %v4093 = vadd.f32 %v3932, %v4092
      %v4094 = vpop.f32.mrf.mxu0
      %v4095 = vpop.f32.mrf.mxu0
      %v4096 = vadd.f32 %v3935, %v4095
      %v4097 = vpop.f32.mrf.mxu0
      %4098 = vmatprep.mubr.bf16.mxu0 0
      %4099 = vmatmul.mubr.bf16.gmra.mxu0 %v2774
      %v4100 = vpop.f32.mrf.mxu0
      %v4101 = vadd.f32 %v3940, %v4100
      %v4102 = vpop.f32.mrf.mxu0
      %v4103 = vpop.f32.mrf.mxu0
      %v4104 = vadd.f32 %v3943, %v4103
      %v4105 = vpop.f32.mrf.mxu0
      %4106 = vmatprep.mubr.bf16.mxu0 0
      %4107 = vmatmul.mubr.bf16.gmra.mxu0 %v2775
      %v4108 = vpop.f32.mrf.mxu0
      %v4109 = vadd.f32 %v3948, %v4108
      %v4110 = vpop.f32.mrf.mxu0
      %v4111 = vpop.f32.mrf.mxu0
      %v4112 = vadd.f32 %v3951, %v4111
      %v4113 = vpop.f32.mrf.mxu0
      %4114 = vmatprep.mubr.bf16.mxu0 0
      %4115 = vmatmul.mubr.bf16.gmra.mxu0 %v2776
      %v4116 = vpop.f32.mrf.mxu0
      %v4117 = vadd.f32 %v3956, %v4116
      %v4118 = vpop.f32.mrf.mxu0
      %v4119 = vpop.f32.mrf.mxu0
      %v4120 = vadd.f32 %v3959, %v4119
      %v4121 = vpop.f32.mrf.mxu0
      %4122 = vmatprep.mubr.bf16.mxu0 0
      %4123 = vmatmul.mubr.bf16.gmra.mxu0 %v2777
      %v4124 = vpop.f32.mrf.mxu0
      %v4125 = vadd.f32 %v3964, %v4124
      %v4126 = vpop.f32.mrf.mxu0
      %v4127 = vpop.f32.mrf.mxu0
      %v4128 = vadd.f32 %v3967, %v4127
      %v4129 = vpop.f32.mrf.mxu0
      %4130 = vmatprep.mubr.bf16.mxu0 0
      %4131 = vmatmul.mubr.bf16.gmra.mxu0 %v2778
      %v4132 = vpop.f32.mrf.mxu0
      %v4133 = vadd.f32 %v3972, %v4132
      %v4134 = vpop.f32.mrf.mxu0
      %v4135 = vpop.f32.mrf.mxu0
      %v4136 = vadd.f32 %v3975, %v4135
      %v4137 = vpop.f32.mrf.mxu0
      %4138 = vmatprep.mubr.bf16.mxu0 0
      %4139 = vmatmul.mubr.bf16.gmra.mxu0 %v2779
      %v4140 = vpop.f32.mrf.mxu0
      %v4141 = vadd.f32 %v3980, %v4140
      %v4142 = vpop.f32.mrf.mxu0
      %v4143 = vpop.f32.mrf.mxu0
      %v4144 = vadd.f32 %v3983, %v4143
      %v4145 = vpop.f32.mrf.mxu0
      %4146 = vmatprep.mubr.bf16.mxu0 0
      %4147 = vmatmul.mubr.bf16.gmra.mxu0 %v2780
      %v4148 = vpop.f32.mrf.mxu0
      %v4149 = vadd.f32 %v3988, %v4148
      %v4150 = vpop.f32.mrf.mxu0
      %v4151 = vpop.f32.mrf.mxu0
      %v4152 = vadd.f32 %v3991, %v4151
      %v4153 = vpop.f32.mrf.mxu0
      %4154 = vmatprep.mubr.bf16.mxu0 0
      %4155 = vmatmul.mubr.bf16.gmra.mxu0 %v2781
      %v4156 = vpop.f32.mrf.mxu0
      %v4157 = vadd.f32 %v3996, %v4156
      %v4158 = vpop.f32.mrf.mxu0
      %v4159 = vpop.f32.mrf.mxu0
      %v4160 = vadd.f32 %v3999, %v4159
      %v4161 = vpop.f32.mrf.mxu0
      %4162 = vdwg.mxu0
      %v4163 = vadd.f32 %v4037, %v4040
      %v4164 = vadd.f32 %v4163, %v4045
      %v4165 = vadd.f32 %v4164, %v4048
      %v4166 = vadd.f32 %v4165, %v4053
      %v4167 = vadd.f32 %v4166, %v4056
      %v4168 = vadd.f32 %v4167, %v4061
      %v4169 = vadd.f32 %v4168, %v4064
      %v4170 = vadd.f32 %v4169, %v4069
      %v4171 = vadd.f32 %v4170, %v4072
      %v4172 = vadd.f32 %v4171, %v4077
      %v4173 = vadd.f32 %v4172, %v4080
      %v4174 = vadd.f32 %v4173, %v4085
      %v4175 = vadd.f32 %v4174, %v4088
      %v4176 = vadd.f32 %v4175, %v4093
      %v4177 = vadd.f32 %v4176, %v4096
      %v4178 = vadd.f32 %v4177, %v4101
      %v4179 = vadd.f32 %v4178, %v4104
      %v4180 = vadd.f32 %v4179, %v4109
      %v4181 = vadd.f32 %v4180, %v4112
      %v4182 = vadd.f32 %v4181, %v4117
      %v4183 = vadd.f32 %v4182, %v4120
      %v4184 = vadd.f32 %v4183, %v4125
      %v4185 = vadd.f32 %v4184, %v4128
      %v4186 = vadd.f32 %v4185, %v4133
      %v4187 = vadd.f32 %v4186, %v4136
      %v4188 = vadd.f32 %v4187, %v4141
      %v4189 = vadd.f32 %v4188, %v4144
      %v4190 = vadd.f32 %v4189, %v4149
      %v4191 = vadd.f32 %v4190, %v4152
      %v4192 = vadd.f32 %v4191, %v4157
      %v4193 = vadd.f32 %v4192, %v4160
      %v4194 = vrot.slane %v4193, 4
      %v4195 = vadd.f32 %v4193, %v4194
      %v4196 = vrot.slane %v4195, 2
      %v4197 = vadd.f32 %v4195, %v4196
      %v4198 = vrot.slane %v4197, 1
      %v4199 = vadd.f32 %v4197, %v4198
      %v4200 = vmul.f32 %v4199, %v2146
      %v4201 = vmul.f32 %v4037, %v4037
      %v4202 = vmul.f32 %v4040, %v4040
      %v4203 = vmul.f32 %v4045, %v4045
      %v4204 = vmul.f32 %v4048, %v4048
      %v4205 = vmul.f32 %v4053, %v4053
      %v4206 = vmul.f32 %v4056, %v4056
      %v4207 = vmul.f32 %v4061, %v4061
      %v4208 = vmul.f32 %v4064, %v4064
      %v4209 = vmul.f32 %v4069, %v4069
      %v4210 = vmul.f32 %v4072, %v4072
      %v4211 = vmul.f32 %v4077, %v4077
      %v4212 = vmul.f32 %v4080, %v4080
      %v4213 = vmul.f32 %v4085, %v4085
      %v4214 = vmul.f32 %v4088, %v4088
      %v4215 = vmul.f32 %v4093, %v4093
      %v4216 = vmul.f32 %v4096, %v4096
      %v4217 = vmul.f32 %v4101, %v4101
      %v4218 = vmul.f32 %v4104, %v4104
      %v4219 = vmul.f32 %v4109, %v4109
      %v4220 = vmul.f32 %v4112, %v4112
      %v4221 = vmul.f32 %v4117, %v4117
      %v4222 = vmul.f32 %v4120, %v4120
      %v4223 = vmul.f32 %v4125, %v4125
      %v4224 = vmul.f32 %v4128, %v4128
      %v4225 = vmul.f32 %v4133, %v4133
      %v4226 = vmul.f32 %v4136, %v4136
      %v4227 = vmul.f32 %v4141, %v4141
      %v4228 = vmul.f32 %v4144, %v4144
      %v4229 = vmul.f32 %v4149, %v4149
      %v4230 = vmul.f32 %v4152, %v4152
      %v4231 = vmul.f32 %v4157, %v4157
      %v4232 = vmul.f32 %v4160, %v4160
      %v4233 = vadd.f32 %v4201, %v4202
      %v4234 = vadd.f32 %v4233, %v4203
      %v4235 = vadd.f32 %v4234, %v4204
      %v4236 = vadd.f32 %v4235, %v4205
      %v4237 = vadd.f32 %v4236, %v4206
      %v4238 = vadd.f32 %v4237, %v4207
      %v4239 = vadd.f32 %v4238, %v4208
      %v4240 = vadd.f32 %v4239, %v4209
      %v4241 = vadd.f32 %v4240, %v4210
      %v4242 = vadd.f32 %v4241, %v4211
      %v4243 = vadd.f32 %v4242, %v4212
      %v4244 = vadd.f32 %v4243, %v4213
      %v4245 = vadd.f32 %v4244, %v4214
      %v4246 = vadd.f32 %v4245, %v4215
      %v4247 = vadd.f32 %v4246, %v4216
      %v4248 = vadd.f32 %v4247, %v4217
      %v4249 = vadd.f32 %v4248, %v4218
      %v4250 = vadd.f32 %v4249, %v4219
      %v4251 = vadd.f32 %v4250, %v4220
      %v4252 = vadd.f32 %v4251, %v4221
      %v4253 = vadd.f32 %v4252, %v4222
      %v4254 = vadd.f32 %v4253, %v4223
      %v4255 = vadd.f32 %v4254, %v4224
      %v4256 = vadd.f32 %v4255, %v4225
      %v4257 = vadd.f32 %v4256, %v4226
      %v4258 = vadd.f32 %v4257, %v4227
      %v4259 = vadd.f32 %v4258, %v4228
      %v4260 = vadd.f32 %v4259, %v4229
      %v4261 = vadd.f32 %v4260, %v4230
      %v4262 = vadd.f32 %v4261, %v4231
      %v4263 = vadd.f32 %v4262, %v4232
      %v4264 = vrot.slane %v4263, 4
      %v4265 = vadd.f32 %v4263, %v4264
      %v4266 = vrot.slane %v4265, 2
      %v4267 = vadd.f32 %v4265, %v4266
      %v4268 = vrot.slane %v4267, 1
      %v4269 = vadd.f32 %v4267, %v4268
      %v4270 = vmul.f32 %v4269, %v2146
      %v4271 = vmul.f32 %v4200, %v4200
      %v4272 = vsub.f32 %v4270, %v4271
      %v4273 = vsub.f32 %v4037, %v4200
      %v4274 = vsub.f32 %v4040, %v4200
      %v4275 = vsub.f32 %v4045, %v4200
      %v4276 = vsub.f32 %v4048, %v4200
      %v4277 = vsub.f32 %v4053, %v4200
      %v4278 = vsub.f32 %v4056, %v4200
      %v4279 = vsub.f32 %v4061, %v4200
      %v4280 = vsub.f32 %v4064, %v4200
      %v4281 = vsub.f32 %v4069, %v4200
      %v4282 = vsub.f32 %v4072, %v4200
      %v4283 = vsub.f32 %v4077, %v4200
      %v4284 = vsub.f32 %v4080, %v4200
      %v4285 = vsub.f32 %v4085, %v4200
      %v4286 = vsub.f32 %v4088, %v4200
      %v4287 = vsub.f32 %v4093, %v4200
      %v4288 = vsub.f32 %v4096, %v4200
      %v4289 = vsub.f32 %v4101, %v4200
      %v4290 = vsub.f32 %v4104, %v4200
      %v4291 = vsub.f32 %v4109, %v4200
      %v4292 = vsub.f32 %v4112, %v4200
      %v4293 = vsub.f32 %v4117, %v4200
      %v4294 = vsub.f32 %v4120, %v4200
      %v4295 = vsub.f32 %v4125, %v4200
      %v4296 = vsub.f32 %v4128, %v4200
      %v4297 = vsub.f32 %v4133, %v4200
      %v4298 = vsub.f32 %v4136, %v4200
      %v4299 = vsub.f32 %v4141, %v4200
      %v4300 = vsub.f32 %v4144, %v4200
      %v4301 = vsub.f32 %v4149, %v4200
      %v4302 = vsub.f32 %v4152, %v4200
      %v4303 = vsub.f32 %v4157, %v4200
      %v4304 = vsub.f32 %v4160, %v4200
      %v4305 = vadd.f32 %v4272, 1e-05
      %v4306 = vrsqrt.pop %v4305
      %v4307 = vmul.f32 %v4273, %v4306
      %v4308 = vmul.f32 %v4274, %v4306
      %v4309 = vmul.f32 %v4275, %v4306
      %v4310 = vmul.f32 %v4276, %v4306
      %v4311 = vmul.f32 %v4277, %v4306
      %v4312 = vmul.f32 %v4278, %v4306
      %v4313 = vmul.f32 %v4279, %v4306
      %v4314 = vmul.f32 %v4280, %v4306
      %v4315 = vmul.f32 %v4281, %v4306
      %v4316 = vmul.f32 %v4282, %v4306
      %v4317 = vmul.f32 %v4283, %v4306
      %v4318 = vmul.f32 %v4284, %v4306
      %v4319 = vmul.f32 %v4285, %v4306
      %v4320 = vmul.f32 %v4286, %v4306
      %v4321 = vmul.f32 %v4287, %v4306
      %v4322 = vmul.f32 %v4288, %v4306
      %v4323 = vmul.f32 %v4289, %v4306
      %v4324 = vmul.f32 %v4290, %v4306
      %v4325 = vmul.f32 %v4291, %v4306
      %v4326 = vmul.f32 %v4292, %v4306
      %v4327 = vmul.f32 %v4293, %v4306
      %v4328 = vmul.f32 %v4294, %v4306
      %v4329 = vmul.f32 %v4295, %v4306
      %v4330 = vmul.f32 %v4296, %v4306
      %v4331 = vmul.f32 %v4297, %v4306
      %v4332 = vmul.f32 %v4298, %v4306
      %v4333 = vmul.f32 %v4299, %v4306
      %v4334 = vmul.f32 %v4300, %v4306
      %v4335 = vmul.f32 %v4301, %v4306
      %v4336 = vmul.f32 %v4302, %v4306
      %v4337 = vmul.f32 %v4303, %v4306
      %v4338 = vmul.f32 %v4304, %v4306
      %v4339 = vadd.f32 %v230, %v4307
      %v4340 = vadd.f32 %v231, %v4308
      %v4341 = vadd.f32 %v232, %v4309
      %v4342 = vadd.f32 %v233, %v4310
      %v4343 = vadd.f32 %v234, %v4311
      %v4344 = vadd.f32 %v235, %v4312
      %v4345 = vadd.f32 %v236, %v4313
      %v4346 = vadd.f32 %v237, %v4314
      %v4347 = vadd.f32 %v238, %v4315
      %v4348 = vadd.f32 %v239, %v4316
      %v4349 = vadd.f32 %v240, %v4317
      %v4350 = vadd.f32 %v241, %v4318
      %v4351 = vadd.f32 %v242, %v4319
      %v4352 = vadd.f32 %v243, %v4320
      %v4353 = vadd.f32 %v244, %v4321
      %v4354 = vadd.f32 %v245, %v4322
      %v4355 = vadd.f32 %v246, %v4323
      %v4356 = vadd.f32 %v247, %v4324
      %v4357 = vadd.f32 %v248, %v4325
      %v4358 = vadd.f32 %v249, %v4326
      %v4359 = vadd.f32 %v250, %v4327
      %v4360 = vadd.f32 %v251, %v4328
      %v4361 = vadd.f32 %v252, %v4329
      %v4362 = vadd.f32 %v253, %v4330
      %v4363 = vadd.f32 %v254, %v4331
      %v4364 = vadd.f32 %v255, %v4332
      %v4365 = vadd.f32 %v256, %v4333
      %v4366 = vadd.f32 %v257, %v4334
      %v4367 = vadd.f32 %v258, %v4335
      %v4368 = vadd.f32 %v259, %v4336
      %v4369 = vadd.f32 %v260, %v4337
      %v4370 = vadd.f32 %v261, %v4338
      %4371 = vst [vmem:[%s170] sm:$0xff] %v4339
      %4372 = vst [vmem:[%s170 + $0x8] sm:$0xff] %v4340
      %4373 = vst [vmem:[%s170 + $0x10] sm:$0xff] %v4341
      %4374 = vst [vmem:[%s170 + $0x18] sm:$0xff] %v4342
      %4375 = vst [vmem:[%s170 + $0x20] sm:$0xff] %v4343
      %4376 = vst [vmem:[%s170 + $0x28] sm:$0xff] %v4344
      %4377 = vst [vmem:[%s170 + $0x30] sm:$0xff] %v4345
      %4378 = vst [vmem:[%s170 + $0x38] sm:$0xff] %v4346
      %4379 = vst [vmem:[%s170 + $0x40] sm:$0xff] %v4347
      %4380 = vst [vmem:[%s170 + $0x48] sm:$0xff] %v4348
      %4381 = vst [vmem:[%s170 + $0x50] sm:$0xff] %v4349
      %4382 = vst [vmem:[%s170 + $0x58] sm:$0xff] %v4350
      %4383 = vst [vmem:[%s170 + $0x60] sm:$0xff] %v4351
      %4384 = vst [vmem:[%s170 + $0x68] sm:$0xff] %v4352
      %4385 = vst [vmem:[%s170 + $0x70] sm:$0xff] %v4353
      %4386 = vst [vmem:[%s170 + $0x78] sm:$0xff] %v4354
      %4387 = vst [vmem:[%s170 + $0x80] sm:$0xff] %v4355
      %4388 = vst [vmem:[%s170 + $0x88] sm:$0xff] %v4356
      %4389 = vst [vmem:[%s170 + $0x90] sm:$0xff] %v4357
      %4390 = vst [vmem:[%s170 + $0x98] sm:$0xff] %v4358
      %4391 = vst [vmem:[%s170 + $0xa0] sm:$0xff] %v4359
      %4392 = vst [vmem:[%s170 + $0xa8] sm:$0xff] %v4360
      %4393 = vst [vmem:[%s170 + $0xb0] sm:$0xff] %v4361
      %4394 = vst [vmem:[%s170 + $0xb8] sm:$0xff] %v4362
      %4395 = vst [vmem:[%s170 + $0xc0] sm:$0xff] %v4363
      %4396 = vst [vmem:[%s170 + $0xc8] sm:$0xff] %v4364
      %4397 = vst [vmem:[%s170 + $0xd0] sm:$0xff] %v4365
      %4398 = vst [vmem:[%s170 + $0xd8] sm:$0xff] %v4366
      %4399 = vst [vmem:[%s170 + $0xe0] sm:$0xff] %v4367
      %4400 = vst [vmem:[%s170 + $0xe8] sm:$0xff] %v4368
      %4401 = vst [vmem:[%s170 + $0xf0] sm:$0xff] %v4369
      %4402 = vst [vmem:[%s170 + $0xf8] sm:$0xff] %v4370
      %p4403 = scmp.lt.s32.totalorder %s14, 1
      %s4404 = scalar_select %p4403, %s14, 1
      %s4405 = smul.addr %s4404, 32
      %s4406 = smul.addr %s4405, 8
      %s4407 = scalar_lea.vmem %s3, %s4406
      // Predicated region
      $region37: #{residual_block_forward.1} parent=31 // pred_check
        %p4408 = pneg %p100
      $region38: #{residual_block_forward.1} parent=31 // pred_check_branch
        %4410 = sbr.rel (%p4408) target = $region40
      $region39: #{residual_block_forward.1} parent=31 // pred_region
        _
      $region40: #{residual_block_forward.1} parent=31 // pred_fallthru
        _
    $region32: #{residual_block_forward.1} parent=5 // pred_fallthru
      _
    %p4411 = scmp.le.s32.totalorder 2, %s9
    // Predicated region
    $region41: #{residual_block_forward.1} parent=5 // pred_check
      %p4412 = pneg %p4411
    $region42: #{residual_block_forward.1} parent=5 // pred_check_branch
      %4414 = sbr.rel (%p4412) target = $region44
    $region43: #{residual_block_forward.1} parent=5 // pred_region
      %s4415 = ssub.s32 %s9, 2
      // Predicated region
      $region45: #{residual_block_forward.1} parent=43 // pred_check
        %p4416 = pneg %p106
      $region46: #{residual_block_forward.1} parent=43 // pred_check_branch
        %4418 = sbr.rel (%p4416) target = $region48
      $region47: #{residual_block_forward.1} parent=43 // pred_region
        %p4419 = scmp.lt.s32.totalorder %s15, 1
        %s4420 = scalar_select %p4419, %s15, 1
        %s4421 = smul.addr %s4420, 32
        %s4422 = smul.addr %s4421, 8
        %s4423 = scalar_lea.vmem %s3, %s4422
      $region48: #{residual_block_forward.1} parent=43 // pred_fallthru
        _
    $region44: #{residual_block_forward.1} parent=5 // pred_fallthru
      _
  $region6: #{residual_block_forward.1} parent=0 // loop_footer
    %s13 = sadd.s32 1, %s9
  $region7: #{residual_block_forward.1} parent=0 // loop_footer_branch
    %8 = sbr.rel target = $region3
  $region8: #{residual_block_forward.1} parent=0 // loop_exit
    _

</llo_original>
